<compile_context>
chip_gen: v7x
topology: tpu7x:2x2x1
jax: 0.10.0
libtpu: 0.0.40
codegen_flags: <defaults>
</compile_context>

<pallas_src>
import functools
import math

import jax
import jax.numpy as jnp
from jax.experimental import pallas as pl
from jax.experimental.pallas import tpu as pltpu

F32 = jnp.float32
BF16 = jnp.bfloat16
TILE_M = 2016                      # divides 168*168 = 28224
VMEM_LIMIT = 44 * 1024 * 1024      # fits v7x (64 MiB VMEM) with headroom


def _pad_rows(x, tile):
    m = x.shape[0]
    pad = (-m) % tile
    if pad:
        x = jnp.pad(x, ((0, pad),) + ((0, 0),) * (x.ndim - 1))
    return x, m


def _row_tile(h, max_tile=16):
    for cand in range(max_tile, 0, -1):
        if h % cand == 0:
            return cand
    return 1


# ----------------------------------------------------------------------------
# Matmul + bias (every 1x1 conv, the im2col stem conv, the transposed-conv taps)
# ----------------------------------------------------------------------------
def _matmul_bias_kernel(a_ref, w_ref, b_ref, o_ref):
    acc = jnp.dot(a_ref[...], w_ref[...], preferred_element_type=jnp.float32)
    o_ref[...] = (acc + b_ref[...]).astype(o_ref.dtype)


def matmul_bias(a, w, b, out_dtype=BF16):
    # a: (M, K) bf16, w: (K, N) bf16, b: (1, N) f32 -> (M, N) out_dtype
    a_p, m0 = _pad_rows(a, TILE_M)
    mp, k = a_p.shape
    n = w.shape[1]
    out = pl.pallas_call(
        _matmul_bias_kernel,
        out_shape=jax.ShapeDtypeStruct((mp, n), out_dtype),
        grid=(mp // TILE_M,),
        in_specs=[pl.BlockSpec((TILE_M, k), lambda i: (i, 0)),
                  pl.BlockSpec((k, n), lambda i: (0, 0)),
                  pl.BlockSpec((1, n), lambda i: (0, 0))],
        out_specs=pl.BlockSpec((TILE_M, n), lambda i: (i, 0)),
        compiler_params=pltpu.CompilerParams(
            dimension_semantics=("parallel",),
            vmem_limit_bytes=VMEM_LIMIT),
    )(a_p, w, b)
    return out[:m0]


@jax.jit
def conv1x1(x, p):
    n, h, wd, c = x.shape
    y = matmul_bias(x.reshape(n * h * wd, c), p["w"], p["b"])
    return y.reshape(n, h, wd, p["w"].shape[1])


@functools.partial(jax.jit, static_argnames=("ksize", "stride"))
def conv2d_im2col(x, w, b, *, ksize, stride):
    # Used only for the tiny-channel 7x7 stem (cin=1): im2col glue + Pallas matmul.
    n, h, wd, cin = x.shape
    oh = (h - ksize) // stride + 1
    ow = (wd - ksize) // stride + 1
    taps = []
    for kh in range(ksize):
        for kw in range(ksize):
            taps.append(x[:, kh:kh + stride * (oh - 1) + 1:stride,
                          kw:kw + stride * (ow - 1) + 1:stride, :])
    patches = jnp.stack(taps, axis=3).reshape(n * oh * ow, ksize * ksize * cin)
    y = matmul_bias(patches, w, b)
    return y.reshape(n, oh, ow, -1)


# ----------------------------------------------------------------------------
# Direct 5x5 / stride-3 conv (the part-1 resize) -- phase-split + 25 MXU taps
# ----------------------------------------------------------------------------
def _conv5x5s3_kernel(x_ref, w_ref, b_ref, o_ref, *, th, ow, cin, k, s):
    xb = x_ref[...]            # (1, th+1, C, s*s*cin) bf16
    wm = w_ref[...]            # (k*k*cin, cout) bf16
    acc = None
    for kh in range(k):
        ch, dh = kh // s, kh % s
        for kw in range(k):
            cw, dw = kw // s, kw % s
            ph = dh * s + dw
            tap = xb[0, ch:ch + th, cw:cw + ow, ph * cin:(ph + 1) * cin]
            tap2 = tap.reshape(th * ow, cin)
            wt = wm[(kh * k + kw) * cin:(kh * k + kw + 1) * cin, :]
            p = jnp.dot(tap2, wt, preferred_element_type=jnp.float32)
            acc = p if acc is None else acc + p
    o_ref[...] = (acc + b_ref[...]).astype(o_ref.dtype)


@jax.jit
def conv5x5s3_direct(x, w, b):
    n, h, wd, cin = x.shape
    k, s = 5, 3
    oh = (h - k) // s + 1
    ow = (wd - k) // s + 1
    cout = w.shape[1]
    # pad spatially to a multiple of the stride and split into 3x3 phases
    hp = ((h + s - 1) // s) * s
    wp = ((wd + s - 1) // s) * s
    xpad = jnp.pad(x, ((0, 0), (0, hp - h), (0, wp - wd), (0, 0)))
    r_rows, c_cols = hp // s, wp // s
    xr = xpad.reshape(n, r_rows, s, c_cols, s, cin)
    xr = jnp.transpose(xr, (0, 1, 3, 2, 4, 5)).reshape(n, r_rows, c_cols, s * s * cin)
    th = _row_tile(oh)
    nt = oh // th
    halo = (k - 1) // s
    tiles = jnp.stack([xr[:, t * th:t * th + th + halo] for t in range(nt)],
                      axis=1).reshape(n * nt, th + halo, c_cols, s * s * cin)
    out = pl.pallas_call(
        functools.partial(_conv5x5s3_kernel, th=th, ow=ow, cin=cin, k=k, s=s),
        out_shape=jax.ShapeDtypeStruct((n * oh * ow, cout), BF16),
        grid=(n * nt,),
        in_specs=[pl.BlockSpec((1, th + halo, c_cols, s * s * cin),
                               lambda g: (g, 0, 0, 0)),
                  pl.BlockSpec((k * k * cin, cout), lambda g: (0, 0)),
                  pl.BlockSpec((1, cout), lambda g: (0, 0))],
        out_specs=pl.BlockSpec((th * ow, cout), lambda g: (g, 0)),
        compiler_params=pltpu.CompilerParams(
            dimension_semantics=("parallel",),
            vmem_limit_bytes=VMEM_LIMIT),
    )(tiles, w, b)
    return out.reshape(n, oh, ow, cout)


# ----------------------------------------------------------------------------
# DWConv: depthwise 3x3 (pad=1) + pointwise 1x1, halo row-tiles (no 9x stack)
# ----------------------------------------------------------------------------
def _dwpw_halo_kernel(x_ref, dw_ref, db_ref, pw_ref, pb_ref, o_ref, *, th, w):
    xb = x_ref[...]                       # (1, th+2, w+2, cin) bf16
    dw = dw_ref[...]                      # (9, cin) f32
    acc = None
    for kh in range(3):
        for kw in range(3):
            tap = xb[0, kh:kh + th, kw:kw + w, :].astype(jnp.float32) * dw[kh * 3 + kw]
            acc = tap if acc is None else acc + tap
    acc = acc + db_ref[...][0]
    t2 = acc.astype(jnp.bfloat16).reshape(th * w, acc.shape[-1])
    y = jnp.dot(t2, pw_ref[...], preferred_element_type=jnp.float32) + pb_ref[...]
    o_ref[...] = y.astype(o_ref.dtype)


def _dw_halo_kernel(x_ref, dw_ref, db_ref, o_ref, *, th, w):
    xb = x_ref[...]
    dw = dw_ref[...]
    acc = None
    for kh in range(3):
        for kw in range(3):
            tap = xb[0, kh:kh + th, kw:kw + w, :].astype(jnp.float32) * dw[kh * 3 + kw]
            acc = tap if acc is None else acc + tap
    acc = acc + db_ref[...][0]
    o_ref[...] = acc.astype(o_ref.dtype)


@jax.jit
def dwconv_pointwise(x, p):
    n, h, w, cin = x.shape
    cout = p["pw_w"].shape[1]
    th = _row_tile(h)
    nt = h // th
    wp = w + 2
    xp = jnp.pad(x, ((0, 0), (1, 1), (1, 1), (0, 0)))
    tiles = jnp.stack([xp[:, t * th:t * th + th + 2] for t in range(nt)],
                      axis=1).reshape(n * nt, th + 2, wp, cin)
    if (th * w) % 8 == 0 and w % 8 == 0:
        out = pl.pallas_call(
            functools.partial(_dwpw_halo_kernel, th=th, w=w),
            out_shape=jax.ShapeDtypeStruct((n * h * w, cout), BF16),
            grid=(n * nt,),
            in_specs=[pl.BlockSpec((1, th + 2, wp, cin), lambda g: (g, 0, 0, 0)),
                      pl.BlockSpec((9, cin), lambda g: (0, 0)),
                      pl.BlockSpec((1, cin), lambda g: (0, 0)),
                      pl.BlockSpec((cin, cout), lambda g: (0, 0)),
                      pl.BlockSpec((1, cout), lambda g: (0, 0))],
            out_specs=pl.BlockSpec((th * w, cout), lambda g: (g, 0)),
            compiler_params=pltpu.CompilerParams(
                dimension_semantics=("parallel",),
                vmem_limit_bytes=VMEM_LIMIT),
        )(tiles, p["dw_w"], p["dw_b"], p["pw_w"], p["pw_b"])
        return out.reshape(n, h, w, cout)
    # odd widths (506): depthwise halo kernel, then the generic 1x1 matmul
    dwo = pl.pallas_call(
        functools.partial(_dw_halo_kernel, th=th, w=w),
        out_shape=jax.ShapeDtypeStruct((n * h, w, cin), BF16),
        grid=(n * nt,),
        in_specs=[pl.BlockSpec((1, th + 2, wp, cin), lambda g: (g, 0, 0, 0)),
                  pl.BlockSpec((9, cin), lambda g: (0, 0)),
                  pl.BlockSpec((1, cin), lambda g: (0, 0))],
        out_specs=pl.BlockSpec((th, w, cin), lambda g: (g, 0, 0)),
        compiler_params=pltpu.CompilerParams(
            dimension_semantics=("parallel",),
            vmem_limit_bytes=VMEM_LIMIT),
    )(tiles, p["dw_w"], p["dw_b"])
    y = matmul_bias(dwo.reshape(n * h * w, cin), p["pw_w"], p["pw_b"])
    return y.reshape(n, h, w, cout)


# ----------------------------------------------------------------------------
# Max pooling
# ----------------------------------------------------------------------------
def _maxpool_halo_kernel(x_ref, o_ref, *, th, w):
    xb = x_ref[...]                        # (1, th+2, w+2, c)
    m = xb[0, 0:th, 0:w, :]
    for kh in range(3):
        for kw in range(3):
            if kh == 0 and kw == 0:
                continue
            m = jnp.maximum(m, xb[0, kh:kh + th, kw:kw + w, :])
    o_ref[...] = m


@jax.jit
def maxpool_3x3_same(x):
    n, h, w, c = x.shape
    th = _row_tile(h)
    nt = h // th
    wp = w + 2
    xp = jnp.pad(x, ((0, 0), (1, 1), (1, 1), (0, 0)),
                 constant_values=float("-inf"))
    tiles = jnp.stack([xp[:, t * th:t * th + th + 2] for t in range(nt)],
                      axis=1).reshape(n * nt, th + 2, wp, c)
    out = pl.pallas_call(
        functools.partial(_maxpool_halo_kernel, th=th, w=w),
        out_shape=jax.ShapeDtypeStruct((n * h, w, c), x.dtype),
        grid=(n * nt,),
        in_specs=[pl.BlockSpec((1, th + 2, wp, c), lambda g: (g, 0, 0, 0))],
        out_specs=pl.BlockSpec((th, w, c), lambda g: (g, 0, 0)),
        compiler_params=pltpu.CompilerParams(dimension_semantics=("parallel",)),
    )(tiles)
    return out.reshape(n, h, w, c)


def _stack_max_kernel(xs_ref, o_ref):
    o_ref[...] = jnp.max(xs_ref[...], axis=0)


@jax.jit
def maxpool_3x3_stride3(x):
    # Non-overlapping stride-3 pool of the tiny 16-channel stem output.
    n, h, w, c = x.shape
    oh, ow = (h - 3) // 3 + 1, (w - 3) // 3 + 1
    taps = [x[:, dh:dh + 3 * (oh - 1) + 1:3, dw:dw + 3 * (ow - 1) + 1:3, :]
            for dh in range(3) for dw in range(3)]
    xs = jnp.stack(taps, axis=0).reshape(9, n * oh * ow, c)
    m = n * oh * ow
    pad = (-m) % TILE_M
    if pad:
        xs = jnp.pad(xs, ((0, 0), (0, pad), (0, 0)),
                     constant_values=float("-inf"))
    mp = m + pad
    out = pl.pallas_call(
        _stack_max_kernel,
        out_shape=jax.ShapeDtypeStruct((mp, c), x.dtype),
        grid=(mp // TILE_M,),
        in_specs=[pl.BlockSpec((9, TILE_M, c), lambda i: (0, i, 0))],
        out_specs=pl.BlockSpec((TILE_M, c), lambda i: (i, 0)),
        compiler_params=pltpu.CompilerParams(dimension_semantics=("parallel",)),
    )(xs)
    return out[:m].reshape(n, oh, ow, c)


# ----------------------------------------------------------------------------
# LayerNorm([H, W]) + ReLU, with an optional fused residual add
# ----------------------------------------------------------------------------
def _ln_stats_kernel(x_ref, mean_ref, rstd_ref, *, inv_hw, eps):
    k = pl.program_id(2)

    @pl.when(k == 0)
    def _():
        mean_ref[...] = jnp.zeros_like(mean_ref)
        rstd_ref[...] = jnp.zeros_like(rstd_ref)

    xb = x_ref[...].astype(jnp.float32)
    mean_ref[...] += jnp.sum(xb, axis=1, keepdims=True)
    rstd_ref[...] += jnp.sum(xb * xb, axis=1, keepdims=True)

    @pl.when(k == pl.num_programs(2) - 1)
    def _():
        mu = mean_ref[...] * inv_hw
        var = rstd_ref[...] * inv_hw - mu * mu
        mean_ref[...] = mu
        rstd_ref[...] = jax.lax.rsqrt(jnp.maximum(var, 0.0) + eps)


def _ln_apply_kernel(x_ref, mean_ref, rstd_ref, w_ref, b_ref, o_ref):
    xb = x_ref[...].astype(jnp.float32)
    y = (xb - mean_ref[...]) * rstd_ref[...] * w_ref[...][None] + b_ref[...][None]
    o_ref[...] = jnp.maximum(y, 0.0).astype(o_ref.dtype)


def _ln_apply_res_kernel(x_ref, mean_ref, rstd_ref, w_ref, b_ref, r_ref, o_ref):
    xb = x_ref[...].astype(jnp.float32)
    y = (xb - mean_ref[...]) * rstd_ref[...] * w_ref[...][None] + b_ref[...][None]
    y = jnp.maximum(y, 0.0) + r_ref[...].astype(jnp.float32)
    o_ref[...] = y.astype(o_ref.dtype)


@jax.jit
def layernorm_hw_relu(x, p, res=None):
    n, h, wd, c = x.shape
    hw = h * wd
    thw = 2016
    assert hw % thw == 0
    tc = 128 if c % 128 == 0 else c
    xr = x.reshape(n, hw, c)
    grid = (n, c // tc, hw // thw)
    mean, rstd = pl.pallas_call(
        functools.partial(_ln_stats_kernel, inv_hw=1.0 / hw, eps=1e-5),
        out_shape=(jax.ShapeDtypeStruct((n, 1, c), F32),
                   jax.ShapeDtypeStruct((n, 1, c), F32)),
        grid=grid,
        in_specs=[pl.BlockSpec((1, thw, tc), lambda i, j, k: (i, k, j))],
        out_specs=(pl.BlockSpec((1, 1, tc), lambda i, j, k: (i, 0, j)),
                   pl.BlockSpec((1, 1, tc), lambda i, j, k: (i, 0, j))),
        compiler_params=pltpu.CompilerParams(
            dimension_semantics=("parallel", "parallel", "arbitrary")),
    )(xr)
    base_specs = [pl.BlockSpec((1, thw, tc), lambda i, j, k: (i, k, j)),
                  pl.BlockSpec((1, 1, tc), lambda i, j, k: (i, 0, j)),
                  pl.BlockSpec((1, 1, tc), lambda i, j, k: (i, 0, j)),
                  pl.BlockSpec((thw, 1), lambda i, j, k: (k, 0)),
                  pl.BlockSpec((thw, 1), lambda i, j, k: (k, 0))]
    out_spec = pl.BlockSpec((1, thw, tc), lambda i, j, k: (i, k, j))
    cparams = pltpu.CompilerParams(
        dimension_semantics=("parallel", "parallel", "parallel"))
    if res is None:
        out = pl.pallas_call(
            _ln_apply_kernel,
            out_shape=jax.ShapeDtypeStruct((n, hw, c), BF16),
            grid=grid, in_specs=base_specs, out_specs=out_spec,
            compiler_params=cparams,
        )(xr, mean, rstd, p["w"], p["b"])
    else:
        rr = res.reshape(n, hw, c)
        out = pl.pallas_call(
            _ln_apply_res_kernel,
            out_shape=jax.ShapeDtypeStruct((n, hw, c), BF16),
            grid=grid,
            in_specs=base_specs + [pl.BlockSpec((1, thw, tc),
                                                lambda i, j, k: (i, k, j))],
            out_specs=out_spec, compiler_params=cparams,
        )(xr, mean, rstd, p["w"], p["b"], rr)
    return out.reshape(n, h, wd, c)


# ----------------------------------------------------------------------------
# AC block: spatial mean -> Linear/ReLU/Linear/Sigmoid -> per-channel scale
# (optional self-residual and optional fused external residual)
# ----------------------------------------------------------------------------
def _chan_sum_kernel(x_ref, o_ref, *, inv_hw):
    k = pl.program_id(1)

    @pl.when(k == 0)
    def _():
        o_ref[...] = jnp.zeros_like(o_ref)

    o_ref[...] += jnp.sum(x_ref[...].astype(jnp.float32), axis=1, keepdims=True)

    @pl.when(k == pl.num_programs(1) - 1)
    def _():
        o_ref[...] = o_ref[...] * inv_hw


def _ac_mlp_kernel(x_ref, w1_ref, b1_ref, w2_ref, b2_ref, o_ref):
    x = x_ref[...]
    hmid = jnp.dot(x, w1_ref[...], preferred_element_type=jnp.float32) + b1_ref[...]
    hmid = jnp.maximum(hmid, 0.0)
    z = jnp.dot(hmid, w2_ref[...], preferred_element_type=jnp.float32) + b2_ref[...]
    o_ref[...] = 1.0 / (1.0 + jnp.exp(-z))


def _ac_scale_kernel(x_ref, s_ref, o_ref, *, resnet):
    x = x_ref[...].astype(jnp.float32)
    y = x * s_ref[...]
    if resnet:
        y = y + x
    o_ref[...] = y.astype(o_ref.dtype)


def _ac_scale_res_kernel(x_ref, s_ref, r_ref, o_ref, *, resnet):
    x = x_ref[...].astype(jnp.float32)
    y = x * s_ref[...]
    if resnet:
        y = y + x
    y = y + r_ref[...].astype(jnp.float32)
    o_ref[...] = y.astype(o_ref.dtype)


@functools.partial(jax.jit, static_argnames=("resnet",))
def ac_module(x, p, res=None, *, resnet):
    n, h, wd, c = x.shape
    hw = h * wd
    thw = 4704                          # divides 168*168
    xr = x.reshape(n, hw, c)
    pad = (-hw) % thw
    xp = jnp.pad(xr, ((0, 0), (0, pad), (0, 0))) if pad else xr
    hwp = hw + pad
    grid2 = (n, hwp // thw)
    means = pl.pallas_call(
        functools.partial(_chan_sum_kernel, inv_hw=1.0 / hw),
        out_shape=jax.ShapeDtypeStruct((n, 1, c), F32),
        grid=grid2,
        in_specs=[pl.BlockSpec((1, thw, c), lambda i, k: (i, k, 0))],
        out_specs=pl.BlockSpec((1, 1, c), lambda i, k: (i, 0, 0)),
        compiler_params=pltpu.CompilerParams(
            dimension_semantics=("parallel", "arbitrary")),
    )(xp)
    scale = pl.pallas_call(
        _ac_mlp_kernel,
        out_shape=jax.ShapeDtypeStruct((n, c), F32),
    )(means.reshape(n, c), p["w1"], p["b1"], p["w2"], p["b2"])
    scale3 = scale.reshape(n, 1, c)
    cparams = pltpu.CompilerParams(dimension_semantics=("parallel", "parallel"))
    if res is None:
        out = pl.pallas_call(
            functools.partial(_ac_scale_kernel, resnet=resnet),
            out_shape=jax.ShapeDtypeStruct((n, hwp, c), BF16),
            grid=grid2,
            in_specs=[pl.BlockSpec((1, thw, c), lambda i, k: (i, k, 0)),
                      pl.BlockSpec((1, 1, c), lambda i, k: (i, 0, 0))],
            out_specs=pl.BlockSpec((1, thw, c), lambda i, k: (i, k, 0)),
            compiler_params=cparams,
        )(xp, scale3)
    else:
        rr = res.reshape(n, hw, c)
        if pad:
            rr = jnp.pad(rr, ((0, 0), (0, pad), (0, 0)))
        out = pl.pallas_call(
            functools.partial(_ac_scale_res_kernel, resnet=resnet),
            out_shape=jax.ShapeDtypeStruct((n, hwp, c), BF16),
            grid=grid2,
            in_specs=[pl.BlockSpec((1, thw, c), lambda i, k: (i, k, 0)),
                      pl.BlockSpec((1, 1, c), lambda i, k: (i, 0, 0)),
                      pl.BlockSpec((1, thw, c), lambda i, k: (i, k, 0))],
            out_specs=pl.BlockSpec((1, thw, c), lambda i, k: (i, k, 0)),
            compiler_params=cparams,
        )(xp, scale3, rr)
    if pad:
        out = out[:, :hw, :]
    return out.reshape(n, h, wd, c)


# ----------------------------------------------------------------------------
# ConvTranspose2d(128, 2, k=11, stride=3): Pallas matmul over taps + scatter glue
# then a lane-dense channel softmax on the NCHW view.
# ----------------------------------------------------------------------------
@jax.jit
def conv_transpose_11x3(x, w, b):
    n, h, wd, cin = x.shape
    k, s = 11, 3
    cout = b.shape[0]
    oh, ow = (h - 1) * s + k, (wd - 1) * s + k
    r = matmul_bias(x.reshape(n * h * wd, cin), w,
                    jnp.zeros((1, w.shape[1]), F32), out_dtype=F32)
    r = r.reshape(n, h, wd, k, k, cout)
    out = jnp.zeros((n, oh, ow, cout), F32) + b
    # TODO(synk): the stride-3 overlap-add stays in XLA glue; the MAC-heavy
    # (x @ W_taps) part above runs in the Pallas matmul kernel.
    for kh in range(k):
        for kw in range(k):
            out = out.at[:, kh:kh + s * (h - 1) + 1:s,
                         kw:kw + s * (wd - 1) + 1:s, :].add(r[:, :, :, kh, kw, :])
    return jnp.transpose(out, (0, 3, 1, 2))   # NCHW (n, 2, 512, 512)


def _softmax2_kernel(x_ref, o_ref):
    x = x_ref[...][0]                           # (2, th, ow) f32
    m = jnp.max(x, axis=0, keepdims=True)
    e = jnp.exp(x - m)
    p = e / jnp.sum(e, axis=0, keepdims=True)
    o_ref[...] = p[None].astype(o_ref.dtype)


@jax.jit
def channel_softmax_nchw2(x):
    n, c, oh, ow = x.shape
    th = 128
    assert oh % th == 0
    return pl.pallas_call(
        _softmax2_kernel,
        out_shape=jax.ShapeDtypeStruct((n, c, oh, ow), F32),
        grid=(n, oh // th),
        in_specs=[pl.BlockSpec((1, c, th, ow), lambda b, t: (b, 0, t, 0))],
        out_specs=pl.BlockSpec((1, c, th, ow), lambda b, t: (b, 0, t, 0)),
        compiler_params=pltpu.CompilerParams(
            dimension_semantics=("parallel", "parallel")),
    )(x)


# ----------------------------------------------------------------------------
# Deterministic parameter construction (synthetic weights, PyTorch layer shapes)
# ----------------------------------------------------------------------------
class ParamGen:
    def __init__(self, seed=0):
        self._key = jax.random.PRNGKey(seed)

    def normal(self, shape, scale):
        self._key, sub = jax.random.split(self._key)
        return scale * jax.random.normal(sub, shape, dtype=F32)


def conv1x1_p(pg, cin, cout):
    return {"w": pg.normal((cin, cout), 1.0 / math.sqrt(cin)).astype(BF16),
            "b": pg.normal((1, cout), 0.01)}


def convk_p(pg, cin, cout, k):
    return {"w": pg.normal((k * k * cin, cout),
                           1.0 / math.sqrt(k * k * cin)).astype(BF16),
            "b": pg.normal((1, cout), 0.01)}


def dwconv_p(pg, cin, cout):
    return {"dw_w": pg.normal((9, cin), 1.0 / 3.0),
            "dw_b": pg.normal((1, cin), 0.01),
            "pw_w": pg.normal((cin, cout), 1.0 / math.sqrt(cin)).astype(BF16),
            "pw_b": pg.normal((1, cout), 0.01)}


def ln_p(pg, hw):
    return {"w": 1.0 + pg.normal((hw, 1), 0.05),
            "b": pg.normal((hw, 1), 0.05)}


def ac_p(pg, c, ratio):
    hidden = int(c / ratio)
    return {"w1": pg.normal((c, hidden), 1.0 / math.sqrt(c)),
            "b1": pg.normal((1, hidden), 0.01),
            "w2": pg.normal((hidden, c), 1.0 / math.sqrt(hidden)),
            "b2": pg.normal((1, c), 0.01)}


def convtrans_p(pg, cin, cout, k):
    w = pg.normal((cin, k, k, cout), 1.0 / math.sqrt(cin)).reshape(cin, k * k * cout)
    return {"w": w.astype(BF16), "b": pg.normal((cout,), 0.01)}


def init_params(seed=0):
    pg = ParamGen(seed)
    HW = 168 * 168
    P = {}
    P["p0"] = convk_p(pg, 1, 16, 7)
    # part_1
    P["p1_ac"] = ac_p(pg, 16, 4)
    P["p1_conv1"] = conv1x1_p(pg, 16, 32)
    P["p1_dw"] = dwconv_p(pg, 32, 32)
    P["p1_conv2"] = conv1x1_p(pg, 32, 128)
    P["p1_resize"] = convk_p(pg, 128, 256, 5)
    # part_2
    P["s1_conv_a"] = conv1x1_p(pg, 16, 32);   P["s1_ln_a"] = ln_p(pg, HW)
    P["s1_ac"] = ac_p(pg, 32, 4)
    P["s1_conv_b"] = conv1x1_p(pg, 32, 128);  P["s1_ln_b"] = ln_p(pg, HW)
    P["conv1_o"] = conv1x1_p(pg, 16, 128)
    P["s2_conv_a"] = conv1x1_p(pg, 128, 32);  P["s2_ln_a"] = ln_p(pg, HW)
    P["s2_ac"] = ac_p(pg, 32, 4)
    P["s2_conv_b"] = conv1x1_p(pg, 32, 128);  P["s2_ln_b"] = ln_p(pg, HW)
    P["s3_conv_a"] = conv1x1_p(pg, 128, 32);  P["s3_ln_a"] = ln_p(pg, HW)
    P["s3_dw"] = dwconv_p(pg, 32, 64)
    P["s3_conv_b"] = conv1x1_p(pg, 64, 32);   P["s3_ln_b"] = ln_p(pg, HW)
    P["s3_conv_c"] = conv1x1_p(pg, 32, 128);  P["s3_ln_c"] = ln_p(pg, HW)
    P["c18_conv_a"] = conv1x1_p(pg, 128, 256); P["c18_ln_a"] = ln_p(pg, HW)
    P["c18_conv_b"] = conv1x1_p(pg, 256, 128); P["c18_ln_b"] = ln_p(pg, HW)
    P["s4_dw"] = dwconv_p(pg, 128, 512)
    P["s4_conv"] = conv1x1_p(pg, 512, 128);   P["s4_ln"] = ln_p(pg, HW)
    P["s5_dw"] = dwconv_p(pg, 128, 512)
    P["s5_conv"] = conv1x1_p(pg, 512, 128);   P["s5_ln"] = ln_p(pg, HW)
    P["s6_dw"] = dwconv_p(pg, 128, 256)
    P["s6_conv"] = conv1x1_p(pg, 256, 256);   P["s6_ln"] = ln_p(pg, HW)
    # part_3
    for name in ("s7", "s8"):
        P[name + "_dw"] = dwconv_p(pg, 256, 256)
        P[name + "_conv"] = conv1x1_p(pg, 256, 256)
        P[name + "_ln"] = ln_p(pg, HW)
    P["s9_dw"] = dwconv_p(pg, 256, 512)
    P["s9_conv_a"] = conv1x1_p(pg, 512, 128); P["s9_ln_a"] = ln_p(pg, HW)
    P["s9_conv_b"] = conv1x1_p(pg, 128, 256); P["s9_ln_b"] = ln_p(pg, HW)
    P["s10_dw"] = dwconv_p(pg, 256, 128)
    P["s10_conv"] = conv1x1_p(pg, 128, 256);  P["s10_ln"] = ln_p(pg, HW)
    P["s11_dw"] = dwconv_p(pg, 256, 256)
    P["s11_conv"] = conv1x1_p(pg, 256, 256);  P["s11_ln"] = ln_p(pg, HW)
    P["resize_1"] = conv1x1_p(pg, 256, 128)
    # part_4
    P["p4_conv"] = conv1x1_p(pg, 16, 128)
    P["s12_ac_a"] = ac_p(pg, 128, 2); P["s12_ac_b"] = ac_p(pg, 128, 4)
    P["s13_ac_a"] = ac_p(pg, 128, 2); P["s13_ac_b"] = ac_p(pg, 128, 4)
    P["ac_1"] = ac_p(pg, 128, 0.5)
    P["s14_ac"] = ac_p(pg, 128, 1)
    P["s15_ac"] = ac_p(pg, 128, 1)
    P["resize_2"] = convtrans_p(pg, 128, 2, 11)
    return P


# ----------------------------------------------------------------------------
# Forward pass (mirrors ACRNet.forward; residual adds fused into LN/AC epilogues)
# ----------------------------------------------------------------------------
def acrnet_forward(P, x):
    x = x.astype(BF16)
    y = conv2d_im2col(x, P["p0"]["w"], P["p0"]["b"], ksize=7, stride=1)    # (N,506,506,16)

    # part 1
    y1 = ac_module(y, P["p1_ac"], resnet=True)
    y1 = conv1x1(y1, P["p1_conv1"])
    y1 = dwconv_pointwise(y1, P["p1_dw"])
    y1 = conv1x1(y1, P["p1_conv2"])
    y1 = conv5x5s3_direct(y1, P["p1_resize"]["w"], P["p1_resize"]["b"])    # (N,168,168,256)

    # part 2
    t1 = maxpool_3x3_stride3(y)                                            # (N,168,168,16)
    h = conv1x1(t1, P["s1_conv_a"])
    h = layernorm_hw_relu(h, P["s1_ln_a"])
    h = ac_module(h, P["s1_ac"], resnet=True)
    h = conv1x1(h, P["s1_conv_b"])
    y2_1_2 = conv1x1(t1, P["conv1_o"])
    y2_1 = layernorm_hw_relu(h, P["s1_ln_b"], res=y2_1_2)

    h = conv1x1(y2_1, P["s2_conv_a"])
    h = layernorm_hw_relu(h, P["s2_ln_a"])
    h = ac_module(h, P["s2_ac"], resnet=True)
    h = conv1x1(h, P["s2_conv_b"])
    y2_2 = layernorm_hw_relu(h, P["s2_ln_b"], res=y2_1)

    h = conv1x1(y2_2, P["s3_conv_a"])
    h = layernorm_hw_relu(h, P["s3_ln_a"])
    h = dwconv_pointwise(h, P["s3_dw"])
    h = conv1x1(h, P["s3_conv_b"])
    h = layernorm_hw_relu(h, P["s3_ln_b"])
    h = conv1x1(h, P["s3_conv_c"])
    y2_3_2 = maxpool_3x3_same(y2_2)
    y2_3 = layernorm_hw_relu(h, P["s3_ln_c"], res=y2_3_2)

    h = conv1x1(y2_3, P["c18_conv_a"])
    h = layernorm_hw_relu(h, P["c18_ln_a"])
    h = conv1x1(h, P["c18_conv_b"])
    y2_4 = layernorm_hw_relu(h, P["c18_ln_b"])

    h = dwconv_pointwise(y2_4, P["s4_dw"])
    h = conv1x1(h, P["s4_conv"])
    y2_5 = layernorm_hw_relu(h, P["s4_ln"], res=y2_4)

    h = dwconv_pointwise(y2_5, P["s5_dw"])
    h = conv1x1(h, P["s5_conv"])
    y2_6 = layernorm_hw_relu(h, P["s5_ln"], res=y2_5)

    h = dwconv_pointwise(y2_6, P["s6_dw"])
    h = conv1x1(h, P["s6_conv"])
    y3_1 = layernorm_hw_relu(h, P["s6_ln"], res=y1)           # y2 + y1 fused

    def pool_dw_conv_ln(name, z):
        t = maxpool_3x3_same(z)
        t = dwconv_pointwise(t, P[name + "_dw"])
        t = conv1x1(t, P[name + "_conv"])
        return layernorm_hw_relu(t, P[name + "_ln"], res=z)   # + z fused

    y3_2 = pool_dw_conv_ln("s7", y3_1)
    y3_3 = pool_dw_conv_ln("s8", y3_2)

    h = dwconv_pointwise(y3_3, P["s9_dw"])
    h = conv1x1(h, P["s9_conv_a"])
    h = layernorm_hw_relu(h, P["s9_ln_a"])
    h = conv1x1(h, P["s9_conv_b"])
    y3_4 = layernorm_hw_relu(h, P["s9_ln_b"], res=y3_3)

    h = dwconv_pointwise(y3_4, P["s10_dw"])
    h = conv1x1(h, P["s10_conv"])
    y3_5 = layernorm_hw_relu(h, P["s10_ln"], res=y3_4)

    h = dwconv_pointwise(y3_5, P["s11_dw"])
    h = conv1x1(h, P["s11_conv"])
    h = layernorm_hw_relu(h, P["s11_ln"], res=y3_5)
    y3 = conv1x1(h, P["resize_1"])                                         # (N,168,168,128)

    # part 4
    y4_1 = conv1x1(t1, P["p4_conv"])
    h = ac_module(y4_1, P["s12_ac_a"], resnet=True)
    y4_2 = ac_module(h, P["s12_ac_b"], res=y4_1, resnet=True)
    h = ac_module(y4_2, P["s13_ac_a"], resnet=True)
    y4_3 = ac_module(h, P["s13_ac_b"], res=y4_2, resnet=True)
    y4_5 = ac_module(y4_3, P["ac_1"], res=y3, resnet=False)                # y4_4 + y3 fused
    y4_6 = ac_module(maxpool_3x3_same(y4_5), P["s14_ac"], res=y4_5, resnet=True)
    y4_7 = ac_module(maxpool_3x3_same(y4_6), P["s15_ac"], res=y4_6, resnet=True)

    logits = conv_transpose_11x3(y4_7, P["resize_2"]["w"], P["resize_2"]["b"])
    return channel_softmax_nchw2(logits)                                   # (N,2,512,512)


if __name__ == "__main__":
    # The module hard-codes LayerNorm([168, 168]) and the resize strides, which
    # forces the input to be (N, 1, 512, 512).  We use batch=1.
    key = jax.random.PRNGKey(0)
    x_nchw = jax.random.normal(key, (1, 1, 512, 512), dtype=F32)
    x = jnp.transpose(x_nchw, (0, 2, 3, 1))  # NHWC inside the kernels
    params = init_params(seed=0)
    out = acrnet_forward(params, x)
    out = jax.block_until_ready(out)
    assert out.shape == (1, 2, 512, 512), out.shape
    assert bool(jnp.all(jnp.isfinite(out)))
    print("KERNEL_OK")
</pallas_src>

<mosaic_0001>
module attributes {stable_mosaic.version = 11 : i64} {
  func.func @_matmul_bias_kernel(%arg0: i32, %arg1: memref<2016x49xbf16, #tpu.memory_space<vmem>>, %arg2: memref<49x16xbf16, #tpu.memory_space<vmem>>, %arg3: memref<1x16xf32, #tpu.memory_space<vmem>>, %arg4: memref<2016x16xbf16, #tpu.memory_space<vmem>>) attributes {dimension_semantics = [#tpu.dimension_semantics<parallel>], iteration_bounds = array<i64: 128>, scalar_prefetch = 0 : i64, scratch_operands = 0 : i64, tpu.core_type = #tpu.core_type<tc>, window_params = [{transform_indices = @transform_0, window_bounds = array<i64: 2016, 49>}, {pipeline_mode = #tpu.pipeline_mode<synchronous>, transform_indices = @transform_1, window_bounds = array<i64: 49, 16>}, {pipeline_mode = #tpu.pipeline_mode<synchronous>, transform_indices = @transform_2, window_bounds = array<i64: 1, 16>}, {transform_indices = @transform_3, window_bounds = array<i64: 2016, 16>}]} {
    %c0 = arith.constant 0 : index
    %c0_0 = arith.constant 0 : index
    %0 = vector.load %arg1[%c0, %c0_0] : memref<2016x49xbf16, #tpu.memory_space<vmem>>, vector<2016x49xbf16>
    %c0_1 = arith.constant 0 : index
    %c0_2 = arith.constant 0 : index
    %1 = vector.load %arg2[%c0_1, %c0_2] : memref<49x16xbf16, #tpu.memory_space<vmem>>, vector<49x16xbf16>
    %cst = arith.constant dense<0.000000e+00> : vector<2016x16xf32>
    %2 = tpu.matmul %0, %1, %cst {dimension_numbers = #tpu.dot_dimension_numbers<[1], [0], [0], [1], [0, 0, 1, 1], [], []>} : vector<2016x49xbf16>, vector<49x16xbf16>, vector<2016x16xf32> -> vector<2016x16xf32>
    %c0_3 = arith.constant 0 : index
    %c0_4 = arith.constant 0 : index
    %3 = vector.load %arg3[%c0_3, %c0_4] : memref<1x16xf32, #tpu.memory_space<vmem>>, vector<1x16xf32>
    %4 = vector.broadcast %3 : vector<1x16xf32> to vector<2016x16xf32>
    %5 = arith.addf %2, %4 : vector<2016x16xf32>
    %6 = arith.truncf %5 : vector<2016x16xf32> to vector<2016x16xbf16>
    %c0_5 = arith.constant 0 : index
    %c0_6 = arith.constant 0 : index
    %7 = vector.load %arg4[%c0_5, %c0_6] : memref<2016x16xbf16, #tpu.memory_space<vmem>>, vector<2016x16xbf16>
    tpu.vector_store %arg4[%c0_5, %c0_6], %6 {strides = array<i32>} : memref<2016x16xbf16, #tpu.memory_space<vmem>>, vector<2016x16xbf16>,
    return
  }
  func.func @transform_0(%arg0: i32) -> (i32, i32) {
    %c0_i32 = arith.constant 0 : i32
    %c0_i32_0 = arith.constant 0 : i32
    return %arg0, %c0_i32 : i32, i32
  }
  func.func @transform_1(%arg0: i32) -> (i32, i32) {
    %c0_i32 = arith.constant 0 : i32
    %c0_i32_0 = arith.constant 0 : i32
    %c0_i32_1 = arith.constant 0 : i32
    return %c0_i32, %c0_i32_0 : i32, i32
  }
  func.func @transform_2(%arg0: i32) -> (i32, i32) {
    %c0_i32 = arith.constant 0 : i32
    %c0_i32_0 = arith.constant 0 : i32
    %c0_i32_1 = arith.constant 0 : i32
    return %c0_i32, %c0_i32_0 : i32, i32
  }
  func.func @transform_3(%arg0: i32) -> (i32, i32) {
    %c0_i32 = arith.constant 0 : i32
    %c0_i32_0 = arith.constant 0 : i32
    return %arg0, %c0_i32 : i32, i32
  }
}

</mosaic_0001>

<llo_original>
// kernel: conv2d_im2col.1
$region0: #{conv2d_im2col.1}
  #allocation0 [shape = 'u32[]', space=smem, size = 0x4, offset = 0x4, fixed_abs, tag = 'smem constant byte address 0x4 - core index']
  #allocation1 [shape = 'u32[144,128]{1,0:T(1,128)}', space=vmem, size = 0x12000, scoped, tag = 'internal scratch']
  %s0 = inlined_call_operand.hbm [shape: bf16[258048,49], index: 0, kind: input, shape index: {}]
  %s1 = inlined_call_operand.vmem [shape: bf16[49,16], index: 1, kind: input, shape index: {}]
  %s2 = inlined_call_operand.vmem [shape: f32[1,16], index: 2, kind: input, shape index: {}]
  %s3 = inlined_call_operand.hbm [shape: bf16[258048,16], index: 3, kind: output, shape index: {}]
  %s4 = sld [smem:[#allocation0]]
  $region49: #{conv2d_im2col.1} parent=0
    _
  %s6 = ssub.s32 1, %s4
  %s7 = scalar_select 0, %s6, %s4
  $region1: #{conv2d_im2col.1} parent=0
    #allocation2 [shape = 'u8[1032192]{0}', space=vmem, size = 0xfc000, scoped, tag = 'input window, operand 0']
    #allocation3 [shape = 's32[2]{0}', space=sflag, size = 0x8, scoped, tag = 'scoped memory for conv2d_im2col.1']
    #allocation4 [shape = 's32[2]{0}', space=sflag, size = 0x8, scoped, tag = 'scoped memory for conv2d_im2col.1']
    #allocation5 [shape = 'u8[1032192]{0}', space=vmem, size = 0xfc000, scoped, tag = 'output window, operand 0']
    %8 = vsyncpa [#allocation3], 0
    %s9 = scalar_lea.sflag [#allocation3], 1
    %10 = vsyncpa %s9, 0
    %11 = vsyncpa [#allocation4], 0
    %s12 = scalar_lea.sflag [#allocation4], 1
    %13 = vsyncpa %s12, 0
    loop: start=0, step=1, limit=130
    $region2: #{conv2d_im2col.1} parent=1 // loop_pre_header
      _
    $region3: #{conv2d_im2col.1} parent=1 // loop_header
      %s15 = sphi 0, %s19
      %p16 = scmp.ge.s32.totalorder %s15, 130
      %s25 = sphi 0, %s27
      %s28 = sphi 0, %s25
      %s29 = sphi 0, %s28
      %s45 = sphi 0, %s29
      %s49 = sphi 0, %s49
      %s51 = sphi 0, %s49
      %s52 = sphi 0, %s51
      %s66 = sphi 0, %s52
      %s70 = sphi 0, %s70
      %s72 = sphi 0, %s70
      %s73 = sphi 0, %s72
      %s87 = sphi 0, %s73
      %s93 = sphi 0, %s95
      %s96 = sphi 0, %s93
      %s97 = sphi 0, %s96
      %s113 = sphi 0, %s97
    $region4: #{conv2d_im2col.1} parent=1 // loop_header_branch
      %18 = sbr.rel (%p16) target = $region8
    $region5: #{conv2d_im2col.1} parent=1 // loop_body
      %s20 = ssub.s32 %s15, 1
      %s21 = ssub.s32 %s15, 2
      %s22 = sadd.s32 %s15, 1
      %s23 = ssub.s32 %s15, %s22
      %p24 = scmp.eq.s32.totalorder %s23, 0
      %s26 = sadd.s32 %s25, 1
      %s27 = scalar_select %p24, %s25, %s26
      %p30 = pneg %p24
      %p31 = scmp.eq.s32.totalorder %s15, 127
      %p32 = por %p30, %p31
      %p33 = scmp.ne.s32.totalorder %s25, %s28
      %p34 = scmp.eq.s32.totalorder %s15, 0
      %p35 = por %p33, %p34
      %p36 = scmp.ne.s32.totalorder %s25, %s28
      %p37 = scmp.eq.s32.totalorder %s20, 127
      %p38 = por %p36, %p37
      %p39 = scmp.ne.s32.totalorder %s28, %s29
      %p40 = scmp.eq.s32.totalorder %s20, 0
      %p41 = por %p39, %p40
      %p42 = scmp.ne.s32.totalorder %s28, %s29
      %p43 = scmp.eq.s32.totalorder %s21, 127
      %p44 = por %p42, %p43
      %p46 = scmp.ne.s32.totalorder %s29, %s45
      %p47 = scmp.eq.s32.totalorder %s21, 0
      %p48 = por %p46, %p47
      %s50 = sadd.s32 %s49, 1
      %p53 = scmp.eq.s32.totalorder %s15, 127
      %p54 = scmp.ne.s32.totalorder %s49, %s51
      %p55 = scmp.eq.s32.totalorder %s15, 0
      %p56 = por %p54, %p55
      %p57 = scmp.ne.s32.totalorder %s49, %s51
      %p58 = scmp.eq.s32.totalorder %s20, 127
      %p59 = por %p57, %p58
      %p60 = scmp.ne.s32.totalorder %s51, %s52
      %p61 = scmp.eq.s32.totalorder %s20, 0
      %p62 = por %p60, %p61
      %p63 = scmp.ne.s32.totalorder %s51, %s52
      %p64 = scmp.eq.s32.totalorder %s21, 127
      %p65 = por %p63, %p64
      %p67 = scmp.ne.s32.totalorder %s52, %s66
      %p68 = scmp.eq.s32.totalorder %s21, 0
      %p69 = por %p67, %p68
      %s71 = sadd.s32 %s70, 1
      %p74 = scmp.eq.s32.totalorder %s15, 127
      %p75 = scmp.ne.s32.totalorder %s70, %s72
      %p76 = scmp.eq.s32.totalorder %s15, 0
      %p77 = por %p75, %p76
      %p78 = scmp.ne.s32.totalorder %s70, %s72
      %p79 = scmp.eq.s32.totalorder %s20, 127
      %p80 = por %p78, %p79
      %p81 = scmp.ne.s32.totalorder %s72, %s73
      %p82 = scmp.eq.s32.totalorder %s20, 0
      %p83 = por %p81, %p82
      %p84 = scmp.ne.s32.totalorder %s72, %s73
      %p85 = scmp.eq.s32.totalorder %s21, 127
      %p86 = por %p84, %p85
      %p88 = scmp.ne.s32.totalorder %s73, %s87
      %p89 = scmp.eq.s32.totalorder %s21, 0
      %p90 = por %p88, %p89
      %s91 = ssub.s32 %s15, %s22
      %p92 = scmp.eq.s32.totalorder %s91, 0
      %s94 = sadd.s32 %s93, 1
      %s95 = scalar_select %p92, %s93, %s94
      %p98 = pneg %p92
      %p99 = scmp.eq.s32.totalorder %s15, 127
      %p100 = por %p98, %p99
      %p101 = scmp.ne.s32.totalorder %s93, %s96
      %p102 = scmp.eq.s32.totalorder %s15, 0
      %p103 = por %p101, %p102
      %p104 = scmp.ne.s32.totalorder %s93, %s96
      %p105 = scmp.eq.s32.totalorder %s20, 127
      %p106 = por %p104, %p105
      %p107 = scmp.ne.s32.totalorder %s96, %s97
      %p108 = scmp.eq.s32.totalorder %s20, 0
      %p109 = por %p107, %p108
      %p110 = scmp.ne.s32.totalorder %s96, %s97
      %p111 = scmp.eq.s32.totalorder %s21, 127
      %p112 = por %p110, %p111
      %p114 = scmp.ne.s32.totalorder %s97, %s113
      %p115 = scmp.eq.s32.totalorder %s21, 0
      %p116 = por %p114, %p115
      %p117 = scmp.le.s32.totalorder 1, %s15
      %p118 = scmp.lt.s32.totalorder %s15, 129
      %p119 = pnand %p117, %p118
      %p120 = pneg %p119
      // Predicated region
      $region9: #{conv2d_im2col.1} parent=5 // pred_check
        _
      $region10: #{conv2d_im2col.1} parent=5 // pred_check_branch
        %122 = sbr.rel (%p119) target = $region12
      $region11: #{conv2d_im2col.1} parent=5 // pred_region
        %s123 = ssub.s32 %s15, 1
        // Predicated region
        $region13: #{conv2d_im2col.1} parent=11 // pred_check
          %p124 = pneg %p62
        $region14: #{conv2d_im2col.1} parent=11 // pred_check_branch
          %126 = sbr.rel (%p124) target = $region16
        $region15: #{conv2d_im2col.1} parent=11 // pred_region
          _
        $region16: #{conv2d_im2col.1} parent=11 // pred_fallthru
          _
        // Predicated region
        $region17: #{conv2d_im2col.1} parent=11 // pred_check
          %p127 = pneg %p83
        $region18: #{conv2d_im2col.1} parent=11 // pred_check_branch
          %129 = sbr.rel (%p127) target = $region20
        $region19: #{conv2d_im2col.1} parent=11 // pred_region
          _
        $region20: #{conv2d_im2col.1} parent=11 // pred_fallthru
          _
      $region12: #{conv2d_im2col.1} parent=5 // pred_fallthru
        _
      %p130 = scmp.lt.s32.totalorder %s15, 128
      // Predicated region
      $region21: #{conv2d_im2col.1} parent=5 // pred_check
        %p131 = pneg %p130
      $region22: #{conv2d_im2col.1} parent=5 // pred_check_branch
        %133 = sbr.rel (%p131) target = $region24
      $region23: #{conv2d_im2col.1} parent=5 // pred_region
        // Predicated region
        $region25: #{conv2d_im2col.1} parent=23 // pred_check
          %p134 = pneg %p35
        $region26: #{conv2d_im2col.1} parent=23 // pred_check_branch
          %136 = sbr.rel (%p134) target = $region28
        $region27: #{conv2d_im2col.1} parent=23 // pred_region
          %s137 = sand.u32 %s25, 1
          %s138 = scalar_lea.sflag [#allocation3], %s137
          %s139 = sand.u32 %s25, 1
          %s140 = smul.addr %s139, 1008
          %s141 = scalar_lea.vmem [#allocation2], %s140
          %s142 = smul.u32 252, %s15
          %s144 = ssub.s32 16128, 16128
          %145 = vsyncadd %s138, %s144
          %s146 = smul.addr %s142, 64
          %s147 = scalar_lea.hbm %s0, %s146
          %s148 = sshll.u32 %s141, 4
          %s149 = int_to_ptr.vmem [resolvable:$true] %s148
          %154 = dma.hbm_to_vmem [thread:$0]  %s147, 16128, %s149, %s138, 64, 64, 4
        $region28: #{conv2d_im2col.1} parent=23 // pred_fallthru
          _
      $region24: #{conv2d_im2col.1} parent=5 // pred_fallthru
        _
      %p155 = scmp.le.s32.totalorder 1, %s15
      %p156 = scmp.lt.s32.totalorder %s15, 129
      %p157 = pnand %p155, %p156
      %p158 = pneg %p157
      // Predicated region
      $region29: #{conv2d_im2col.1} parent=5 // pred_check
        _
      $region30: #{conv2d_im2col.1} parent=5 // pred_check_branch
        %160 = sbr.rel (%p157) target = $region32
      $region31: #{conv2d_im2col.1} parent=5 // pred_region
        %s161 = ssub.s32 %s15, 1
        %s162 = sand.u32 %s28, 1
        %s163 = scalar_lea.sflag [#allocation3], %s162
        %s164 = sand.u32 %s28, 1
        %s165 = smul.addr %s164, 1008
        %s166 = scalar_lea.vmem [#allocation2], %s165
        // Predicated region
        $region33: #{conv2d_im2col.1} parent=31 // pred_check
          %p167 = pneg %p41
        $region34: #{conv2d_im2col.1} parent=31 // pred_check_branch
          %169 = sbr.rel (%p167) target = $region36
        $region35: #{conv2d_im2col.1} parent=31 // pred_region
          %170 = dma.done %s163, 16128
        $region36: #{conv2d_im2col.1} parent=31 // pred_fallthru
          _
        %s171 = sand.u32 %s28, 1
        %s172 = scalar_lea.sflag [#allocation3], %s171
        %s173 = sand.u32 %s28, 1
        %s174 = smul.addr %s173, 1008
        %s175 = scalar_lea.vmem [#allocation2], %s174
        %p176 = pneg %p41
        %p177 = pneg %p38
        %p178 = pneg %p62
        %p179 = pneg %p59
        %p180 = pneg %p83
        %p181 = pneg %p80
        %p182 = pneg %p109
        %p183 = pneg %p106
        %s184 = sand.u32 %s96, 1
        %s185 = scalar_lea.sflag [#allocation4], %s184
        %s186 = sand.u32 %s96, 1
        %s187 = smul.addr %s186, 1008
        %s188 = scalar_lea.vmem [#allocation5], %s187
        %s189 = smul.u32 252, %s20
        %s190 = smul.u32 252, %s20
        %v192 = vld [vmem:[%s166] sm:$0xf]
        %v193 = vld [vmem:[%s166 + $0x4] sm:$0xf]
        %v194 = vld [vmem:[%s166 + $0x8] sm:$0xf]
        %v195 = vld [vmem:[%s166 + $0xc] sm:$0xf]
        %v196 = vld [vmem:[%s166 + $0x10] sm:$0xf]
        %v197 = vld [vmem:[%s166 + $0x14] sm:$0xf]
        %v198 = vld [vmem:[%s166 + $0x18] sm:$0xf]
        %v199 = vld [vmem:[%s166 + $0x1c] sm:$0xf]
        %v200 = vld [vmem:[%s166 + $0x20] sm:$0xf]
        %v201 = vld [vmem:[%s166 + $0x24] sm:$0xf]
        %v202 = vld [vmem:[%s166 + $0x28] sm:$0xf]
        %v203 = vld [vmem:[%s166 + $0x2c] sm:$0xf]
        %v204 = vld [vmem:[%s166 + $0x30] sm:$0xf]
        %v205 = vld [vmem:[%s166 + $0x34] sm:$0xf]
        %v206 = vld [vmem:[%s166 + $0x38] sm:$0xf]
        %v207 = vld [vmem:[%s166 + $0x3c] sm:$0xf]
        %v208 = vld [vmem:[%s166 + $0x40] sm:$0xf]
        %v209 = vld [vmem:[%s166 + $0x44] sm:$0xf]
        %v210 = vld [vmem:[%s166 + $0x48] sm:$0xf]
        %v211 = vld [vmem:[%s166 + $0x4c] sm:$0xf]
        %v212 = vld [vmem:[%s166 + $0x50] sm:$0xf]
        %v213 = vld [vmem:[%s166 + $0x54] sm:$0xf]
        %v214 = vld [vmem:[%s166 + $0x58] sm:$0xf]
        %v215 = vld [vmem:[%s166 + $0x5c] sm:$0xf]
        %v216 = vld [vmem:[%s166 + $0x60] sm:$0xf]
        %v217 = vld [vmem:[%s166 + $0x64] sm:$0xf]
        %v218 = vld [vmem:[%s166 + $0x68] sm:$0xf]
        %v219 = vld [vmem:[%s166 + $0x6c] sm:$0xf]
        %v220 = vld [vmem:[%s166 + $0x70] sm:$0xf]
        %v221 = vld [vmem:[%s166 + $0x74] sm:$0xf]
        %v222 = vld [vmem:[%s166 + $0x78] sm:$0xf]
        %v223 = vld [vmem:[%s166 + $0x7c] sm:$0xf]
        %v224 = vld [vmem:[%s166 + $0x80] sm:$0xf]
        %v225 = vld [vmem:[%s166 + $0x84] sm:$0xf]
        %v226 = vld [vmem:[%s166 + $0x88] sm:$0xf]
        %v227 = vld [vmem:[%s166 + $0x8c] sm:$0xf]
        %v228 = vld [vmem:[%s166 + $0x90] sm:$0xf]
        %v229 = vld [vmem:[%s166 + $0x94] sm:$0xf]
        %v230 = vld [vmem:[%s166 + $0x98] sm:$0xf]
        %v231 = vld [vmem:[%s166 + $0x9c] sm:$0xf]
        %v232 = vld [vmem:[%s166 + $0xa0] sm:$0xf]
        %v233 = vld [vmem:[%s166 + $0xa4] sm:$0xf]
        %v234 = vld [vmem:[%s166 + $0xa8] sm:$0xf]
        %v235 = vld [vmem:[%s166 + $0xac] sm:$0xf]
        %v236 = vld [vmem:[%s166 + $0xb0] sm:$0xf]
        %v237 = vld [vmem:[%s166 + $0xb4] sm:$0xf]
        %v238 = vld [vmem:[%s166 + $0xb8] sm:$0xf]
        %v239 = vld [vmem:[%s166 + $0xbc] sm:$0xf]
        %v240 = vld [vmem:[%s166 + $0xc0] sm:$0xf]
        %v241 = vld [vmem:[%s166 + $0xc4] sm:$0xf]
        %v242 = vld [vmem:[%s166 + $0xc8] sm:$0xf]
        %v243 = vld [vmem:[%s166 + $0xcc] sm:$0xf]
        %v244 = vld [vmem:[%s166 + $0xd0] sm:$0xf]
        %v245 = vld [vmem:[%s166 + $0xd4] sm:$0xf]
        %v246 = vld [vmem:[%s166 + $0xd8] sm:$0xf]
        %v247 = vld [vmem:[%s166 + $0xdc] sm:$0xf]
        %v248 = vld [vmem:[%s166 + $0xe0] sm:$0xf]
        %v249 = vld [vmem:[%s166 + $0xe4] sm:$0xf]
        %v250 = vld [vmem:[%s166 + $0xe8] sm:$0xf]
        %v251 = vld [vmem:[%s166 + $0xec] sm:$0xf]
        %v252 = vld [vmem:[%s166 + $0xf0] sm:$0xf]
        %v253 = vld [vmem:[%s166 + $0xf4] sm:$0xf]
        %v254 = vld [vmem:[%s166 + $0xf8] sm:$0xf]
        %v255 = vld [vmem:[%s166 + $0xfc] sm:$0xf]
        %v256 = vld [vmem:[%s166 + $0x100] sm:$0xf]
        %v257 = vld [vmem:[%s166 + $0x104] sm:$0xf]
        %v258 = vld [vmem:[%s166 + $0x108] sm:$0xf]
        %v259 = vld [vmem:[%s166 + $0x10c] sm:$0xf]
        %v260 = vld [vmem:[%s166 + $0x110] sm:$0xf]
        %v261 = vld [vmem:[%s166 + $0x114] sm:$0xf]
        %v262 = vld [vmem:[%s166 + $0x118] sm:$0xf]
        %v263 = vld [vmem:[%s166 + $0x11c] sm:$0xf]
        %v264 = vld [vmem:[%s166 + $0x120] sm:$0xf]
        %v265 = vld [vmem:[%s166 + $0x124] sm:$0xf]
        %v266 = vld [vmem:[%s166 + $0x128] sm:$0xf]
        %v267 = vld [vmem:[%s166 + $0x12c] sm:$0xf]
        %v268 = vld [vmem:[%s166 + $0x130] sm:$0xf]
        %v269 = vld [vmem:[%s166 + $0x134] sm:$0xf]
        %v270 = vld [vmem:[%s166 + $0x138] sm:$0xf]
        %v271 = vld [vmem:[%s166 + $0x13c] sm:$0xf]
        %v272 = vld [vmem:[%s166 + $0x140] sm:$0xf]
        %v273 = vld [vmem:[%s166 + $0x144] sm:$0xf]
        %v274 = vld [vmem:[%s166 + $0x148] sm:$0xf]
        %v275 = vld [vmem:[%s166 + $0x14c] sm:$0xf]
        %v276 = vld [vmem:[%s166 + $0x150] sm:$0xf]
        %v277 = vld [vmem:[%s166 + $0x154] sm:$0xf]
        %v278 = vld [vmem:[%s166 + $0x158] sm:$0xf]
        %v279 = vld [vmem:[%s166 + $0x15c] sm:$0xf]
        %v280 = vld [vmem:[%s166 + $0x160] sm:$0xf]
        %v281 = vld [vmem:[%s166 + $0x164] sm:$0xf]
        %v282 = vld [vmem:[%s166 + $0x168] sm:$0xf]
        %v283 = vld [vmem:[%s166 + $0x16c] sm:$0xf]
        %v284 = vld [vmem:[%s166 + $0x170] sm:$0xf]
        %v285 = vld [vmem:[%s166 + $0x174] sm:$0xf]
        %v286 = vld [vmem:[%s166 + $0x178] sm:$0xf]
        %v287 = vld [vmem:[%s166 + $0x17c] sm:$0xf]
        %v288 = vld [vmem:[%s166 + $0x180] sm:$0xf]
        %v289 = vld [vmem:[%s166 + $0x184] sm:$0xf]
        %v290 = vld [vmem:[%s166 + $0x188] sm:$0xf]
        %v291 = vld [vmem:[%s166 + $0x18c] sm:$0xf]
        %v292 = vld [vmem:[%s166 + $0x190] sm:$0xf]
        %v293 = vld [vmem:[%s166 + $0x194] sm:$0xf]
        %v294 = vld [vmem:[%s166 + $0x198] sm:$0xf]
        %v295 = vld [vmem:[%s166 + $0x19c] sm:$0xf]
        %v296 = vld [vmem:[%s166 + $0x1a0] sm:$0xf]
        %v297 = vld [vmem:[%s166 + $0x1a4] sm:$0xf]
        %v298 = vld [vmem:[%s166 + $0x1a8] sm:$0xf]
        %v299 = vld [vmem:[%s166 + $0x1ac] sm:$0xf]
        %v300 = vld [vmem:[%s166 + $0x1b0] sm:$0xf]
        %v301 = vld [vmem:[%s166 + $0x1b4] sm:$0xf]
        %v302 = vld [vmem:[%s166 + $0x1b8] sm:$0xf]
        %v303 = vld [vmem:[%s166 + $0x1bc] sm:$0xf]
        %v304 = vld [vmem:[%s166 + $0x1c0] sm:$0xf]
        %v305 = vld [vmem:[%s166 + $0x1c4] sm:$0xf]
        %v306 = vld [vmem:[%s166 + $0x1c8] sm:$0xf]
        %v307 = vld [vmem:[%s166 + $0x1cc] sm:$0xf]
        %v308 = vld [vmem:[%s166 + $0x1d0] sm:$0xf]
        %v309 = vld [vmem:[%s166 + $0x1d4] sm:$0xf]
        %v310 = vld [vmem:[%s166 + $0x1d8] sm:$0xf]
        %v311 = vld [vmem:[%s166 + $0x1dc] sm:$0xf]
        %v312 = vld [vmem:[%s166 + $0x1e0] sm:$0xf]
        %v313 = vld [vmem:[%s166 + $0x1e4] sm:$0xf]
        %v314 = vld [vmem:[%s166 + $0x1e8] sm:$0xf]
        %v315 = vld [vmem:[%s166 + $0x1ec] sm:$0xf]
        %v316 = vld [vmem:[%s166 + $0x1f0] sm:$0xf]
        %v317 = vld [vmem:[%s166 + $0x1f4] sm:$0xf]
        %v318 = vld [vmem:[%s166 + $0x1f8] sm:$0xf]
        %v319 = vld [vmem:[%s166 + $0x1fc] sm:$0xf]
        %v320 = vld [vmem:[%s166 + $0x200] sm:$0xf]
        %v321 = vld [vmem:[%s166 + $0x204] sm:$0xf]
        %v322 = vld [vmem:[%s166 + $0x208] sm:$0xf]
        %v323 = vld [vmem:[%s166 + $0x20c] sm:$0xf]
        %v324 = vld [vmem:[%s166 + $0x210] sm:$0xf]
        %v325 = vld [vmem:[%s166 + $0x214] sm:$0xf]
        %v326 = vld [vmem:[%s166 + $0x218] sm:$0xf]
        %v327 = vld [vmem:[%s166 + $0x21c] sm:$0xf]
        %v328 = vld [vmem:[%s166 + $0x220] sm:$0xf]
        %v329 = vld [vmem:[%s166 + $0x224] sm:$0xf]
        %v330 = vld [vmem:[%s166 + $0x228] sm:$0xf]
        %v331 = vld [vmem:[%s166 + $0x22c] sm:$0xf]
        %v332 = vld [vmem:[%s166 + $0x230] sm:$0xf]
        %v333 = vld [vmem:[%s166 + $0x234] sm:$0xf]
        %v334 = vld [vmem:[%s166 + $0x238] sm:$0xf]
        %v335 = vld [vmem:[%s166 + $0x23c] sm:$0xf]
        %v336 = vld [vmem:[%s166 + $0x240] sm:$0xf]
        %v337 = vld [vmem:[%s166 + $0x244] sm:$0xf]
        %v338 = vld [vmem:[%s166 + $0x248] sm:$0xf]
        %v339 = vld [vmem:[%s166 + $0x24c] sm:$0xf]
        %v340 = vld [vmem:[%s166 + $0x250] sm:$0xf]
        %v341 = vld [vmem:[%s166 + $0x254] sm:$0xf]
        %v342 = vld [vmem:[%s166 + $0x258] sm:$0xf]
        %v343 = vld [vmem:[%s166 + $0x25c] sm:$0xf]
        %v344 = vld [vmem:[%s166 + $0x260] sm:$0xf]
        %v345 = vld [vmem:[%s166 + $0x264] sm:$0xf]
        %v346 = vld [vmem:[%s166 + $0x268] sm:$0xf]
        %v347 = vld [vmem:[%s166 + $0x26c] sm:$0xf]
        %v348 = vld [vmem:[%s166 + $0x270] sm:$0xf]
        %v349 = vld [vmem:[%s166 + $0x274] sm:$0xf]
        %v350 = vld [vmem:[%s166 + $0x278] sm:$0xf]
        %v351 = vld [vmem:[%s166 + $0x27c] sm:$0xf]
        %v352 = vld [vmem:[%s166 + $0x280] sm:$0xf]
        %v353 = vld [vmem:[%s166 + $0x284] sm:$0xf]
        %v354 = vld [vmem:[%s166 + $0x288] sm:$0xf]
        %v355 = vld [vmem:[%s166 + $0x28c] sm:$0xf]
        %v356 = vld [vmem:[%s166 + $0x290] sm:$0xf]
        %v357 = vld [vmem:[%s166 + $0x294] sm:$0xf]
        %v358 = vld [vmem:[%s166 + $0x298] sm:$0xf]
        %v359 = vld [vmem:[%s166 + $0x29c] sm:$0xf]
        %v360 = vld [vmem:[%s166 + $0x2a0] sm:$0xf]
        %v361 = vld [vmem:[%s166 + $0x2a4] sm:$0xf]
        %v362 = vld [vmem:[%s166 + $0x2a8] sm:$0xf]
        %v363 = vld [vmem:[%s166 + $0x2ac] sm:$0xf]
        %v364 = vld [vmem:[%s166 + $0x2b0] sm:$0xf]
        %v365 = vld [vmem:[%s166 + $0x2b4] sm:$0xf]
        %v366 = vld [vmem:[%s166 + $0x2b8] sm:$0xf]
        %v367 = vld [vmem:[%s166 + $0x2bc] sm:$0xf]
        %v368 = vld [vmem:[%s166 + $0x2c0] sm:$0xf]
        %v369 = vld [vmem:[%s166 + $0x2c4] sm:$0xf]
        %v370 = vld [vmem:[%s166 + $0x2c8] sm:$0xf]
        %v371 = vld [vmem:[%s166 + $0x2cc] sm:$0xf]
        %v372 = vld [vmem:[%s166 + $0x2d0] sm:$0xf]
        %v373 = vld [vmem:[%s166 + $0x2d4] sm:$0xf]
        %v374 = vld [vmem:[%s166 + $0x2d8] sm:$0xf]
        %v375 = vld [vmem:[%s166 + $0x2dc] sm:$0xf]
        %v376 = vld [vmem:[%s166 + $0x2e0] sm:$0xf]
        %v377 = vld [vmem:[%s166 + $0x2e4] sm:$0xf]
        %v378 = vld [vmem:[%s166 + $0x2e8] sm:$0xf]
        %v379 = vld [vmem:[%s166 + $0x2ec] sm:$0xf]
        %v380 = vld [vmem:[%s166 + $0x2f0] sm:$0xf]
        %v381 = vld [vmem:[%s166 + $0x2f4] sm:$0xf]
        %v382 = vld [vmem:[%s166 + $0x2f8] sm:$0xf]
        %v383 = vld [vmem:[%s166 + $0x2fc] sm:$0xf]
        %v384 = vld [vmem:[%s166 + $0x300] sm:$0xf]
        %v385 = vld [vmem:[%s166 + $0x304] sm:$0xf]
        %v386 = vld [vmem:[%s166 + $0x308] sm:$0xf]
        %v387 = vld [vmem:[%s166 + $0x30c] sm:$0xf]
        %v388 = vld [vmem:[%s166 + $0x310] sm:$0xf]
        %v389 = vld [vmem:[%s166 + $0x314] sm:$0xf]
        %v390 = vld [vmem:[%s166 + $0x318] sm:$0xf]
        %v391 = vld [vmem:[%s166 + $0x31c] sm:$0xf]
        %v392 = vld [vmem:[%s166 + $0x320] sm:$0xf]
        %v393 = vld [vmem:[%s166 + $0x324] sm:$0xf]
        %v394 = vld [vmem:[%s166 + $0x328] sm:$0xf]
        %v395 = vld [vmem:[%s166 + $0x32c] sm:$0xf]
        %v396 = vld [vmem:[%s166 + $0x330] sm:$0xf]
        %v397 = vld [vmem:[%s166 + $0x334] sm:$0xf]
        %v398 = vld [vmem:[%s166 + $0x338] sm:$0xf]
        %v399 = vld [vmem:[%s166 + $0x33c] sm:$0xf]
        %v400 = vld [vmem:[%s166 + $0x340] sm:$0xf]
        %v401 = vld [vmem:[%s166 + $0x344] sm:$0xf]
        %v402 = vld [vmem:[%s166 + $0x348] sm:$0xf]
        %v403 = vld [vmem:[%s166 + $0x34c] sm:$0xf]
        %v404 = vld [vmem:[%s166 + $0x350] sm:$0xf]
        %v405 = vld [vmem:[%s166 + $0x354] sm:$0xf]
        %v406 = vld [vmem:[%s166 + $0x358] sm:$0xf]
        %v407 = vld [vmem:[%s166 + $0x35c] sm:$0xf]
        %v408 = vld [vmem:[%s166 + $0x360] sm:$0xf]
        %v409 = vld [vmem:[%s166 + $0x364] sm:$0xf]
        %v410 = vld [vmem:[%s166 + $0x368] sm:$0xf]
        %v411 = vld [vmem:[%s166 + $0x36c] sm:$0xf]
        %v412 = vld [vmem:[%s166 + $0x370] sm:$0xf]
        %v413 = vld [vmem:[%s166 + $0x374] sm:$0xf]
        %v414 = vld [vmem:[%s166 + $0x378] sm:$0xf]
        %v415 = vld [vmem:[%s166 + $0x37c] sm:$0xf]
        %v416 = vld [vmem:[%s166 + $0x380] sm:$0xf]
        %v417 = vld [vmem:[%s166 + $0x384] sm:$0xf]
        %v418 = vld [vmem:[%s166 + $0x388] sm:$0xf]
        %v419 = vld [vmem:[%s166 + $0x38c] sm:$0xf]
        %v420 = vld [vmem:[%s166 + $0x390] sm:$0xf]
        %v421 = vld [vmem:[%s166 + $0x394] sm:$0xf]
        %v422 = vld [vmem:[%s166 + $0x398] sm:$0xf]
        %v423 = vld [vmem:[%s166 + $0x39c] sm:$0xf]
        %v424 = vld [vmem:[%s166 + $0x3a0] sm:$0xf]
        %v425 = vld [vmem:[%s166 + $0x3a4] sm:$0xf]
        %v426 = vld [vmem:[%s166 + $0x3a8] sm:$0xf]
        %v427 = vld [vmem:[%s166 + $0x3ac] sm:$0xf]
        %v428 = vld [vmem:[%s166 + $0x3b0] sm:$0xf]
        %v429 = vld [vmem:[%s166 + $0x3b4] sm:$0xf]
        %v430 = vld [vmem:[%s166 + $0x3b8] sm:$0xf]
        %v431 = vld [vmem:[%s166 + $0x3bc] sm:$0xf]
        %v432 = vld [vmem:[%s166 + $0x3c0] sm:$0xf]
        %v433 = vld [vmem:[%s166 + $0x3c4] sm:$0xf]
        %v434 = vld [vmem:[%s166 + $0x3c8] sm:$0xf]
        %v435 = vld [vmem:[%s166 + $0x3cc] sm:$0xf]
        %v436 = vld [vmem:[%s166 + $0x3d0] sm:$0xf]
        %v437 = vld [vmem:[%s166 + $0x3d4] sm:$0xf]
        %v438 = vld [vmem:[%s166 + $0x3d8] sm:$0xf]
        %v439 = vld [vmem:[%s166 + $0x3dc] sm:$0xf]
        %v440 = vld [vmem:[%s166 + $0x3e0] sm:$0xf]
        %v441 = vld [vmem:[%s166 + $0x3e4] sm:$0xf]
        %v442 = vld [vmem:[%s166 + $0x3e8] sm:$0xf]
        %v443 = vld [vmem:[%s166 + $0x3ec] sm:$0xf]
        %v444 = vld [vmem:[%s1] sm:$0xf]
        %v445 = vld [vmem:[%s1 + $0x4] sm:$0xf]
        %v446 = vld [vmem:[%s1 + $0x8] sm:$0xf]
        %v447 = vld [vmem:[%s1 + $0xc] sm:$0xf]
        %v448 = vld [vmem:[%s1 + $0x10] sm:$0xf]
        %v449 = vld [vmem:[%s1 + $0x14] sm:$0xf]
        %v450 = vld [vmem:[%s1 + $0x18] sm:$0x1]
        %v451 = vld [vmem:[%s2] sm:$0x1]
        %v453 = vlaneseq
        %v454 = vshrl.u32 %v453, 7
        %v455 = vsub.s32 0, %v454
        %v456 = vrot.slane %v451, %v455
        %v710 = vunpack.c.l.b16 %v192
        %v711 = vunpack.c.l.b16 %v193
        %v712 = vunpack.c.l.b16 %v194
        %v713 = vunpack.c.l.b16 %v195
        %v714 = vunpack.c.l.b16 %v196
        %v715 = vunpack.c.l.b16 %v197
        %v716 = vunpack.c.l.b16 %v198
        %v717 = vunpack.c.l.b16 %v199
        %v718 = vunpack.c.l.b16 %v200
        %v719 = vunpack.c.l.b16 %v201
        %v720 = vunpack.c.l.b16 %v202
        %v721 = vunpack.c.l.b16 %v203
        %v722 = vunpack.c.l.b16 %v204
        %v723 = vunpack.c.l.b16 %v205
        %v724 = vunpack.c.l.b16 %v206
        %v725 = vunpack.c.l.b16 %v207
        %v726 = vunpack.c.l.b16 %v208
        %v727 = vunpack.c.l.b16 %v209
        %v728 = vunpack.c.l.b16 %v210
        %v729 = vunpack.c.l.b16 %v211
        %v730 = vunpack.c.l.b16 %v212
        %v731 = vunpack.c.l.b16 %v213
        %v732 = vunpack.c.l.b16 %v214
        %v733 = vunpack.c.l.b16 %v215
        %v734 = vunpack.c.l.b16 %v216
        %v735 = vunpack.c.l.b16 %v217
        %v736 = vunpack.c.l.b16 %v218
        %v737 = vunpack.c.l.b16 %v219
        %v738 = vunpack.c.l.b16 %v220
        %v739 = vunpack.c.l.b16 %v221
        %v740 = vunpack.c.l.b16 %v222
        %v741 = vunpack.c.l.b16 %v223
        %v742 = vunpack.c.l.b16 %v224
        %v743 = vunpack.c.l.b16 %v225
        %v744 = vunpack.c.l.b16 %v226
        %v745 = vunpack.c.l.b16 %v227
        %v746 = vunpack.c.l.b16 %v228
        %v747 = vunpack.c.l.b16 %v229
        %v748 = vunpack.c.l.b16 %v230
        %v749 = vunpack.c.l.b16 %v231
        %v750 = vunpack.c.l.b16 %v232
        %v751 = vunpack.c.l.b16 %v233
        %v752 = vunpack.c.l.b16 %v234
        %v753 = vunpack.c.l.b16 %v235
        %v754 = vunpack.c.l.b16 %v236
        %v755 = vunpack.c.l.b16 %v237
        %v756 = vunpack.c.l.b16 %v238
        %v757 = vunpack.c.l.b16 %v239
        %v758 = vunpack.c.l.b16 %v240
        %v759 = vunpack.c.l.b16 %v241
        %v760 = vunpack.c.l.b16 %v242
        %v761 = vunpack.c.l.b16 %v243
        %v762 = vunpack.c.l.b16 %v244
        %v763 = vunpack.c.l.b16 %v245
        %v764 = vunpack.c.l.b16 %v246
        %v765 = vunpack.c.l.b16 %v247
        %v766 = vunpack.c.l.b16 %v248
        %v767 = vunpack.c.l.b16 %v249
        %v768 = vunpack.c.l.b16 %v250
        %v769 = vunpack.c.l.b16 %v251
        %v770 = vunpack.c.l.b16 %v252
        %v771 = vunpack.c.l.b16 %v253
        %v772 = vunpack.c.l.b16 %v254
        %v773 = vunpack.c.l.b16 %v255
        %v774 = vunpack.c.l.b16 %v256
        %v775 = vunpack.c.l.b16 %v257
        %v776 = vunpack.c.l.b16 %v258
        %v777 = vunpack.c.l.b16 %v259
        %v778 = vunpack.c.l.b16 %v260
        %v779 = vunpack.c.l.b16 %v261
        %v780 = vunpack.c.l.b16 %v262
        %v781 = vunpack.c.l.b16 %v263
        %v782 = vunpack.c.l.b16 %v264
        %v783 = vunpack.c.l.b16 %v265
        %v784 = vunpack.c.l.b16 %v266
        %v785 = vunpack.c.l.b16 %v267
        %v786 = vunpack.c.l.b16 %v268
        %v787 = vunpack.c.l.b16 %v269
        %v788 = vunpack.c.l.b16 %v270
        %v789 = vunpack.c.l.b16 %v271
        %v790 = vunpack.c.l.b16 %v272
        %v791 = vunpack.c.l.b16 %v273
        %v792 = vunpack.c.l.b16 %v274
        %v793 = vunpack.c.l.b16 %v275
        %v794 = vunpack.c.l.b16 %v276
        %v795 = vunpack.c.l.b16 %v277
        %v796 = vunpack.c.l.b16 %v278
        %v797 = vunpack.c.l.b16 %v279
        %v798 = vunpack.c.l.b16 %v280
        %v799 = vunpack.c.l.b16 %v281
        %v800 = vunpack.c.l.b16 %v282
        %v801 = vunpack.c.l.b16 %v283
        %v802 = vunpack.c.l.b16 %v284
        %v803 = vunpack.c.l.b16 %v285
        %v804 = vunpack.c.l.b16 %v286
        %v805 = vunpack.c.l.b16 %v287
        %v806 = vunpack.c.l.b16 %v288
        %v807 = vunpack.c.l.b16 %v289
        %v808 = vunpack.c.l.b16 %v290
        %v809 = vunpack.c.l.b16 %v291
        %v810 = vunpack.c.l.b16 %v292
        %v811 = vunpack.c.l.b16 %v293
        %v812 = vunpack.c.l.b16 %v294
        %v813 = vunpack.c.l.b16 %v295
        %v814 = vunpack.c.l.b16 %v296
        %v815 = vunpack.c.l.b16 %v297
        %v816 = vunpack.c.l.b16 %v298
        %v817 = vunpack.c.l.b16 %v299
        %v818 = vunpack.c.l.b16 %v300
        %v819 = vunpack.c.l.b16 %v301
        %v820 = vunpack.c.l.b16 %v302
        %v821 = vunpack.c.l.b16 %v303
        %v822 = vunpack.c.l.b16 %v304
        %v823 = vunpack.c.l.b16 %v305
        %v824 = vunpack.c.l.b16 %v306
        %v825 = vunpack.c.l.b16 %v307
        %v826 = vunpack.c.l.b16 %v308
        %v827 = vunpack.c.l.b16 %v309
        %v828 = vunpack.c.l.b16 %v310
        %v829 = vunpack.c.l.b16 %v311
        %v830 = vunpack.c.l.b16 %v312
        %v831 = vunpack.c.l.b16 %v313
        %v832 = vunpack.c.l.b16 %v314
        %v833 = vunpack.c.l.b16 %v315
        %v834 = vunpack.c.l.b16 %v316
        %v835 = vunpack.c.l.b16 %v317
        %v836 = vunpack.c.l.b16 %v318
        %v837 = vunpack.c.l.b16 %v319
        %v838 = vunpack.c.l.b16 %v320
        %v839 = vunpack.c.l.b16 %v321
        %v840 = vunpack.c.l.b16 %v322
        %v841 = vunpack.c.l.b16 %v323
        %v842 = vunpack.c.l.b16 %v324
        %v843 = vunpack.c.l.b16 %v325
        %v844 = vunpack.c.l.b16 %v326
        %v845 = vunpack.c.l.b16 %v327
        %v846 = vunpack.c.l.b16 %v328
        %v847 = vunpack.c.l.b16 %v329
        %v848 = vunpack.c.l.b16 %v330
        %v849 = vunpack.c.l.b16 %v331
        %v850 = vunpack.c.l.b16 %v332
        %v851 = vunpack.c.l.b16 %v333
        %v852 = vunpack.c.l.b16 %v334
        %v853 = vunpack.c.l.b16 %v335
        %v854 = vunpack.c.l.b16 %v336
        %v855 = vunpack.c.l.b16 %v337
        %v856 = vunpack.c.l.b16 %v338
        %v857 = vunpack.c.l.b16 %v339
        %v858 = vunpack.c.l.b16 %v340
        %v859 = vunpack.c.l.b16 %v341
        %v860 = vunpack.c.l.b16 %v342
        %v861 = vunpack.c.l.b16 %v343
        %v862 = vunpack.c.l.b16 %v344
        %v863 = vunpack.c.l.b16 %v345
        %v864 = vunpack.c.l.b16 %v346
        %v865 = vunpack.c.l.b16 %v347
        %v866 = vunpack.c.l.b16 %v348
        %v867 = vunpack.c.l.b16 %v349
        %v868 = vunpack.c.l.b16 %v350
        %v869 = vunpack.c.l.b16 %v351
        %v870 = vunpack.c.l.b16 %v352
        %v871 = vunpack.c.l.b16 %v353
        %v872 = vunpack.c.l.b16 %v354
        %v873 = vunpack.c.l.b16 %v355
        %v874 = vunpack.c.l.b16 %v356
        %v875 = vunpack.c.l.b16 %v357
        %v876 = vunpack.c.l.b16 %v358
        %v877 = vunpack.c.l.b16 %v359
        %v878 = vunpack.c.l.b16 %v360
        %v879 = vunpack.c.l.b16 %v361
        %v880 = vunpack.c.l.b16 %v362
        %v881 = vunpack.c.l.b16 %v363
        %v882 = vunpack.c.l.b16 %v364
        %v883 = vunpack.c.l.b16 %v365
        %v884 = vunpack.c.l.b16 %v366
        %v885 = vunpack.c.l.b16 %v367
        %v886 = vunpack.c.l.b16 %v368
        %v887 = vunpack.c.l.b16 %v369
        %v888 = vunpack.c.l.b16 %v370
        %v889 = vunpack.c.l.b16 %v371
        %v890 = vunpack.c.l.b16 %v372
        %v891 = vunpack.c.l.b16 %v373
        %v892 = vunpack.c.l.b16 %v374
        %v893 = vunpack.c.l.b16 %v375
        %v894 = vunpack.c.l.b16 %v376
        %v895 = vunpack.c.l.b16 %v377
        %v896 = vunpack.c.l.b16 %v378
        %v897 = vunpack.c.l.b16 %v379
        %v898 = vunpack.c.l.b16 %v380
        %v899 = vunpack.c.l.b16 %v381
        %v900 = vunpack.c.l.b16 %v382
        %v901 = vunpack.c.l.b16 %v383
        %v902 = vunpack.c.l.b16 %v384
        %v903 = vunpack.c.l.b16 %v385
        %v904 = vunpack.c.l.b16 %v386
        %v905 = vunpack.c.l.b16 %v387
        %v906 = vunpack.c.l.b16 %v388
        %v907 = vunpack.c.l.b16 %v389
        %v908 = vunpack.c.l.b16 %v390
        %v909 = vunpack.c.l.b16 %v391
        %v910 = vunpack.c.l.b16 %v392
        %v911 = vunpack.c.l.b16 %v393
        %v912 = vunpack.c.l.b16 %v394
        %v913 = vunpack.c.l.b16 %v395
        %v914 = vunpack.c.l.b16 %v396
        %v915 = vunpack.c.l.b16 %v397
        %v916 = vunpack.c.l.b16 %v398
        %v917 = vunpack.c.l.b16 %v399
        %v918 = vunpack.c.l.b16 %v400
        %v919 = vunpack.c.l.b16 %v401
        %v920 = vunpack.c.l.b16 %v402
        %v921 = vunpack.c.l.b16 %v403
        %v922 = vunpack.c.l.b16 %v404
        %v923 = vunpack.c.l.b16 %v405
        %v924 = vunpack.c.l.b16 %v406
        %v925 = vunpack.c.l.b16 %v407
        %v926 = vunpack.c.l.b16 %v408
        %v927 = vunpack.c.l.b16 %v409
        %v928 = vunpack.c.l.b16 %v410
        %v929 = vunpack.c.l.b16 %v411
        %v930 = vunpack.c.l.b16 %v412
        %v931 = vunpack.c.l.b16 %v413
        %v932 = vunpack.c.l.b16 %v414
        %v933 = vunpack.c.l.b16 %v415
        %v934 = vunpack.c.l.b16 %v416
        %v935 = vunpack.c.l.b16 %v417
        %v936 = vunpack.c.l.b16 %v418
        %v937 = vunpack.c.l.b16 %v419
        %v938 = vunpack.c.l.b16 %v420
        %v939 = vunpack.c.l.b16 %v421
        %v940 = vunpack.c.l.b16 %v422
        %v941 = vunpack.c.l.b16 %v423
        %v942 = vunpack.c.l.b16 %v424
        %v943 = vunpack.c.l.b16 %v425
        %v944 = vunpack.c.l.b16 %v426
        %v945 = vunpack.c.l.b16 %v427
        %v946 = vunpack.c.l.b16 %v428
        %v947 = vunpack.c.l.b16 %v429
        %v948 = vunpack.c.l.b16 %v430
        %v949 = vunpack.c.l.b16 %v431
        %v950 = vunpack.c.l.b16 %v432
        %v951 = vunpack.c.l.b16 %v433
        %v952 = vunpack.c.l.b16 %v434
        %v953 = vunpack.c.l.b16 %v435
        %v954 = vunpack.c.l.b16 %v436
        %v955 = vunpack.c.l.b16 %v437
        %v956 = vunpack.c.l.b16 %v438
        %v957 = vunpack.c.l.b16 %v439
        %v958 = vunpack.c.l.b16 %v440
        %v959 = vunpack.c.l.b16 %v441
        %v960 = vunpack.c.l.b16 %v442
        %v961 = vunpack.c.l.b16 %v443
        %v962 = vpack.c.b16 %v711, %v710
        %v963 = vpack.c.b16 %v713, %v712
        %v964 = vpack.c.b16 %v715, %v714
        %v965 = vpack.c.b16 %v717, %v716
        %v966 = vpack.c.b16 %v719, %v718
        %v967 = vpack.c.b16 %v721, %v720
        %v968 = vpack.c.b16 %v723, %v722
        %v969 = vpack.c.b16 %v725, %v724
        %v970 = vpack.c.b16 %v727, %v726
        %v971 = vpack.c.b16 %v729, %v728
        %v972 = vpack.c.b16 %v731, %v730
        %v973 = vpack.c.b16 %v733, %v732
        %v974 = vpack.c.b16 %v735, %v734
        %v975 = vpack.c.b16 %v737, %v736
        %v976 = vpack.c.b16 %v739, %v738
        %v977 = vpack.c.b16 %v741, %v740
        %v978 = vpack.c.b16 %v743, %v742
        %v979 = vpack.c.b16 %v745, %v744
        %v980 = vpack.c.b16 %v747, %v746
        %v981 = vpack.c.b16 %v749, %v748
        %v982 = vpack.c.b16 %v751, %v750
        %v983 = vpack.c.b16 %v753, %v752
        %v984 = vpack.c.b16 %v755, %v754
        %v985 = vpack.c.b16 %v757, %v756
        %v986 = vpack.c.b16 %v759, %v758
        %v987 = vpack.c.b16 %v761, %v760
        %v988 = vpack.c.b16 %v763, %v762
        %v989 = vpack.c.b16 %v765, %v764
        %v990 = vpack.c.b16 %v767, %v766
        %v991 = vpack.c.b16 %v769, %v768
        %v992 = vpack.c.b16 %v771, %v770
        %v993 = vpack.c.b16 %v773, %v772
        %v994 = vpack.c.b16 %v775, %v774
        %v995 = vpack.c.b16 %v777, %v776
        %v996 = vpack.c.b16 %v779, %v778
        %v997 = vpack.c.b16 %v781, %v780
        %v998 = vpack.c.b16 %v783, %v782
        %v999 = vpack.c.b16 %v785, %v784
        %v1000 = vpack.c.b16 %v787, %v786
        %v1001 = vpack.c.b16 %v789, %v788
        %v1002 = vpack.c.b16 %v791, %v790
        %v1003 = vpack.c.b16 %v793, %v792
        %v1004 = vpack.c.b16 %v795, %v794
        %v1005 = vpack.c.b16 %v797, %v796
        %v1006 = vpack.c.b16 %v799, %v798
        %v1007 = vpack.c.b16 %v801, %v800
        %v1008 = vpack.c.b16 %v803, %v802
        %v1009 = vpack.c.b16 %v805, %v804
        %v1010 = vpack.c.b16 %v807, %v806
        %v1011 = vpack.c.b16 %v809, %v808
        %v1012 = vpack.c.b16 %v811, %v810
        %v1013 = vpack.c.b16 %v813, %v812
        %v1014 = vpack.c.b16 %v815, %v814
        %v1015 = vpack.c.b16 %v817, %v816
        %v1016 = vpack.c.b16 %v819, %v818
        %v1017 = vpack.c.b16 %v821, %v820
        %v1018 = vpack.c.b16 %v823, %v822
        %v1019 = vpack.c.b16 %v825, %v824
        %v1020 = vpack.c.b16 %v827, %v826
        %v1021 = vpack.c.b16 %v829, %v828
        %v1022 = vpack.c.b16 %v831, %v830
        %v1023 = vpack.c.b16 %v833, %v832
        %v1024 = vpack.c.b16 %v835, %v834
        %v1025 = vpack.c.b16 %v837, %v836
        %v1026 = vpack.c.b16 %v839, %v838
        %v1027 = vpack.c.b16 %v841, %v840
        %v1028 = vpack.c.b16 %v843, %v842
        %v1029 = vpack.c.b16 %v845, %v844
        %v1030 = vpack.c.b16 %v847, %v846
        %v1031 = vpack.c.b16 %v849, %v848
        %v1032 = vpack.c.b16 %v851, %v850
        %v1033 = vpack.c.b16 %v853, %v852
        %v1034 = vpack.c.b16 %v855, %v854
        %v1035 = vpack.c.b16 %v857, %v856
        %v1036 = vpack.c.b16 %v859, %v858
        %v1037 = vpack.c.b16 %v861, %v860
        %v1038 = vpack.c.b16 %v863, %v862
        %v1039 = vpack.c.b16 %v865, %v864
        %v1040 = vpack.c.b16 %v867, %v866
        %v1041 = vpack.c.b16 %v869, %v868
        %v1042 = vpack.c.b16 %v871, %v870
        %v1043 = vpack.c.b16 %v873, %v872
        %v1044 = vpack.c.b16 %v875, %v874
        %v1045 = vpack.c.b16 %v877, %v876
        %v1046 = vpack.c.b16 %v879, %v878
        %v1047 = vpack.c.b16 %v881, %v880
        %v1048 = vpack.c.b16 %v883, %v882
        %v1049 = vpack.c.b16 %v885, %v884
        %v1050 = vpack.c.b16 %v887, %v886
        %v1051 = vpack.c.b16 %v889, %v888
        %v1052 = vpack.c.b16 %v891, %v890
        %v1053 = vpack.c.b16 %v893, %v892
        %v1054 = vpack.c.b16 %v895, %v894
        %v1055 = vpack.c.b16 %v897, %v896
        %v1056 = vpack.c.b16 %v899, %v898
        %v1057 = vpack.c.b16 %v901, %v900
        %v1058 = vpack.c.b16 %v903, %v902
        %v1059 = vpack.c.b16 %v905, %v904
        %v1060 = vpack.c.b16 %v907, %v906
        %v1061 = vpack.c.b16 %v909, %v908
        %v1062 = vpack.c.b16 %v911, %v910
        %v1063 = vpack.c.b16 %v913, %v912
        %v1064 = vpack.c.b16 %v915, %v914
        %v1065 = vpack.c.b16 %v917, %v916
        %v1066 = vpack.c.b16 %v919, %v918
        %v1067 = vpack.c.b16 %v921, %v920
        %v1068 = vpack.c.b16 %v923, %v922
        %v1069 = vpack.c.b16 %v925, %v924
        %v1070 = vpack.c.b16 %v927, %v926
        %v1071 = vpack.c.b16 %v929, %v928
        %v1072 = vpack.c.b16 %v931, %v930
        %v1073 = vpack.c.b16 %v933, %v932
        %v1074 = vpack.c.b16 %v935, %v934
        %v1075 = vpack.c.b16 %v937, %v936
        %v1076 = vpack.c.b16 %v939, %v938
        %v1077 = vpack.c.b16 %v941, %v940
        %v1078 = vpack.c.b16 %v943, %v942
        %v1079 = vpack.c.b16 %v945, %v944
        %v1080 = vpack.c.b16 %v947, %v946
        %v1081 = vpack.c.b16 %v949, %v948
        %v1082 = vpack.c.b16 %v951, %v950
        %v1083 = vpack.c.b16 %v953, %v952
        %v1084 = vpack.c.b16 %v955, %v954
        %v1085 = vpack.c.b16 %v957, %v956
        %v1086 = vpack.c.b16 %v959, %v958
        %v1087 = vpack.c.b16 %v961, %v960
        %v1095 = vunpack.c.l.b16 %v444
        %v1096 = vunpack.c.l.b16 %v445
        %v1097 = vunpack.c.l.b16 %v446
        %v1098 = vunpack.c.l.b16 %v447
        %v1099 = vunpack.c.l.b16 %v448
        %v1100 = vunpack.c.l.b16 %v449
        %v1101 = vunpack.c.l.b16 %v450
        %v1102 = vpack.c.b16 %v1096, %v1095
        %v1103 = vpack.c.b16 %v1098, %v1097
        %v1104 = vpack.c.b16 %v1100, %v1099
        %v1105 = vpack.c.b16 %v1101, %v1101
        %vm1109 = vcmask 400384
        %v1111 = vsel %vm1109, %v962, 0
        %v1114 = vsel %vm1109, %v963, 0
        %v1117 = vsel %vm1109, %v964, 0
        %v1120 = vsel %vm1109, %v965, 0
        %v1123 = vsel %vm1109, %v966, 0
        %v1126 = vsel %vm1109, %v967, 0
        %v1129 = vsel %vm1109, %v968, 0
        %v1132 = vsel %vm1109, %v969, 0
        %v1135 = vsel %vm1109, %v970, 0
        %v1138 = vsel %vm1109, %v971, 0
        %v1141 = vsel %vm1109, %v972, 0
        %v1144 = vsel %vm1109, %v973, 0
        %v1147 = vsel %vm1109, %v974, 0
        %v1150 = vsel %vm1109, %v975, 0
        %v1153 = vsel %vm1109, %v976, 0
        %v1156 = vsel %vm1109, %v977, 0
        %v1159 = vsel %vm1109, %v978, 0
        %v1162 = vsel %vm1109, %v979, 0
        %v1165 = vsel %vm1109, %v980, 0
        %v1168 = vsel %vm1109, %v981, 0
        %v1171 = vsel %vm1109, %v982, 0
        %v1174 = vsel %vm1109, %v983, 0
        %v1177 = vsel %vm1109, %v984, 0
        %v1180 = vsel %vm1109, %v985, 0
        %v1183 = vsel %vm1109, %v986, 0
        %v1186 = vsel %vm1109, %v987, 0
        %v1189 = vsel %vm1109, %v988, 0
        %v1192 = vsel %vm1109, %v989, 0
        %v1195 = vsel %vm1109, %v990, 0
        %v1198 = vsel %vm1109, %v991, 0
        %v1201 = vsel %vm1109, %v992, 0
        %v1204 = vsel %vm1109, %v993, 0
        %v1207 = vsel %vm1109, %v994, 0
        %v1210 = vsel %vm1109, %v995, 0
        %v1213 = vsel %vm1109, %v996, 0
        %v1216 = vsel %vm1109, %v997, 0
        %v1219 = vsel %vm1109, %v998, 0
        %v1222 = vsel %vm1109, %v999, 0
        %v1225 = vsel %vm1109, %v1000, 0
        %v1228 = vsel %vm1109, %v1001, 0
        %v1231 = vsel %vm1109, %v1002, 0
        %v1234 = vsel %vm1109, %v1003, 0
        %v1237 = vsel %vm1109, %v1004, 0
        %v1240 = vsel %vm1109, %v1005, 0
        %v1243 = vsel %vm1109, %v1006, 0
        %v1246 = vsel %vm1109, %v1007, 0
        %v1249 = vsel %vm1109, %v1008, 0
        %v1252 = vsel %vm1109, %v1009, 0
        %v1255 = vsel %vm1109, %v1010, 0
        %v1258 = vsel %vm1109, %v1011, 0
        %v1261 = vsel %vm1109, %v1012, 0
        %v1264 = vsel %vm1109, %v1013, 0
        %v1267 = vsel %vm1109, %v1014, 0
        %v1270 = vsel %vm1109, %v1015, 0
        %v1273 = vsel %vm1109, %v1016, 0
        %v1276 = vsel %vm1109, %v1017, 0
        %v1279 = vsel %vm1109, %v1018, 0
        %v1282 = vsel %vm1109, %v1019, 0
        %v1285 = vsel %vm1109, %v1020, 0
        %v1288 = vsel %vm1109, %v1021, 0
        %v1291 = vsel %vm1109, %v1022, 0
        %v1294 = vsel %vm1109, %v1023, 0
        %v1297 = vsel %vm1109, %v1024, 0
        %v1300 = vsel %vm1109, %v1025, 0
        %v1303 = vsel %vm1109, %v1026, 0
        %v1306 = vsel %vm1109, %v1027, 0
        %v1309 = vsel %vm1109, %v1028, 0
        %v1312 = vsel %vm1109, %v1029, 0
        %v1315 = vsel %vm1109, %v1030, 0
        %v1318 = vsel %vm1109, %v1031, 0
        %v1321 = vsel %vm1109, %v1032, 0
        %v1324 = vsel %vm1109, %v1033, 0
        %v1327 = vsel %vm1109, %v1034, 0
        %v1330 = vsel %vm1109, %v1035, 0
        %v1333 = vsel %vm1109, %v1036, 0
        %v1336 = vsel %vm1109, %v1037, 0
        %v1339 = vsel %vm1109, %v1038, 0
        %v1342 = vsel %vm1109, %v1039, 0
        %v1345 = vsel %vm1109, %v1040, 0
        %v1348 = vsel %vm1109, %v1041, 0
        %v1351 = vsel %vm1109, %v1042, 0
        %v1354 = vsel %vm1109, %v1043, 0
        %v1357 = vsel %vm1109, %v1044, 0
        %v1360 = vsel %vm1109, %v1045, 0
        %v1363 = vsel %vm1109, %v1046, 0
        %v1366 = vsel %vm1109, %v1047, 0
        %v1369 = vsel %vm1109, %v1048, 0
        %v1372 = vsel %vm1109, %v1049, 0
        %v1375 = vsel %vm1109, %v1050, 0
        %v1378 = vsel %vm1109, %v1051, 0
        %v1381 = vsel %vm1109, %v1052, 0
        %v1384 = vsel %vm1109, %v1053, 0
        %v1387 = vsel %vm1109, %v1054, 0
        %v1390 = vsel %vm1109, %v1055, 0
        %v1393 = vsel %vm1109, %v1056, 0
        %v1396 = vsel %vm1109, %v1057, 0
        %v1399 = vsel %vm1109, %v1058, 0
        %v1402 = vsel %vm1109, %v1059, 0
        %v1405 = vsel %vm1109, %v1060, 0
        %v1408 = vsel %vm1109, %v1061, 0
        %v1411 = vsel %vm1109, %v1062, 0
        %v1414 = vsel %vm1109, %v1063, 0
        %v1417 = vsel %vm1109, %v1064, 0
        %v1420 = vsel %vm1109, %v1065, 0
        %v1423 = vsel %vm1109, %v1066, 0
        %v1426 = vsel %vm1109, %v1067, 0
        %v1429 = vsel %vm1109, %v1068, 0
        %v1432 = vsel %vm1109, %v1069, 0
        %v1435 = vsel %vm1109, %v1070, 0
        %v1438 = vsel %vm1109, %v1071, 0
        %v1441 = vsel %vm1109, %v1072, 0
        %v1444 = vsel %vm1109, %v1073, 0
        %v1447 = vsel %vm1109, %v1074, 0
        %v1450 = vsel %vm1109, %v1075, 0
        %v1453 = vsel %vm1109, %v1076, 0
        %v1456 = vsel %vm1109, %v1077, 0
        %v1459 = vsel %vm1109, %v1078, 0
        %v1462 = vsel %vm1109, %v1079, 0
        %v1465 = vsel %vm1109, %v1080, 0
        %v1468 = vsel %vm1109, %v1081, 0
        %v1471 = vsel %vm1109, %v1082, 0
        %v1474 = vsel %vm1109, %v1083, 0
        %v1477 = vsel %vm1109, %v1084, 0
        %v1480 = vsel %vm1109, %v1085, 0
        %v1483 = vsel %vm1109, %v1086, 0
        %v1486 = vsel %vm1109, %v1087, 0
        %vm1488 = vcmask 1040384
        %v1489 = vsel 0, 4294967295, 65535
        %v1490 = vsel %vm1488, %v1489, 0
        %v1492 = vand.u32 %v1105, %v1490
        %1494 = vmatprep.subr.bf16.mxu0 0
        %1495 = vmatpush1.bf16.msra.mxu0 %v1102
        %1496 = vmatprep.subr.bf16.mxu0 0
        %1497 = vmatpush1.bf16.msra.mxu0 %v1103
        %1498 = vmatprep.subr.bf16.mxu0 0
        %1499 = vmatpush1.bf16.msra.mxu0 %v1104
        %1500 = vmatprep.subr.bf16.mxu0 0
        %1501 = vmatpush1.bf16.msra.mxu0 %v1492
        %1502 = vmatprep.subr.bf16.mxu0 0
        %1503 = vmatpush1.bf16.msra.mxu0 0
        %1504 = vmatprep.subr.bf16.mxu0 0
        %1505 = vmatpush1.bf16.msra.mxu0 0
        %1506 = vmatprep.subr.bf16.mxu0 0
        %1507 = vmatpush1.bf16.msra.mxu0 0
        %1508 = vmatprep.subr.bf16.mxu0 0
        %1509 = vmatpush1.bf16.msra.mxu0 0
        %1510 = vmatprep.subr.bf16.mxu0 0
        %1511 = vmatpush1.bf16.msra.mxu0 0
        %1512 = vmatprep.subr.bf16.mxu0 0
        %1513 = vmatpush1.bf16.msra.mxu0 0
        %1514 = vmatprep.subr.bf16.mxu0 0
        %1515 = vmatpush1.bf16.msra.mxu0 0
        %1516 = vmatprep.subr.bf16.mxu0 0
        %1517 = vmatpush1.bf16.msra.mxu0 0
        %1518 = vmatprep.subr.bf16.mxu0 0
        %1519 = vmatpush1.bf16.msra.mxu0 0
        %1520 = vmatprep.subr.bf16.mxu0 0
        %1521 = vmatpush1.bf16.msra.mxu0 0
        %1522 = vmatprep.subr.bf16.mxu0 0
        %1523 = vmatpush1.bf16.msra.mxu0 0
        %1524 = vmatprep.subr.bf16.mxu0 0
        %1525 = vmatpush1.bf16.msra.mxu0 0
        %1526 = vmatprep.mubr.bf16.mxu0 0
        %1527 = vmatmul.mubr.bf16.gmra.mrb[0].mxu0 %v1111
        %v1528 = vpop.f32.mrb[0].mxu0
        %v1529 = vadd.f32 %v456, %v1528
        %v1530 = vpop.f32.mrb[0].mxu0
        %v1531 = vpop.f32.mrb[0].mxu0
        %v1532 = vadd.f32 %v456, %v1531
        %v1533 = vpop.f32.mrb[0].mxu0
        %1534 = vmatprep.mubr.bf16.mxu0 0
        %1535 = vmatmul.mubr.bf16.gmra.mrb[0].mxu0 %v1114
        %v1536 = vpop.f32.mrb[0].mxu0
        %v1537 = vadd.f32 %v456, %v1536
        %v1538 = vpop.f32.mrb[0].mxu0
        %v1539 = vpop.f32.mrb[0].mxu0
        %v1540 = vadd.f32 %v456, %v1539
        %v1541 = vpop.f32.mrb[0].mxu0
        %1542 = vmatprep.mubr.bf16.mxu0 0
        %1543 = vmatmul.mubr.bf16.gmra.mrb[0].mxu0 %v1117
        %v1544 = vpop.f32.mrb[0].mxu0
        %v1545 = vadd.f32 %v456, %v1544
        %v1546 = vpop.f32.mrb[0].mxu0
        %v1547 = vpop.f32.mrb[0].mxu0
        %v1548 = vadd.f32 %v456, %v1547
        %v1549 = vpop.f32.mrb[0].mxu0
        %1550 = vmatprep.mubr.bf16.mxu0 0
        %1551 = vmatmul.mubr.bf16.gmra.mrb[0].mxu0 %v1120
        %v1552 = vpop.f32.mrb[0].mxu0
        %v1553 = vadd.f32 %v456, %v1552
        %v1554 = vpop.f32.mrb[0].mxu0
        %v1555 = vpop.f32.mrb[0].mxu0
        %v1556 = vadd.f32 %v456, %v1555
        %v1557 = vpop.f32.mrb[0].mxu0
        %1558 = vmatprep.mubr.bf16.mxu0 0
        %1559 = vmatmul.mubr.bf16.gmra.mrb[0].mxu0 %v1123
        %v1560 = vpop.f32.mrb[0].mxu0
        %v1561 = vadd.f32 %v456, %v1560
        %v1562 = vpop.f32.mrb[0].mxu0
        %v1563 = vpop.f32.mrb[0].mxu0
        %v1564 = vadd.f32 %v456, %v1563
        %v1565 = vpop.f32.mrb[0].mxu0
        %1566 = vmatprep.mubr.bf16.mxu0 0
        %1567 = vmatmul.mubr.bf16.gmra.mrb[0].mxu0 %v1126
        %v1568 = vpop.f32.mrb[0].mxu0
        %v1569 = vadd.f32 %v456, %v1568
        %v1570 = vpop.f32.mrb[0].mxu0
        %v1571 = vpop.f32.mrb[0].mxu0
        %v1572 = vadd.f32 %v456, %v1571
        %v1573 = vpop.f32.mrb[0].mxu0
        %1574 = vmatprep.mubr.bf16.mxu0 0
        %1575 = vmatmul.mubr.bf16.gmra.mrb[0].mxu0 %v1129
        %v1576 = vpop.f32.mrb[0].mxu0
        %v1577 = vadd.f32 %v456, %v1576
        %v1578 = vpop.f32.mrb[0].mxu0
        %v1579 = vpop.f32.mrb[0].mxu0
        %v1580 = vadd.f32 %v456, %v1579
        %v1581 = vpop.f32.mrb[0].mxu0
        %1582 = vmatprep.mubr.bf16.mxu0 0
        %1583 = vmatmul.mubr.bf16.gmra.mrb[0].mxu0 %v1132
        %v1584 = vpop.f32.mrb[0].mxu0
        %v1585 = vadd.f32 %v456, %v1584
        %v1586 = vpop.f32.mrb[0].mxu0
        %v1587 = vpop.f32.mrb[0].mxu0
        %v1588 = vadd.f32 %v456, %v1587
        %v1589 = vpop.f32.mrb[0].mxu0
        %1590 = vmatprep.mubr.bf16.mxu0 0
        %1591 = vmatmul.mubr.bf16.gmra.mrb[0].mxu0 %v1135
        %v1592 = vpop.f32.mrb[0].mxu0
        %v1593 = vadd.f32 %v456, %v1592
        %v1594 = vpop.f32.mrb[0].mxu0
        %v1595 = vpop.f32.mrb[0].mxu0
        %v1596 = vadd.f32 %v456, %v1595
        %v1597 = vpop.f32.mrb[0].mxu0
        %1598 = vmatprep.mubr.bf16.mxu0 0
        %1599 = vmatmul.mubr.bf16.gmra.mrb[0].mxu0 %v1138
        %v1600 = vpop.f32.mrb[0].mxu0
        %v1601 = vadd.f32 %v456, %v1600
        %v1602 = vpop.f32.mrb[0].mxu0
        %v1603 = vpop.f32.mrb[0].mxu0
        %v1604 = vadd.f32 %v456, %v1603
        %v1605 = vpop.f32.mrb[0].mxu0
        %1606 = vmatprep.mubr.bf16.mxu0 0
        %1607 = vmatmul.mubr.bf16.gmra.mrb[0].mxu0 %v1141
        %v1608 = vpop.f32.mrb[0].mxu0
        %v1609 = vadd.f32 %v456, %v1608
        %v1610 = vpop.f32.mrb[0].mxu0
        %v1611 = vpop.f32.mrb[0].mxu0
        %v1612 = vadd.f32 %v456, %v1611
        %v1613 = vpop.f32.mrb[0].mxu0
        %1614 = vmatprep.mubr.bf16.mxu0 0
        %1615 = vmatmul.mubr.bf16.gmra.mrb[0].mxu0 %v1144
        %v1616 = vpop.f32.mrb[0].mxu0
        %v1617 = vadd.f32 %v456, %v1616
        %v1618 = vpop.f32.mrb[0].mxu0
        %v1619 = vpop.f32.mrb[0].mxu0
        %v1620 = vadd.f32 %v456, %v1619
        %v1621 = vpop.f32.mrb[0].mxu0
        %1622 = vmatprep.mubr.bf16.mxu0 0
        %1623 = vmatmul.mubr.bf16.gmra.mrb[0].mxu0 %v1147
        %v1624 = vpop.f32.mrb[0].mxu0
        %v1625 = vadd.f32 %v456, %v1624
        %v1626 = vpop.f32.mrb[0].mxu0
        %v1627 = vpop.f32.mrb[0].mxu0
        %v1628 = vadd.f32 %v456, %v1627
        %v1629 = vpop.f32.mrb[0].mxu0
        %1630 = vmatprep.mubr.bf16.mxu0 0
        %1631 = vmatmul.mubr.bf16.gmra.mrb[0].mxu0 %v1150
        %v1632 = vpop.f32.mrb[0].mxu0
        %v1633 = vadd.f32 %v456, %v1632
        %v1634 = vpop.f32.mrb[0].mxu0
        %v1635 = vpop.f32.mrb[0].mxu0
        %v1636 = vadd.f32 %v456, %v1635
        %v1637 = vpop.f32.mrb[0].mxu0
        %1638 = vmatprep.mubr.bf16.mxu0 0
        %1639 = vmatmul.mubr.bf16.gmra.mrb[0].mxu0 %v1153
        %v1640 = vpop.f32.mrb[0].mxu0
        %v1641 = vadd.f32 %v456, %v1640
        %v1642 = vpop.f32.mrb[0].mxu0
        %v1643 = vpop.f32.mrb[0].mxu0
        %v1644 = vadd.f32 %v456, %v1643
        %v1645 = vpop.f32.mrb[0].mxu0
        %1646 = vmatprep.mubr.bf16.mxu0 0
        %1647 = vmatmul.mubr.bf16.gmra.mrb[0].mxu0 %v1156
        %v1648 = vpop.f32.mrb[0].mxu0
        %v1649 = vadd.f32 %v456, %v1648
        %v1650 = vpop.f32.mrb[0].mxu0
        %v1651 = vpop.f32.mrb[0].mxu0
        %v1652 = vadd.f32 %v456, %v1651
        %v1653 = vpop.f32.mrb[0].mxu0
        %1654 = vmatprep.mubr.bf16.mxu0 0
        %1655 = vmatmul.mubr.bf16.gmra.mrb[0].mxu0 %v1159
        %v1656 = vpop.f32.mrb[0].mxu0
        %v1657 = vadd.f32 %v456, %v1656
        %v1658 = vpop.f32.mrb[0].mxu0
        %v1659 = vpop.f32.mrb[0].mxu0
        %v1660 = vadd.f32 %v456, %v1659
        %v1661 = vpop.f32.mrb[0].mxu0
        %1662 = vmatprep.mubr.bf16.mxu0 0
        %1663 = vmatmul.mubr.bf16.gmra.mrb[0].mxu0 %v1162
        %v1664 = vpop.f32.mrb[0].mxu0
        %v1665 = vadd.f32 %v456, %v1664
        %v1666 = vpop.f32.mrb[0].mxu0
        %v1667 = vpop.f32.mrb[0].mxu0
        %v1668 = vadd.f32 %v456, %v1667
        %v1669 = vpop.f32.mrb[0].mxu0
        %1670 = vmatprep.mubr.bf16.mxu0 0
        %1671 = vmatmul.mubr.bf16.gmra.mrb[0].mxu0 %v1165
        %v1672 = vpop.f32.mrb[0].mxu0
        %v1673 = vadd.f32 %v456, %v1672
        %v1674 = vpop.f32.mrb[0].mxu0
        %v1675 = vpop.f32.mrb[0].mxu0
        %v1676 = vadd.f32 %v456, %v1675
        %v1677 = vpop.f32.mrb[0].mxu0
        %1678 = vmatprep.mubr.bf16.mxu0 0
        %1679 = vmatmul.mubr.bf16.gmra.mrb[0].mxu0 %v1168
        %v1680 = vpop.f32.mrb[0].mxu0
        %v1681 = vadd.f32 %v456, %v1680
        %v1682 = vpop.f32.mrb[0].mxu0
        %v1683 = vpop.f32.mrb[0].mxu0
        %v1684 = vadd.f32 %v456, %v1683
        %v1685 = vpop.f32.mrb[0].mxu0
        %1686 = vmatprep.mubr.bf16.mxu0 0
        %1687 = vmatmul.mubr.bf16.gmra.mrb[0].mxu0 %v1171
        %v1688 = vpop.f32.mrb[0].mxu0
        %v1689 = vadd.f32 %v456, %v1688
        %v1690 = vpop.f32.mrb[0].mxu0
        %v1691 = vpop.f32.mrb[0].mxu0
        %v1692 = vadd.f32 %v456, %v1691
        %v1693 = vpop.f32.mrb[0].mxu0
        %1694 = vmatprep.mubr.bf16.mxu0 0
        %1695 = vmatmul.mubr.bf16.gmra.mrb[0].mxu0 %v1174
        %v1696 = vpop.f32.mrb[0].mxu0
        %v1697 = vadd.f32 %v456, %v1696
        %v1698 = vpop.f32.mrb[0].mxu0
        %v1699 = vpop.f32.mrb[0].mxu0
        %v1700 = vadd.f32 %v456, %v1699
        %v1701 = vpop.f32.mrb[0].mxu0
        %1702 = vmatprep.mubr.bf16.mxu0 0
        %1703 = vmatmul.mubr.bf16.gmra.mrb[0].mxu0 %v1177
        %v1704 = vpop.f32.mrb[0].mxu0
        %v1705 = vadd.f32 %v456, %v1704
        %v1706 = vpop.f32.mrb[0].mxu0
        %v1707 = vpop.f32.mrb[0].mxu0
        %v1708 = vadd.f32 %v456, %v1707
        %v1709 = vpop.f32.mrb[0].mxu0
        %1710 = vmatprep.mubr.bf16.mxu0 0
        %1711 = vmatmul.mubr.bf16.gmra.mrb[0].mxu0 %v1180
        %v1712 = vpop.f32.mrb[0].mxu0
        %v1713 = vadd.f32 %v456, %v1712
        %v1714 = vpop.f32.mrb[0].mxu0
        %v1715 = vpop.f32.mrb[0].mxu0
        %v1716 = vadd.f32 %v456, %v1715
        %v1717 = vpop.f32.mrb[0].mxu0
        %1718 = vmatprep.mubr.bf16.mxu0 0
        %1719 = vmatmul.mubr.bf16.gmra.mrb[0].mxu0 %v1183
        %v1720 = vpop.f32.mrb[0].mxu0
        %v1721 = vadd.f32 %v456, %v1720
        %v1722 = vpop.f32.mrb[0].mxu0
        %v1723 = vpop.f32.mrb[0].mxu0
        %v1724 = vadd.f32 %v456, %v1723
        %v1725 = vpop.f32.mrb[0].mxu0
        %1726 = vmatprep.mubr.bf16.mxu0 0
        %1727 = vmatmul.mubr.bf16.gmra.mrb[0].mxu0 %v1186
        %v1728 = vpop.f32.mrb[0].mxu0
        %v1729 = vadd.f32 %v456, %v1728
        %v1730 = vpop.f32.mrb[0].mxu0
        %v1731 = vpop.f32.mrb[0].mxu0
        %v1732 = vadd.f32 %v456, %v1731
        %v1733 = vpop.f32.mrb[0].mxu0
        %1734 = vmatprep.mubr.bf16.mxu0 0
        %1735 = vmatmul.mubr.bf16.gmra.mrb[0].mxu0 %v1189
        %v1736 = vpop.f32.mrb[0].mxu0
        %v1737 = vadd.f32 %v456, %v1736
        %v1738 = vpop.f32.mrb[0].mxu0
        %v1739 = vpop.f32.mrb[0].mxu0
        %v1740 = vadd.f32 %v456, %v1739
        %v1741 = vpop.f32.mrb[0].mxu0
        %1742 = vmatprep.mubr.bf16.mxu0 0
        %1743 = vmatmul.mubr.bf16.gmra.mrb[0].mxu0 %v1192
        %v1744 = vpop.f32.mrb[0].mxu0
        %v1745 = vadd.f32 %v456, %v1744
        %v1746 = vpop.f32.mrb[0].mxu0
        %v1747 = vpop.f32.mrb[0].mxu0
        %v1748 = vadd.f32 %v456, %v1747
        %v1749 = vpop.f32.mrb[0].mxu0
        %1750 = vmatprep.mubr.bf16.mxu0 0
        %1751 = vmatmul.mubr.bf16.gmra.mrb[0].mxu0 %v1195
        %v1752 = vpop.f32.mrb[0].mxu0
        %v1753 = vadd.f32 %v456, %v1752
        %v1754 = vpop.f32.mrb[0].mxu0
        %v1755 = vpop.f32.mrb[0].mxu0
        %v1756 = vadd.f32 %v456, %v1755
        %v1757 = vpop.f32.mrb[0].mxu0
        %1758 = vmatprep.mubr.bf16.mxu0 0
        %1759 = vmatmul.mubr.bf16.gmra.mrb[0].mxu0 %v1198
        %v1760 = vpop.f32.mrb[0].mxu0
        %v1761 = vadd.f32 %v456, %v1760
        %v1762 = vpop.f32.mrb[0].mxu0
        %v1763 = vpop.f32.mrb[0].mxu0
        %v1764 = vadd.f32 %v456, %v1763
        %v1765 = vpop.f32.mrb[0].mxu0
        %1766 = vmatprep.mubr.bf16.mxu0 0
        %1767 = vmatmul.mubr.bf16.gmra.mrb[0].mxu0 %v1201
        %v1768 = vpop.f32.mrb[0].mxu0
        %v1769 = vadd.f32 %v456, %v1768
        %v1770 = vpop.f32.mrb[0].mxu0
        %v1771 = vpop.f32.mrb[0].mxu0
        %v1772 = vadd.f32 %v456, %v1771
        %v1773 = vpop.f32.mrb[0].mxu0
        %1774 = vmatprep.mubr.bf16.mxu0 0
        %1775 = vmatmul.mubr.bf16.gmra.mrb[0].mxu0 %v1204
        %v1776 = vpop.f32.mrb[0].mxu0
        %v1777 = vadd.f32 %v456, %v1776
        %v1778 = vpop.f32.mrb[0].mxu0
        %v1779 = vpop.f32.mrb[0].mxu0
        %v1780 = vadd.f32 %v456, %v1779
        %v1781 = vpop.f32.mrb[0].mxu0
        %1782 = vmatprep.mubr.bf16.mxu0 0
        %1783 = vmatmul.mubr.bf16.gmra.mrb[0].mxu0 %v1207
        %v1784 = vpop.f32.mrb[0].mxu0
        %v1785 = vadd.f32 %v456, %v1784
        %v1786 = vpop.f32.mrb[0].mxu0
        %v1787 = vpop.f32.mrb[0].mxu0
        %v1788 = vadd.f32 %v456, %v1787
        %v1789 = vpop.f32.mrb[0].mxu0
        %1790 = vmatprep.mubr.bf16.mxu0 0
        %1791 = vmatmul.mubr.bf16.gmra.mrb[0].mxu0 %v1210
        %v1792 = vpop.f32.mrb[0].mxu0
        %v1793 = vadd.f32 %v456, %v1792
        %v1794 = vpop.f32.mrb[0].mxu0
        %v1795 = vpop.f32.mrb[0].mxu0
        %v1796 = vadd.f32 %v456, %v1795
        %v1797 = vpop.f32.mrb[0].mxu0
        %1798 = vmatprep.mubr.bf16.mxu0 0
        %1799 = vmatmul.mubr.bf16.gmra.mrb[0].mxu0 %v1213
        %v1800 = vpop.f32.mrb[0].mxu0
        %v1801 = vadd.f32 %v456, %v1800
        %v1802 = vpop.f32.mrb[0].mxu0
        %v1803 = vpop.f32.mrb[0].mxu0
        %v1804 = vadd.f32 %v456, %v1803
        %v1805 = vpop.f32.mrb[0].mxu0
        %1806 = vmatprep.mubr.bf16.mxu0 0
        %1807 = vmatmul.mubr.bf16.gmra.mrb[0].mxu0 %v1216
        %v1808 = vpop.f32.mrb[0].mxu0
        %v1809 = vadd.f32 %v456, %v1808
        %v1810 = vpop.f32.mrb[0].mxu0
        %v1811 = vpop.f32.mrb[0].mxu0
        %v1812 = vadd.f32 %v456, %v1811
        %v1813 = vpop.f32.mrb[0].mxu0
        %1814 = vmatprep.mubr.bf16.mxu0 0
        %1815 = vmatmul.mubr.bf16.gmra.mrb[0].mxu0 %v1219
        %v1816 = vpop.f32.mrb[0].mxu0
        %v1817 = vadd.f32 %v456, %v1816
        %v1818 = vpop.f32.mrb[0].mxu0
        %v1819 = vpop.f32.mrb[0].mxu0
        %v1820 = vadd.f32 %v456, %v1819
        %v1821 = vpop.f32.mrb[0].mxu0
        %1822 = vmatprep.mubr.bf16.mxu0 0
        %1823 = vmatmul.mubr.bf16.gmra.mrb[0].mxu0 %v1222
        %v1824 = vpop.f32.mrb[0].mxu0
        %v1825 = vadd.f32 %v456, %v1824
        %v1826 = vpop.f32.mrb[0].mxu0
        %v1827 = vpop.f32.mrb[0].mxu0
        %v1828 = vadd.f32 %v456, %v1827
        %v1829 = vpop.f32.mrb[0].mxu0
        %1830 = vmatprep.mubr.bf16.mxu0 0
        %1831 = vmatmul.mubr.bf16.gmra.mrb[0].mxu0 %v1225
        %v1832 = vpop.f32.mrb[0].mxu0
        %v1833 = vadd.f32 %v456, %v1832
        %v1834 = vpop.f32.mrb[0].mxu0
        %v1835 = vpop.f32.mrb[0].mxu0
        %v1836 = vadd.f32 %v456, %v1835
        %v1837 = vpop.f32.mrb[0].mxu0
        %1838 = vmatprep.mubr.bf16.mxu0 0
        %1839 = vmatmul.mubr.bf16.gmra.mrb[0].mxu0 %v1228
        %v1840 = vpop.f32.mrb[0].mxu0
        %v1841 = vadd.f32 %v456, %v1840
        %v1842 = vpop.f32.mrb[0].mxu0
        %v1843 = vpop.f32.mrb[0].mxu0
        %v1844 = vadd.f32 %v456, %v1843
        %v1845 = vpop.f32.mrb[0].mxu0
        %1846 = vmatprep.mubr.bf16.mxu0 0
        %1847 = vmatmul.mubr.bf16.gmra.mrb[0].mxu0 %v1231
        %v1848 = vpop.f32.mrb[0].mxu0
        %v1849 = vadd.f32 %v456, %v1848
        %v1850 = vpop.f32.mrb[0].mxu0
        %v1851 = vpop.f32.mrb[0].mxu0
        %v1852 = vadd.f32 %v456, %v1851
        %v1853 = vpop.f32.mrb[0].mxu0
        %1854 = vmatprep.mubr.bf16.mxu0 0
        %1855 = vmatmul.mubr.bf16.gmra.mrb[0].mxu0 %v1234
        %v1856 = vpop.f32.mrb[0].mxu0
        %v1857 = vadd.f32 %v456, %v1856
        %v1858 = vpop.f32.mrb[0].mxu0
        %v1859 = vpop.f32.mrb[0].mxu0
        %v1860 = vadd.f32 %v456, %v1859
        %v1861 = vpop.f32.mrb[0].mxu0
        %1862 = vmatprep.mubr.bf16.mxu0 0
        %1863 = vmatmul.mubr.bf16.gmra.mrb[0].mxu0 %v1237
        %v1864 = vpop.f32.mrb[0].mxu0
        %v1865 = vadd.f32 %v456, %v1864
        %v1866 = vpop.f32.mrb[0].mxu0
        %v1867 = vpop.f32.mrb[0].mxu0
        %v1868 = vadd.f32 %v456, %v1867
        %v1869 = vpop.f32.mrb[0].mxu0
        %1870 = vmatprep.mubr.bf16.mxu0 0
        %1871 = vmatmul.mubr.bf16.gmra.mrb[0].mxu0 %v1240
        %v1872 = vpop.f32.mrb[0].mxu0
        %v1873 = vadd.f32 %v456, %v1872
        %v1874 = vpop.f32.mrb[0].mxu0
        %v1875 = vpop.f32.mrb[0].mxu0
        %v1876 = vadd.f32 %v456, %v1875
        %v1877 = vpop.f32.mrb[0].mxu0
        %1878 = vmatprep.mubr.bf16.mxu0 0
        %1879 = vmatmul.mubr.bf16.gmra.mrb[0].mxu0 %v1243
        %v1880 = vpop.f32.mrb[0].mxu0
        %v1881 = vadd.f32 %v456, %v1880
        %v1882 = vpop.f32.mrb[0].mxu0
        %v1883 = vpop.f32.mrb[0].mxu0
        %v1884 = vadd.f32 %v456, %v1883
        %v1885 = vpop.f32.mrb[0].mxu0
        %1886 = vmatprep.mubr.bf16.mxu0 0
        %1887 = vmatmul.mubr.bf16.gmra.mrb[0].mxu0 %v1246
        %v1888 = vpop.f32.mrb[0].mxu0
        %v1889 = vadd.f32 %v456, %v1888
        %v1890 = vpop.f32.mrb[0].mxu0
        %v1891 = vpop.f32.mrb[0].mxu0
        %v1892 = vadd.f32 %v456, %v1891
        %v1893 = vpop.f32.mrb[0].mxu0
        %1894 = vmatprep.mubr.bf16.mxu0 0
        %1895 = vmatmul.mubr.bf16.gmra.mrb[0].mxu0 %v1249
        %v1896 = vpop.f32.mrb[0].mxu0
        %v1897 = vadd.f32 %v456, %v1896
        %v1898 = vpop.f32.mrb[0].mxu0
        %v1899 = vpop.f32.mrb[0].mxu0
        %v1900 = vadd.f32 %v456, %v1899
        %v1901 = vpop.f32.mrb[0].mxu0
        %1902 = vmatprep.mubr.bf16.mxu0 0
        %1903 = vmatmul.mubr.bf16.gmra.mrb[0].mxu0 %v1252
        %v1904 = vpop.f32.mrb[0].mxu0
        %v1905 = vadd.f32 %v456, %v1904
        %v1906 = vpop.f32.mrb[0].mxu0
        %v1907 = vpop.f32.mrb[0].mxu0
        %v1908 = vadd.f32 %v456, %v1907
        %v1909 = vpop.f32.mrb[0].mxu0
        %1910 = vmatprep.mubr.bf16.mxu0 0
        %1911 = vmatmul.mubr.bf16.gmra.mrb[0].mxu0 %v1255
        %v1912 = vpop.f32.mrb[0].mxu0
        %v1913 = vadd.f32 %v456, %v1912
        %v1914 = vpop.f32.mrb[0].mxu0
        %v1915 = vpop.f32.mrb[0].mxu0
        %v1916 = vadd.f32 %v456, %v1915
        %v1917 = vpop.f32.mrb[0].mxu0
        %1918 = vmatprep.mubr.bf16.mxu0 0
        %1919 = vmatmul.mubr.bf16.gmra.mrb[0].mxu0 %v1258
        %v1920 = vpop.f32.mrb[0].mxu0
        %v1921 = vadd.f32 %v456, %v1920
        %v1922 = vpop.f32.mrb[0].mxu0
        %v1923 = vpop.f32.mrb[0].mxu0
        %v1924 = vadd.f32 %v456, %v1923
        %v1925 = vpop.f32.mrb[0].mxu0
        %1926 = vmatprep.mubr.bf16.mxu0 0
        %1927 = vmatmul.mubr.bf16.gmra.mrb[0].mxu0 %v1261
        %v1928 = vpop.f32.mrb[0].mxu0
        %v1929 = vadd.f32 %v456, %v1928
        %v1930 = vpop.f32.mrb[0].mxu0
        %v1931 = vpop.f32.mrb[0].mxu0
        %v1932 = vadd.f32 %v456, %v1931
        %v1933 = vpop.f32.mrb[0].mxu0
        %1934 = vmatprep.mubr.bf16.mxu0 0
        %1935 = vmatmul.mubr.bf16.gmra.mrb[0].mxu0 %v1264
        %v1936 = vpop.f32.mrb[0].mxu0
        %v1937 = vadd.f32 %v456, %v1936
        %v1938 = vpop.f32.mrb[0].mxu0
        %v1939 = vpop.f32.mrb[0].mxu0
        %v1940 = vadd.f32 %v456, %v1939
        %v1941 = vpop.f32.mrb[0].mxu0
        %1942 = vmatprep.mubr.bf16.mxu0 0
        %1943 = vmatmul.mubr.bf16.gmra.mrb[0].mxu0 %v1267
        %v1944 = vpop.f32.mrb[0].mxu0
        %v1945 = vadd.f32 %v456, %v1944
        %v1946 = vpop.f32.mrb[0].mxu0
        %v1947 = vpop.f32.mrb[0].mxu0
        %v1948 = vadd.f32 %v456, %v1947
        %v1949 = vpop.f32.mrb[0].mxu0
        %1950 = vmatprep.mubr.bf16.mxu0 0
        %1951 = vmatmul.mubr.bf16.gmra.mrb[0].mxu0 %v1270
        %v1952 = vpop.f32.mrb[0].mxu0
        %v1953 = vadd.f32 %v456, %v1952
        %v1954 = vpop.f32.mrb[0].mxu0
        %v1955 = vpop.f32.mrb[0].mxu0
        %v1956 = vadd.f32 %v456, %v1955
        %v1957 = vpop.f32.mrb[0].mxu0
        %1958 = vmatprep.mubr.bf16.mxu0 0
        %1959 = vmatmul.mubr.bf16.gmra.mrb[0].mxu0 %v1273
        %v1960 = vpop.f32.mrb[0].mxu0
        %v1961 = vadd.f32 %v456, %v1960
        %v1962 = vpop.f32.mrb[0].mxu0
        %v1963 = vpop.f32.mrb[0].mxu0
        %v1964 = vadd.f32 %v456, %v1963
        %v1965 = vpop.f32.mrb[0].mxu0
        %1966 = vmatprep.mubr.bf16.mxu0 0
        %1967 = vmatmul.mubr.bf16.gmra.mrb[0].mxu0 %v1276
        %v1968 = vpop.f32.mrb[0].mxu0
        %v1969 = vadd.f32 %v456, %v1968
        %v1970 = vpop.f32.mrb[0].mxu0
        %v1971 = vpop.f32.mrb[0].mxu0
        %v1972 = vadd.f32 %v456, %v1971
        %v1973 = vpop.f32.mrb[0].mxu0
        %1974 = vmatprep.mubr.bf16.mxu0 0
        %1975 = vmatmul.mubr.bf16.gmra.mrb[0].mxu0 %v1279
        %v1976 = vpop.f32.mrb[0].mxu0
        %v1977 = vadd.f32 %v456, %v1976
        %v1978 = vpop.f32.mrb[0].mxu0
        %v1979 = vpop.f32.mrb[0].mxu0
        %v1980 = vadd.f32 %v456, %v1979
        %v1981 = vpop.f32.mrb[0].mxu0
        %1982 = vmatprep.mubr.bf16.mxu0 0
        %1983 = vmatmul.mubr.bf16.gmra.mrb[0].mxu0 %v1282
        %v1984 = vpop.f32.mrb[0].mxu0
        %v1985 = vadd.f32 %v456, %v1984
        %v1986 = vpop.f32.mrb[0].mxu0
        %v1987 = vpop.f32.mrb[0].mxu0
        %v1988 = vadd.f32 %v456, %v1987
        %v1989 = vpop.f32.mrb[0].mxu0
        %1990 = vmatprep.mubr.bf16.mxu0 0
        %1991 = vmatmul.mubr.bf16.gmra.mrb[0].mxu0 %v1285
        %v1992 = vpop.f32.mrb[0].mxu0
        %v1993 = vadd.f32 %v456, %v1992
        %v1994 = vpop.f32.mrb[0].mxu0
        %v1995 = vpop.f32.mrb[0].mxu0
        %v1996 = vadd.f32 %v456, %v1995
        %v1997 = vpop.f32.mrb[0].mxu0
        %1998 = vmatprep.mubr.bf16.mxu0 0
        %1999 = vmatmul.mubr.bf16.gmra.mrb[0].mxu0 %v1288
        %v2000 = vpop.f32.mrb[0].mxu0
        %v2001 = vadd.f32 %v456, %v2000
        %v2002 = vpop.f32.mrb[0].mxu0
        %v2003 = vpop.f32.mrb[0].mxu0
        %v2004 = vadd.f32 %v456, %v2003
        %v2005 = vpop.f32.mrb[0].mxu0
        %2006 = vmatprep.mubr.bf16.mxu0 0
        %2007 = vmatmul.mubr.bf16.gmra.mrb[0].mxu0 %v1291
        %v2008 = vpop.f32.mrb[0].mxu0
        %v2009 = vadd.f32 %v456, %v2008
        %v2010 = vpop.f32.mrb[0].mxu0
        %v2011 = vpop.f32.mrb[0].mxu0
        %v2012 = vadd.f32 %v456, %v2011
        %v2013 = vpop.f32.mrb[0].mxu0
        %2014 = vmatprep.mubr.bf16.mxu0 0
        %2015 = vmatmul.mubr.bf16.gmra.mrb[0].mxu0 %v1294
        %v2016 = vpop.f32.mrb[0].mxu0
        %v2017 = vadd.f32 %v456, %v2016
        %v2018 = vpop.f32.mrb[0].mxu0
        %v2019 = vpop.f32.mrb[0].mxu0
        %v2020 = vadd.f32 %v456, %v2019
        %v2021 = vpop.f32.mrb[0].mxu0
        %2022 = vmatprep.mubr.bf16.mxu0 0
        %2023 = vmatmul.mubr.bf16.gmra.mrb[0].mxu0 %v1297
        %v2024 = vpop.f32.mrb[0].mxu0
        %v2025 = vadd.f32 %v456, %v2024
        %v2026 = vpop.f32.mrb[0].mxu0
        %v2027 = vpop.f32.mrb[0].mxu0
        %v2028 = vadd.f32 %v456, %v2027
        %v2029 = vpop.f32.mrb[0].mxu0
        %2030 = vmatprep.mubr.bf16.mxu0 0
        %2031 = vmatmul.mubr.bf16.gmra.mrb[0].mxu0 %v1300
        %v2032 = vpop.f32.mrb[0].mxu0
        %v2033 = vadd.f32 %v456, %v2032
        %v2034 = vpop.f32.mrb[0].mxu0
        %v2035 = vpop.f32.mrb[0].mxu0
        %v2036 = vadd.f32 %v456, %v2035
        %v2037 = vpop.f32.mrb[0].mxu0
        %2038 = vmatprep.mubr.bf16.mxu0 0
        %2039 = vmatmul.mubr.bf16.gmra.mrb[0].mxu0 %v1303
        %v2040 = vpop.f32.mrb[0].mxu0
        %v2041 = vadd.f32 %v456, %v2040
        %v2042 = vpop.f32.mrb[0].mxu0
        %v2043 = vpop.f32.mrb[0].mxu0
        %v2044 = vadd.f32 %v456, %v2043
        %v2045 = vpop.f32.mrb[0].mxu0
        %2046 = vmatprep.mubr.bf16.mxu0 0
        %2047 = vmatmul.mubr.bf16.gmra.mrb[0].mxu0 %v1306
        %v2048 = vpop.f32.mrb[0].mxu0
        %v2049 = vadd.f32 %v456, %v2048
        %v2050 = vpop.f32.mrb[0].mxu0
        %v2051 = vpop.f32.mrb[0].mxu0
        %v2052 = vadd.f32 %v456, %v2051
        %v2053 = vpop.f32.mrb[0].mxu0
        %2054 = vmatprep.mubr.bf16.mxu0 0
        %2055 = vmatmul.mubr.bf16.gmra.mrb[0].mxu0 %v1309
        %v2056 = vpop.f32.mrb[0].mxu0
        %v2057 = vadd.f32 %v456, %v2056
        %v2058 = vpop.f32.mrb[0].mxu0
        %v2059 = vpop.f32.mrb[0].mxu0
        %v2060 = vadd.f32 %v456, %v2059
        %v2061 = vpop.f32.mrb[0].mxu0
        %2062 = vmatprep.mubr.bf16.mxu0 0
        %2063 = vmatmul.mubr.bf16.gmra.mrb[0].mxu0 %v1312
        %v2064 = vpop.f32.mrb[0].mxu0
        %v2065 = vadd.f32 %v456, %v2064
        %v2066 = vpop.f32.mrb[0].mxu0
        %v2067 = vpop.f32.mrb[0].mxu0
        %v2068 = vadd.f32 %v456, %v2067
        %v2069 = vpop.f32.mrb[0].mxu0
        %2070 = vmatprep.mubr.bf16.mxu0 0
        %2071 = vmatmul.mubr.bf16.gmra.mrb[0].mxu0 %v1315
        %v2072 = vpop.f32.mrb[0].mxu0
        %v2073 = vadd.f32 %v456, %v2072
        %v2074 = vpop.f32.mrb[0].mxu0
        %v2075 = vpop.f32.mrb[0].mxu0
        %v2076 = vadd.f32 %v456, %v2075
        %v2077 = vpop.f32.mrb[0].mxu0
        %2078 = vmatprep.mubr.bf16.mxu0 0
        %2079 = vmatmul.mubr.bf16.gmra.mrb[0].mxu0 %v1318
        %v2080 = vpop.f32.mrb[0].mxu0
        %v2081 = vadd.f32 %v456, %v2080
        %v2082 = vpop.f32.mrb[0].mxu0
        %v2083 = vpop.f32.mrb[0].mxu0
        %v2084 = vadd.f32 %v456, %v2083
        %v2085 = vpop.f32.mrb[0].mxu0
        %2086 = vmatprep.mubr.bf16.mxu0 0
        %2087 = vmatmul.mubr.bf16.gmra.mrb[0].mxu0 %v1321
        %v2088 = vpop.f32.mrb[0].mxu0
        %v2089 = vadd.f32 %v456, %v2088
        %v2090 = vpop.f32.mrb[0].mxu0
        %v2091 = vpop.f32.mrb[0].mxu0
        %v2092 = vadd.f32 %v456, %v2091
        %v2093 = vpop.f32.mrb[0].mxu0
        %2094 = vmatprep.mubr.bf16.mxu0 0
        %2095 = vmatmul.mubr.bf16.gmra.mrb[0].mxu0 %v1324
        %v2096 = vpop.f32.mrb[0].mxu0
        %v2097 = vadd.f32 %v456, %v2096
        %v2098 = vpop.f32.mrb[0].mxu0
        %v2099 = vpop.f32.mrb[0].mxu0
        %v2100 = vadd.f32 %v456, %v2099
        %v2101 = vpop.f32.mrb[0].mxu0
        %2102 = vmatprep.mubr.bf16.mxu0 0
        %2103 = vmatmul.mubr.bf16.gmra.mrb[0].mxu0 %v1327
        %v2104 = vpop.f32.mrb[0].mxu0
        %v2105 = vadd.f32 %v456, %v2104
        %v2106 = vpop.f32.mrb[0].mxu0
        %v2107 = vpop.f32.mrb[0].mxu0
        %v2108 = vadd.f32 %v456, %v2107
        %v2109 = vpop.f32.mrb[0].mxu0
        %2110 = vmatprep.mubr.bf16.mxu0 0
        %2111 = vmatmul.mubr.bf16.gmra.mrb[0].mxu0 %v1330
        %v2112 = vpop.f32.mrb[0].mxu0
        %v2113 = vadd.f32 %v456, %v2112
        %v2114 = vpop.f32.mrb[0].mxu0
        %v2115 = vpop.f32.mrb[0].mxu0
        %v2116 = vadd.f32 %v456, %v2115
        %v2117 = vpop.f32.mrb[0].mxu0
        %2118 = vmatprep.mubr.bf16.mxu0 0
        %2119 = vmatmul.mubr.bf16.gmra.mrb[0].mxu0 %v1333
        %v2120 = vpop.f32.mrb[0].mxu0
        %v2121 = vadd.f32 %v456, %v2120
        %v2122 = vpop.f32.mrb[0].mxu0
        %v2123 = vpop.f32.mrb[0].mxu0
        %v2124 = vadd.f32 %v456, %v2123
        %v2125 = vpop.f32.mrb[0].mxu0
        %2126 = vmatprep.mubr.bf16.mxu0 0
        %2127 = vmatmul.mubr.bf16.gmra.mrb[0].mxu0 %v1336
        %v2128 = vpop.f32.mrb[0].mxu0
        %v2129 = vadd.f32 %v456, %v2128
        %v2130 = vpop.f32.mrb[0].mxu0
        %v2131 = vpop.f32.mrb[0].mxu0
        %v2132 = vadd.f32 %v456, %v2131
        %v2133 = vpop.f32.mrb[0].mxu0
        %2134 = vmatprep.mubr.bf16.mxu0 0
        %2135 = vmatmul.mubr.bf16.gmra.mrb[0].mxu0 %v1339
        %v2136 = vpop.f32.mrb[0].mxu0
        %v2137 = vadd.f32 %v456, %v2136
        %v2138 = vpop.f32.mrb[0].mxu0
        %v2139 = vpop.f32.mrb[0].mxu0
        %v2140 = vadd.f32 %v456, %v2139
        %v2141 = vpop.f32.mrb[0].mxu0
        %2142 = vmatprep.mubr.bf16.mxu0 0
        %2143 = vmatmul.mubr.bf16.gmra.mrb[0].mxu0 %v1342
        %v2144 = vpop.f32.mrb[0].mxu0
        %v2145 = vadd.f32 %v456, %v2144
        %v2146 = vpop.f32.mrb[0].mxu0
        %v2147 = vpop.f32.mrb[0].mxu0
        %v2148 = vadd.f32 %v456, %v2147
        %v2149 = vpop.f32.mrb[0].mxu0
        %2150 = vmatprep.mubr.bf16.mxu0 0
        %2151 = vmatmul.mubr.bf16.gmra.mrb[0].mxu0 %v1345
        %v2152 = vpop.f32.mrb[0].mxu0
        %v2153 = vadd.f32 %v456, %v2152
        %v2154 = vpop.f32.mrb[0].mxu0
        %v2155 = vpop.f32.mrb[0].mxu0
        %v2156 = vadd.f32 %v456, %v2155
        %v2157 = vpop.f32.mrb[0].mxu0
        %2158 = vmatprep.mubr.bf16.mxu0 0
        %2159 = vmatmul.mubr.bf16.gmra.mrb[0].mxu0 %v1348
        %v2160 = vpop.f32.mrb[0].mxu0
        %v2161 = vadd.f32 %v456, %v2160
        %v2162 = vpop.f32.mrb[0].mxu0
        %v2163 = vpop.f32.mrb[0].mxu0
        %v2164 = vadd.f32 %v456, %v2163
        %v2165 = vpop.f32.mrb[0].mxu0
        %2166 = vmatprep.mubr.bf16.mxu0 0
        %2167 = vmatmul.mubr.bf16.gmra.mrb[0].mxu0 %v1351
        %v2168 = vpop.f32.mrb[0].mxu0
        %v2169 = vadd.f32 %v456, %v2168
        %v2170 = vpop.f32.mrb[0].mxu0
        %v2171 = vpop.f32.mrb[0].mxu0
        %v2172 = vadd.f32 %v456, %v2171
        %v2173 = vpop.f32.mrb[0].mxu0
        %2174 = vmatprep.mubr.bf16.mxu0 0
        %2175 = vmatmul.mubr.bf16.gmra.mrb[0].mxu0 %v1354
        %v2176 = vpop.f32.mrb[0].mxu0
        %v2177 = vadd.f32 %v456, %v2176
        %v2178 = vpop.f32.mrb[0].mxu0
        %v2179 = vpop.f32.mrb[0].mxu0
        %v2180 = vadd.f32 %v456, %v2179
        %v2181 = vpop.f32.mrb[0].mxu0
        %2182 = vmatprep.mubr.bf16.mxu0 0
        %2183 = vmatmul.mubr.bf16.gmra.mrb[0].mxu0 %v1357
        %v2184 = vpop.f32.mrb[0].mxu0
        %v2185 = vadd.f32 %v456, %v2184
        %v2186 = vpop.f32.mrb[0].mxu0
        %v2187 = vpop.f32.mrb[0].mxu0
        %v2188 = vadd.f32 %v456, %v2187
        %v2189 = vpop.f32.mrb[0].mxu0
        %2190 = vmatprep.mubr.bf16.mxu0 0
        %2191 = vmatmul.mubr.bf16.gmra.mrb[0].mxu0 %v1360
        %v2192 = vpop.f32.mrb[0].mxu0
        %v2193 = vadd.f32 %v456, %v2192
        %v2194 = vpop.f32.mrb[0].mxu0
        %v2195 = vpop.f32.mrb[0].mxu0
        %v2196 = vadd.f32 %v456, %v2195
        %v2197 = vpop.f32.mrb[0].mxu0
        %2198 = vmatprep.mubr.bf16.mxu0 0
        %2199 = vmatmul.mubr.bf16.gmra.mrb[0].mxu0 %v1363
        %v2200 = vpop.f32.mrb[0].mxu0
        %v2201 = vadd.f32 %v456, %v2200
        %v2202 = vpop.f32.mrb[0].mxu0
        %v2203 = vpop.f32.mrb[0].mxu0
        %v2204 = vadd.f32 %v456, %v2203
        %v2205 = vpop.f32.mrb[0].mxu0
        %2206 = vmatprep.mubr.bf16.mxu0 0
        %2207 = vmatmul.mubr.bf16.gmra.mrb[0].mxu0 %v1366
        %v2208 = vpop.f32.mrb[0].mxu0
        %v2209 = vadd.f32 %v456, %v2208
        %v2210 = vpop.f32.mrb[0].mxu0
        %v2211 = vpop.f32.mrb[0].mxu0
        %v2212 = vadd.f32 %v456, %v2211
        %v2213 = vpop.f32.mrb[0].mxu0
        %2214 = vmatprep.mubr.bf16.mxu0 0
        %2215 = vmatmul.mubr.bf16.gmra.mrb[0].mxu0 %v1369
        %v2216 = vpop.f32.mrb[0].mxu0
        %v2217 = vadd.f32 %v456, %v2216
        %v2218 = vpop.f32.mrb[0].mxu0
        %v2219 = vpop.f32.mrb[0].mxu0
        %v2220 = vadd.f32 %v456, %v2219
        %v2221 = vpop.f32.mrb[0].mxu0
        %2222 = vmatprep.mubr.bf16.mxu0 0
        %2223 = vmatmul.mubr.bf16.gmra.mrb[0].mxu0 %v1372
        %v2224 = vpop.f32.mrb[0].mxu0
        %v2225 = vadd.f32 %v456, %v2224
        %v2226 = vpop.f32.mrb[0].mxu0
        %v2227 = vpop.f32.mrb[0].mxu0
        %v2228 = vadd.f32 %v456, %v2227
        %v2229 = vpop.f32.mrb[0].mxu0
        %2230 = vmatprep.mubr.bf16.mxu0 0
        %2231 = vmatmul.mubr.bf16.gmra.mrb[0].mxu0 %v1375
        %v2232 = vpop.f32.mrb[0].mxu0
        %v2233 = vadd.f32 %v456, %v2232
        %v2234 = vpop.f32.mrb[0].mxu0
        %v2235 = vpop.f32.mrb[0].mxu0
        %v2236 = vadd.f32 %v456, %v2235
        %v2237 = vpop.f32.mrb[0].mxu0
        %2238 = vmatprep.mubr.bf16.mxu0 0
        %2239 = vmatmul.mubr.bf16.gmra.mrb[0].mxu0 %v1378
        %v2240 = vpop.f32.mrb[0].mxu0
        %v2241 = vadd.f32 %v456, %v2240
        %v2242 = vpop.f32.mrb[0].mxu0
        %v2243 = vpop.f32.mrb[0].mxu0
        %v2244 = vadd.f32 %v456, %v2243
        %v2245 = vpop.f32.mrb[0].mxu0
        %2246 = vmatprep.mubr.bf16.mxu0 0
        %2247 = vmatmul.mubr.bf16.gmra.mrb[0].mxu0 %v1381
        %v2248 = vpop.f32.mrb[0].mxu0
        %v2249 = vadd.f32 %v456, %v2248
        %v2250 = vpop.f32.mrb[0].mxu0
        %v2251 = vpop.f32.mrb[0].mxu0
        %v2252 = vadd.f32 %v456, %v2251
        %v2253 = vpop.f32.mrb[0].mxu0
        %2254 = vmatprep.mubr.bf16.mxu0 0
        %2255 = vmatmul.mubr.bf16.gmra.mrb[0].mxu0 %v1384
        %v2256 = vpop.f32.mrb[0].mxu0
        %v2257 = vadd.f32 %v456, %v2256
        %v2258 = vpop.f32.mrb[0].mxu0
        %v2259 = vpop.f32.mrb[0].mxu0
        %v2260 = vadd.f32 %v456, %v2259
        %v2261 = vpop.f32.mrb[0].mxu0
        %2262 = vmatprep.mubr.bf16.mxu0 0
        %2263 = vmatmul.mubr.bf16.gmra.mrb[0].mxu0 %v1387
        %v2264 = vpop.f32.mrb[0].mxu0
        %v2265 = vadd.f32 %v456, %v2264
        %v2266 = vpop.f32.mrb[0].mxu0
        %v2267 = vpop.f32.mrb[0].mxu0
        %v2268 = vadd.f32 %v456, %v2267
        %v2269 = vpop.f32.mrb[0].mxu0
        %2270 = vmatprep.mubr.bf16.mxu0 0
        %2271 = vmatmul.mubr.bf16.gmra.mrb[0].mxu0 %v1390
        %v2272 = vpop.f32.mrb[0].mxu0
        %v2273 = vadd.f32 %v456, %v2272
        %v2274 = vpop.f32.mrb[0].mxu0
        %v2275 = vpop.f32.mrb[0].mxu0
        %v2276 = vadd.f32 %v456, %v2275
        %v2277 = vpop.f32.mrb[0].mxu0
        %2278 = vmatprep.mubr.bf16.mxu0 0
        %2279 = vmatmul.mubr.bf16.gmra.mrb[0].mxu0 %v1393
        %v2280 = vpop.f32.mrb[0].mxu0
        %v2281 = vadd.f32 %v456, %v2280
        %v2282 = vpop.f32.mrb[0].mxu0
        %v2283 = vpop.f32.mrb[0].mxu0
        %v2284 = vadd.f32 %v456, %v2283
        %v2285 = vpop.f32.mrb[0].mxu0
        %2286 = vmatprep.mubr.bf16.mxu0 0
        %2287 = vmatmul.mubr.bf16.gmra.mrb[0].mxu0 %v1396
        %v2288 = vpop.f32.mrb[0].mxu0
        %v2289 = vadd.f32 %v456, %v2288
        %v2290 = vpop.f32.mrb[0].mxu0
        %v2291 = vpop.f32.mrb[0].mxu0
        %v2292 = vadd.f32 %v456, %v2291
        %v2293 = vpop.f32.mrb[0].mxu0
        %2294 = vmatprep.mubr.bf16.mxu0 0
        %2295 = vmatmul.mubr.bf16.gmra.mrb[0].mxu0 %v1399
        %v2296 = vpop.f32.mrb[0].mxu0
        %v2297 = vadd.f32 %v456, %v2296
        %v2298 = vpop.f32.mrb[0].mxu0
        %v2299 = vpop.f32.mrb[0].mxu0
        %v2300 = vadd.f32 %v456, %v2299
        %v2301 = vpop.f32.mrb[0].mxu0
        %2302 = vmatprep.mubr.bf16.mxu0 0
        %2303 = vmatmul.mubr.bf16.gmra.mrb[0].mxu0 %v1402
        %v2304 = vpop.f32.mrb[0].mxu0
        %v2305 = vadd.f32 %v456, %v2304
        %v2306 = vpop.f32.mrb[0].mxu0
        %v2307 = vpop.f32.mrb[0].mxu0
        %v2308 = vadd.f32 %v456, %v2307
        %v2309 = vpop.f32.mrb[0].mxu0
        %2310 = vmatprep.mubr.bf16.mxu0 0
        %2311 = vmatmul.mubr.bf16.gmra.mrb[0].mxu0 %v1405
        %v2312 = vpop.f32.mrb[0].mxu0
        %v2313 = vadd.f32 %v456, %v2312
        %v2314 = vpop.f32.mrb[0].mxu0
        %v2315 = vpop.f32.mrb[0].mxu0
        %v2316 = vadd.f32 %v456, %v2315
        %v2317 = vpop.f32.mrb[0].mxu0
        %2318 = vmatprep.mubr.bf16.mxu0 0
        %2319 = vmatmul.mubr.bf16.gmra.mrb[0].mxu0 %v1408
        %v2320 = vpop.f32.mrb[0].mxu0
        %v2321 = vadd.f32 %v456, %v2320
        %v2322 = vpop.f32.mrb[0].mxu0
        %v2323 = vpop.f32.mrb[0].mxu0
        %v2324 = vadd.f32 %v456, %v2323
        %v2325 = vpop.f32.mrb[0].mxu0
        %2326 = vmatprep.mubr.bf16.mxu0 0
        %2327 = vmatmul.mubr.bf16.gmra.mrb[0].mxu0 %v1411
        %v2328 = vpop.f32.mrb[0].mxu0
        %v2329 = vadd.f32 %v456, %v2328
        %v2330 = vpop.f32.mrb[0].mxu0
        %v2331 = vpop.f32.mrb[0].mxu0
        %v2332 = vadd.f32 %v456, %v2331
        %v2333 = vpop.f32.mrb[0].mxu0
        %2334 = vmatprep.mubr.bf16.mxu0 0
        %2335 = vmatmul.mubr.bf16.gmra.mrb[0].mxu0 %v1414
        %v2336 = vpop.f32.mrb[0].mxu0
        %v2337 = vadd.f32 %v456, %v2336
        %v2338 = vpop.f32.mrb[0].mxu0
        %v2339 = vpop.f32.mrb[0].mxu0
        %v2340 = vadd.f32 %v456, %v2339
        %v2341 = vpop.f32.mrb[0].mxu0
        %2342 = vmatprep.mubr.bf16.mxu0 0
        %2343 = vmatmul.mubr.bf16.gmra.mrb[0].mxu0 %v1417
        %v2344 = vpop.f32.mrb[0].mxu0
        %v2345 = vadd.f32 %v456, %v2344
        %v2346 = vpop.f32.mrb[0].mxu0
        %v2347 = vpop.f32.mrb[0].mxu0
        %v2348 = vadd.f32 %v456, %v2347
        %v2349 = vpop.f32.mrb[0].mxu0
        %2350 = vmatprep.mubr.bf16.mxu0 0
        %2351 = vmatmul.mubr.bf16.gmra.mrb[0].mxu0 %v1420
        %v2352 = vpop.f32.mrb[0].mxu0
        %v2353 = vadd.f32 %v456, %v2352
        %v2354 = vpop.f32.mrb[0].mxu0
        %v2355 = vpop.f32.mrb[0].mxu0
        %v2356 = vadd.f32 %v456, %v2355
        %v2357 = vpop.f32.mrb[0].mxu0
        %2358 = vmatprep.mubr.bf16.mxu0 0
        %2359 = vmatmul.mubr.bf16.gmra.mrb[0].mxu0 %v1423
        %v2360 = vpop.f32.mrb[0].mxu0
        %v2361 = vadd.f32 %v456, %v2360
        %v2362 = vpop.f32.mrb[0].mxu0
        %v2363 = vpop.f32.mrb[0].mxu0
        %v2364 = vadd.f32 %v456, %v2363
        %v2365 = vpop.f32.mrb[0].mxu0
        %2366 = vmatprep.mubr.bf16.mxu0 0
        %2367 = vmatmul.mubr.bf16.gmra.mrb[0].mxu0 %v1426
        %v2368 = vpop.f32.mrb[0].mxu0
        %v2369 = vadd.f32 %v456, %v2368
        %v2370 = vpop.f32.mrb[0].mxu0
        %v2371 = vpop.f32.mrb[0].mxu0
        %v2372 = vadd.f32 %v456, %v2371
        %v2373 = vpop.f32.mrb[0].mxu0
        %2374 = vmatprep.mubr.bf16.mxu0 0
        %2375 = vmatmul.mubr.bf16.gmra.mrb[0].mxu0 %v1429
        %v2376 = vpop.f32.mrb[0].mxu0
        %v2377 = vadd.f32 %v456, %v2376
        %v2378 = vpop.f32.mrb[0].mxu0
        %v2379 = vpop.f32.mrb[0].mxu0
        %v2380 = vadd.f32 %v456, %v2379
        %v2381 = vpop.f32.mrb[0].mxu0
        %2382 = vmatprep.mubr.bf16.mxu0 0
        %2383 = vmatmul.mubr.bf16.gmra.mrb[0].mxu0 %v1432
        %v2384 = vpop.f32.mrb[0].mxu0
        %v2385 = vadd.f32 %v456, %v2384
        %v2386 = vpop.f32.mrb[0].mxu0
        %v2387 = vpop.f32.mrb[0].mxu0
        %v2388 = vadd.f32 %v456, %v2387
        %v2389 = vpop.f32.mrb[0].mxu0
        %2390 = vmatprep.mubr.bf16.mxu0 0
        %2391 = vmatmul.mubr.bf16.gmra.mrb[0].mxu0 %v1435
        %v2392 = vpop.f32.mrb[0].mxu0
        %v2393 = vadd.f32 %v456, %v2392
        %v2394 = vpop.f32.mrb[0].mxu0
        %v2395 = vpop.f32.mrb[0].mxu0
        %v2396 = vadd.f32 %v456, %v2395
        %v2397 = vpop.f32.mrb[0].mxu0
        %2398 = vmatprep.mubr.bf16.mxu0 0
        %2399 = vmatmul.mubr.bf16.gmra.mrb[0].mxu0 %v1438
        %v2400 = vpop.f32.mrb[0].mxu0
        %v2401 = vadd.f32 %v456, %v2400
        %v2402 = vpop.f32.mrb[0].mxu0
        %v2403 = vpop.f32.mrb[0].mxu0
        %v2404 = vadd.f32 %v456, %v2403
        %v2405 = vpop.f32.mrb[0].mxu0
        %2406 = vmatprep.mubr.bf16.mxu0 0
        %2407 = vmatmul.mubr.bf16.gmra.mrb[0].mxu0 %v1441
        %v2408 = vpop.f32.mrb[0].mxu0
        %v2409 = vadd.f32 %v456, %v2408
        %v2410 = vpop.f32.mrb[0].mxu0
        %v2411 = vpop.f32.mrb[0].mxu0
        %v2412 = vadd.f32 %v456, %v2411
        %v2413 = vpop.f32.mrb[0].mxu0
        %2414 = vmatprep.mubr.bf16.mxu0 0
        %2415 = vmatmul.mubr.bf16.gmra.mrb[0].mxu0 %v1444
        %v2416 = vpop.f32.mrb[0].mxu0
        %v2417 = vadd.f32 %v456, %v2416
        %v2418 = vpop.f32.mrb[0].mxu0
        %v2419 = vpop.f32.mrb[0].mxu0
        %v2420 = vadd.f32 %v456, %v2419
        %v2421 = vpop.f32.mrb[0].mxu0
        %2422 = vmatprep.mubr.bf16.mxu0 0
        %2423 = vmatmul.mubr.bf16.gmra.mrb[0].mxu0 %v1447
        %v2424 = vpop.f32.mrb[0].mxu0
        %v2425 = vadd.f32 %v456, %v2424
        %v2426 = vpop.f32.mrb[0].mxu0
        %v2427 = vpop.f32.mrb[0].mxu0
        %v2428 = vadd.f32 %v456, %v2427
        %v2429 = vpop.f32.mrb[0].mxu0
        %2430 = vmatprep.mubr.bf16.mxu0 0
        %2431 = vmatmul.mubr.bf16.gmra.mrb[0].mxu0 %v1450
        %v2432 = vpop.f32.mrb[0].mxu0
        %v2433 = vadd.f32 %v456, %v2432
        %v2434 = vpop.f32.mrb[0].mxu0
        %v2435 = vpop.f32.mrb[0].mxu0
        %v2436 = vadd.f32 %v456, %v2435
        %v2437 = vpop.f32.mrb[0].mxu0
        %2438 = vmatprep.mubr.bf16.mxu0 0
        %2439 = vmatmul.mubr.bf16.gmra.mrb[0].mxu0 %v1453
        %v2440 = vpop.f32.mrb[0].mxu0
        %v2441 = vadd.f32 %v456, %v2440
        %v2442 = vpop.f32.mrb[0].mxu0
        %v2443 = vpop.f32.mrb[0].mxu0
        %v2444 = vadd.f32 %v456, %v2443
        %v2445 = vpop.f32.mrb[0].mxu0
        %2446 = vmatprep.mubr.bf16.mxu0 0
        %2447 = vmatmul.mubr.bf16.gmra.mrb[0].mxu0 %v1456
        %v2448 = vpop.f32.mrb[0].mxu0
        %v2449 = vadd.f32 %v456, %v2448
        %v2450 = vpop.f32.mrb[0].mxu0
        %v2451 = vpop.f32.mrb[0].mxu0
        %v2452 = vadd.f32 %v456, %v2451
        %v2453 = vpop.f32.mrb[0].mxu0
        %2454 = vmatprep.mubr.bf16.mxu0 0
        %2455 = vmatmul.mubr.bf16.gmra.mrb[0].mxu0 %v1459
        %v2456 = vpop.f32.mrb[0].mxu0
        %v2457 = vadd.f32 %v456, %v2456
        %v2458 = vpop.f32.mrb[0].mxu0
        %v2459 = vpop.f32.mrb[0].mxu0
        %v2460 = vadd.f32 %v456, %v2459
        %v2461 = vpop.f32.mrb[0].mxu0
        %2462 = vmatprep.mubr.bf16.mxu0 0
        %2463 = vmatmul.mubr.bf16.gmra.mrb[0].mxu0 %v1462
        %v2464 = vpop.f32.mrb[0].mxu0
        %v2465 = vadd.f32 %v456, %v2464
        %v2466 = vpop.f32.mrb[0].mxu0
        %v2467 = vpop.f32.mrb[0].mxu0
        %v2468 = vadd.f32 %v456, %v2467
        %v2469 = vpop.f32.mrb[0].mxu0
        %2470 = vmatprep.mubr.bf16.mxu0 0
        %2471 = vmatmul.mubr.bf16.gmra.mrb[0].mxu0 %v1465
        %v2472 = vpop.f32.mrb[0].mxu0
        %v2473 = vadd.f32 %v456, %v2472
        %v2474 = vpop.f32.mrb[0].mxu0
        %v2475 = vpop.f32.mrb[0].mxu0
        %v2476 = vadd.f32 %v456, %v2475
        %v2477 = vpop.f32.mrb[0].mxu0
        %2478 = vmatprep.mubr.bf16.mxu0 0
        %2479 = vmatmul.mubr.bf16.gmra.mrb[0].mxu0 %v1468
        %v2480 = vpop.f32.mrb[0].mxu0
        %v2481 = vadd.f32 %v456, %v2480
        %v2482 = vpop.f32.mrb[0].mxu0
        %v2483 = vpop.f32.mrb[0].mxu0
        %v2484 = vadd.f32 %v456, %v2483
        %v2485 = vpop.f32.mrb[0].mxu0
        %2486 = vmatprep.mubr.bf16.mxu0 0
        %2487 = vmatmul.mubr.bf16.gmra.mrb[0].mxu0 %v1471
        %v2488 = vpop.f32.mrb[0].mxu0
        %v2489 = vadd.f32 %v456, %v2488
        %v2490 = vpop.f32.mrb[0].mxu0
        %v2491 = vpop.f32.mrb[0].mxu0
        %v2492 = vadd.f32 %v456, %v2491
        %v2493 = vpop.f32.mrb[0].mxu0
        %2494 = vmatprep.mubr.bf16.mxu0 0
        %2495 = vmatmul.mubr.bf16.gmra.mrb[0].mxu0 %v1474
        %v2496 = vpop.f32.mrb[0].mxu0
        %v2497 = vadd.f32 %v456, %v2496
        %v2498 = vpop.f32.mrb[0].mxu0
        %v2499 = vpop.f32.mrb[0].mxu0
        %v2500 = vadd.f32 %v456, %v2499
        %v2501 = vpop.f32.mrb[0].mxu0
        %2502 = vmatprep.mubr.bf16.mxu0 0
        %2503 = vmatmul.mubr.bf16.gmra.mrb[0].mxu0 %v1477
        %v2504 = vpop.f32.mrb[0].mxu0
        %v2505 = vadd.f32 %v456, %v2504
        %v2506 = vpop.f32.mrb[0].mxu0
        %v2507 = vpop.f32.mrb[0].mxu0
        %v2508 = vadd.f32 %v456, %v2507
        %v2509 = vpop.f32.mrb[0].mxu0
        %2510 = vmatprep.mubr.bf16.mxu0 0
        %2511 = vmatmul.mubr.bf16.gmra.mrb[0].mxu0 %v1480
        %v2512 = vpop.f32.mrb[0].mxu0
        %v2513 = vadd.f32 %v456, %v2512
        %v2514 = vpop.f32.mrb[0].mxu0
        %v2515 = vpop.f32.mrb[0].mxu0
        %v2516 = vadd.f32 %v456, %v2515
        %v2517 = vpop.f32.mrb[0].mxu0
        %2518 = vmatprep.mubr.bf16.mxu0 0
        %2519 = vmatmul.mubr.bf16.gmra.mrb[0].mxu0 %v1483
        %v2520 = vpop.f32.mrb[0].mxu0
        %v2521 = vadd.f32 %v456, %v2520
        %v2522 = vpop.f32.mrb[0].mxu0
        %v2523 = vpop.f32.mrb[0].mxu0
        %v2524 = vadd.f32 %v456, %v2523
        %v2525 = vpop.f32.mrb[0].mxu0
        %2526 = vmatprep.mubr.bf16.mxu0 0
        %2527 = vmatmul.mubr.bf16.gmra.mrb[0].mxu0 %v1486
        %v2528 = vpop.f32.mrb[0].mxu0
        %v2529 = vadd.f32 %v456, %v2528
        %v2530 = vpop.f32.mrb[0].mxu0
        %v2531 = vpop.f32.mrb[0].mxu0
        %v2532 = vadd.f32 %v456, %v2531
        %v2533 = vpop.f32.mrb[0].mxu0
        %2534 = vdwg.mxu0
        %v2535 = vpack.c.bf16 %v1532, %v1529
        %v2536 = vpack.c.bf16 %v1540, %v1537
        %v2537 = vpack.c.bf16 %v1548, %v1545
        %v2538 = vpack.c.bf16 %v1556, %v1553
        %v2539 = vpack.c.bf16 %v1564, %v1561
        %v2540 = vpack.c.bf16 %v1572, %v1569
        %v2541 = vpack.c.bf16 %v1580, %v1577
        %v2542 = vpack.c.bf16 %v1588, %v1585
        %v2543 = vpack.c.bf16 %v1596, %v1593
        %v2544 = vpack.c.bf16 %v1604, %v1601
        %v2545 = vpack.c.bf16 %v1612, %v1609
        %v2546 = vpack.c.bf16 %v1620, %v1617
        %v2547 = vpack.c.bf16 %v1628, %v1625
        %v2548 = vpack.c.bf16 %v1636, %v1633
        %v2549 = vpack.c.bf16 %v1644, %v1641
        %v2550 = vpack.c.bf16 %v1652, %v1649
        %v2551 = vpack.c.bf16 %v1660, %v1657
        %v2552 = vpack.c.bf16 %v1668, %v1665
        %v2553 = vpack.c.bf16 %v1676, %v1673
        %v2554 = vpack.c.bf16 %v1684, %v1681
        %v2555 = vpack.c.bf16 %v1692, %v1689
        %v2556 = vpack.c.bf16 %v1700, %v1697
        %v2557 = vpack.c.bf16 %v1708, %v1705
        %v2558 = vpack.c.bf16 %v1716, %v1713
        %v2559 = vpack.c.bf16 %v1724, %v1721
        %v2560 = vpack.c.bf16 %v1732, %v1729
        %v2561 = vpack.c.bf16 %v1740, %v1737
        %v2562 = vpack.c.bf16 %v1748, %v1745
        %v2563 = vpack.c.bf16 %v1756, %v1753
        %v2564 = vpack.c.bf16 %v1764, %v1761
        %v2565 = vpack.c.bf16 %v1772, %v1769
        %v2566 = vpack.c.bf16 %v1780, %v1777
        %v2567 = vpack.c.bf16 %v1788, %v1785
        %v2568 = vpack.c.bf16 %v1796, %v1793
        %v2569 = vpack.c.bf16 %v1804, %v1801
        %v2570 = vpack.c.bf16 %v1812, %v1809
        %v2571 = vpack.c.bf16 %v1820, %v1817
        %v2572 = vpack.c.bf16 %v1828, %v1825
        %v2573 = vpack.c.bf16 %v1836, %v1833
        %v2574 = vpack.c.bf16 %v1844, %v1841
        %v2575 = vpack.c.bf16 %v1852, %v1849
        %v2576 = vpack.c.bf16 %v1860, %v1857
        %v2577 = vpack.c.bf16 %v1868, %v1865
        %v2578 = vpack.c.bf16 %v1876, %v1873
        %v2579 = vpack.c.bf16 %v1884, %v1881
        %v2580 = vpack.c.bf16 %v1892, %v1889
        %v2581 = vpack.c.bf16 %v1900, %v1897
        %v2582 = vpack.c.bf16 %v1908, %v1905
        %v2583 = vpack.c.bf16 %v1916, %v1913
        %v2584 = vpack.c.bf16 %v1924, %v1921
        %v2585 = vpack.c.bf16 %v1932, %v1929
        %v2586 = vpack.c.bf16 %v1940, %v1937
        %v2587 = vpack.c.bf16 %v1948, %v1945
        %v2588 = vpack.c.bf16 %v1956, %v1953
        %v2589 = vpack.c.bf16 %v1964, %v1961
        %v2590 = vpack.c.bf16 %v1972, %v1969
        %v2591 = vpack.c.bf16 %v1980, %v1977
        %v2592 = vpack.c.bf16 %v1988, %v1985
        %v2593 = vpack.c.bf16 %v1996, %v1993
        %v2594 = vpack.c.bf16 %v2004, %v2001
        %v2595 = vpack.c.bf16 %v2012, %v2009
        %v2596 = vpack.c.bf16 %v2020, %v2017
        %v2597 = vpack.c.bf16 %v2028, %v2025
        %v2598 = vpack.c.bf16 %v2036, %v2033
        %v2599 = vpack.c.bf16 %v2044, %v2041
        %v2600 = vpack.c.bf16 %v2052, %v2049
        %v2601 = vpack.c.bf16 %v2060, %v2057
        %v2602 = vpack.c.bf16 %v2068, %v2065
        %v2603 = vpack.c.bf16 %v2076, %v2073
        %v2604 = vpack.c.bf16 %v2084, %v2081
        %v2605 = vpack.c.bf16 %v2092, %v2089
        %v2606 = vpack.c.bf16 %v2100, %v2097
        %v2607 = vpack.c.bf16 %v2108, %v2105
        %v2608 = vpack.c.bf16 %v2116, %v2113
        %v2609 = vpack.c.bf16 %v2124, %v2121
        %v2610 = vpack.c.bf16 %v2132, %v2129
        %v2611 = vpack.c.bf16 %v2140, %v2137
        %v2612 = vpack.c.bf16 %v2148, %v2145
        %v2613 = vpack.c.bf16 %v2156, %v2153
        %v2614 = vpack.c.bf16 %v2164, %v2161
        %v2615 = vpack.c.bf16 %v2172, %v2169
        %v2616 = vpack.c.bf16 %v2180, %v2177
        %v2617 = vpack.c.bf16 %v2188, %v2185
        %v2618 = vpack.c.bf16 %v2196, %v2193
        %v2619 = vpack.c.bf16 %v2204, %v2201
        %v2620 = vpack.c.bf16 %v2212, %v2209
        %v2621 = vpack.c.bf16 %v2220, %v2217
        %v2622 = vpack.c.bf16 %v2228, %v2225
        %v2623 = vpack.c.bf16 %v2236, %v2233
        %v2624 = vpack.c.bf16 %v2244, %v2241
        %v2625 = vpack.c.bf16 %v2252, %v2249
        %v2626 = vpack.c.bf16 %v2260, %v2257
        %v2627 = vpack.c.bf16 %v2268, %v2265
        %v2628 = vpack.c.bf16 %v2276, %v2273
        %v2629 = vpack.c.bf16 %v2284, %v2281
        %v2630 = vpack.c.bf16 %v2292, %v2289
        %v2631 = vpack.c.bf16 %v2300, %v2297
        %v2632 = vpack.c.bf16 %v2308, %v2305
        %v2633 = vpack.c.bf16 %v2316, %v2313
        %v2634 = vpack.c.bf16 %v2324, %v2321
        %v2635 = vpack.c.bf16 %v2332, %v2329
        %v2636 = vpack.c.bf16 %v2340, %v2337
        %v2637 = vpack.c.bf16 %v2348, %v2345
        %v2638 = vpack.c.bf16 %v2356, %v2353
        %v2639 = vpack.c.bf16 %v2364, %v2361
        %v2640 = vpack.c.bf16 %v2372, %v2369
        %v2641 = vpack.c.bf16 %v2380, %v2377
        %v2642 = vpack.c.bf16 %v2388, %v2385
        %v2643 = vpack.c.bf16 %v2396, %v2393
        %v2644 = vpack.c.bf16 %v2404, %v2401
        %v2645 = vpack.c.bf16 %v2412, %v2409
        %v2646 = vpack.c.bf16 %v2420, %v2417
        %v2647 = vpack.c.bf16 %v2428, %v2425
        %v2648 = vpack.c.bf16 %v2436, %v2433
        %v2649 = vpack.c.bf16 %v2444, %v2441
        %v2650 = vpack.c.bf16 %v2452, %v2449
        %v2651 = vpack.c.bf16 %v2460, %v2457
        %v2652 = vpack.c.bf16 %v2468, %v2465
        %v2653 = vpack.c.bf16 %v2476, %v2473
        %v2654 = vpack.c.bf16 %v2484, %v2481
        %v2655 = vpack.c.bf16 %v2492, %v2489
        %v2656 = vpack.c.bf16 %v2500, %v2497
        %v2657 = vpack.c.bf16 %v2508, %v2505
        %v2658 = vpack.c.bf16 %v2516, %v2513
        %v2659 = vpack.c.bf16 %v2524, %v2521
        %v2660 = vpack.c.bf16 %v2532, %v2529
        %v2787 = vunpack.c.l.b16 %v2535
        %v2788 = vunpack.c.h.b16 %v2535
        %v2789 = vunpack.c.l.b16 %v2536
        %v2790 = vunpack.c.h.b16 %v2536
        %v2791 = vunpack.c.l.b16 %v2537
        %v2792 = vunpack.c.h.b16 %v2537
        %v2793 = vunpack.c.l.b16 %v2538
        %v2794 = vunpack.c.h.b16 %v2538
        %v2795 = vunpack.c.l.b16 %v2539
        %v2796 = vunpack.c.h.b16 %v2539
        %v2797 = vunpack.c.l.b16 %v2540
        %v2798 = vunpack.c.h.b16 %v2540
        %v2799 = vunpack.c.l.b16 %v2541
        %v2800 = vunpack.c.h.b16 %v2541
        %v2801 = vunpack.c.l.b16 %v2542
        %v2802 = vunpack.c.h.b16 %v2542
        %v2803 = vunpack.c.l.b16 %v2543
        %v2804 = vunpack.c.h.b16 %v2543
        %v2805 = vunpack.c.l.b16 %v2544
        %v2806 = vunpack.c.h.b16 %v2544
        %v2807 = vunpack.c.l.b16 %v2545
        %v2808 = vunpack.c.h.b16 %v2545
        %v2809 = vunpack.c.l.b16 %v2546
        %v2810 = vunpack.c.h.b16 %v2546
        %v2811 = vunpack.c.l.b16 %v2547
        %v2812 = vunpack.c.h.b16 %v2547
        %v2813 = vunpack.c.l.b16 %v2548
        %v2814 = vunpack.c.h.b16 %v2548
        %v2815 = vunpack.c.l.b16 %v2549
        %v2816 = vunpack.c.h.b16 %v2549
        %v2817 = vunpack.c.l.b16 %v2550
        %v2818 = vunpack.c.h.b16 %v2550
        %v2819 = vunpack.c.l.b16 %v2551
        %v2820 = vunpack.c.h.b16 %v2551
        %v2821 = vunpack.c.l.b16 %v2552
        %v2822 = vunpack.c.h.b16 %v2552
        %v2823 = vunpack.c.l.b16 %v2553
        %v2824 = vunpack.c.h.b16 %v2553
        %v2825 = vunpack.c.l.b16 %v2554
        %v2826 = vunpack.c.h.b16 %v2554
        %v2827 = vunpack.c.l.b16 %v2555
        %v2828 = vunpack.c.h.b16 %v2555
        %v2829 = vunpack.c.l.b16 %v2556
        %v2830 = vunpack.c.h.b16 %v2556
        %v2831 = vunpack.c.l.b16 %v2557
        %v2832 = vunpack.c.h.b16 %v2557
        %v2833 = vunpack.c.l.b16 %v2558
        %v2834 = vunpack.c.h.b16 %v2558
        %v2835 = vunpack.c.l.b16 %v2559
        %v2836 = vunpack.c.h.b16 %v2559
        %v2837 = vunpack.c.l.b16 %v2560
        %v2838 = vunpack.c.h.b16 %v2560
        %v2839 = vunpack.c.l.b16 %v2561
        %v2840 = vunpack.c.h.b16 %v2561
        %v2841 = vunpack.c.l.b16 %v2562
        %v2842 = vunpack.c.h.b16 %v2562
        %v2843 = vunpack.c.l.b16 %v2563
        %v2844 = vunpack.c.h.b16 %v2563
        %v2845 = vunpack.c.l.b16 %v2564
        %v2846 = vunpack.c.h.b16 %v2564
        %v2847 = vunpack.c.l.b16 %v2565
        %v2848 = vunpack.c.h.b16 %v2565
        %v2849 = vunpack.c.l.b16 %v2566
        %v2850 = vunpack.c.h.b16 %v2566
        %v2851 = vunpack.c.l.b16 %v2567
        %v2852 = vunpack.c.h.b16 %v2567
        %v2853 = vunpack.c.l.b16 %v2568
        %v2854 = vunpack.c.h.b16 %v2568
        %v2855 = vunpack.c.l.b16 %v2569
        %v2856 = vunpack.c.h.b16 %v2569
        %v2857 = vunpack.c.l.b16 %v2570
        %v2858 = vunpack.c.h.b16 %v2570
        %v2859 = vunpack.c.l.b16 %v2571
        %v2860 = vunpack.c.h.b16 %v2571
        %v2861 = vunpack.c.l.b16 %v2572
        %v2862 = vunpack.c.h.b16 %v2572
        %v2863 = vunpack.c.l.b16 %v2573
        %v2864 = vunpack.c.h.b16 %v2573
        %v2865 = vunpack.c.l.b16 %v2574
        %v2866 = vunpack.c.h.b16 %v2574
        %v2867 = vunpack.c.l.b16 %v2575
        %v2868 = vunpack.c.h.b16 %v2575
        %v2869 = vunpack.c.l.b16 %v2576
        %v2870 = vunpack.c.h.b16 %v2576
        %v2871 = vunpack.c.l.b16 %v2577
        %v2872 = vunpack.c.h.b16 %v2577
        %v2873 = vunpack.c.l.b16 %v2578
        %v2874 = vunpack.c.h.b16 %v2578
        %v2875 = vunpack.c.l.b16 %v2579
        %v2876 = vunpack.c.h.b16 %v2579
        %v2877 = vunpack.c.l.b16 %v2580
        %v2878 = vunpack.c.h.b16 %v2580
        %v2879 = vunpack.c.l.b16 %v2581
        %v2880 = vunpack.c.h.b16 %v2581
        %v2881 = vunpack.c.l.b16 %v2582
        %v2882 = vunpack.c.h.b16 %v2582
        %v2883 = vunpack.c.l.b16 %v2583
        %v2884 = vunpack.c.h.b16 %v2583
        %v2885 = vunpack.c.l.b16 %v2584
        %v2886 = vunpack.c.h.b16 %v2584
        %v2887 = vunpack.c.l.b16 %v2585
        %v2888 = vunpack.c.h.b16 %v2585
        %v2889 = vunpack.c.l.b16 %v2586
        %v2890 = vunpack.c.h.b16 %v2586
        %v2891 = vunpack.c.l.b16 %v2587
        %v2892 = vunpack.c.h.b16 %v2587
        %v2893 = vunpack.c.l.b16 %v2588
        %v2894 = vunpack.c.h.b16 %v2588
        %v2895 = vunpack.c.l.b16 %v2589
        %v2896 = vunpack.c.h.b16 %v2589
        %v2897 = vunpack.c.l.b16 %v2590
        %v2898 = vunpack.c.h.b16 %v2590
        %v2899 = vunpack.c.l.b16 %v2591
        %v2900 = vunpack.c.h.b16 %v2591
        %v2901 = vunpack.c.l.b16 %v2592
        %v2902 = vunpack.c.h.b16 %v2592
        %v2903 = vunpack.c.l.b16 %v2593
        %v2904 = vunpack.c.h.b16 %v2593
        %v2905 = vunpack.c.l.b16 %v2594
        %v2906 = vunpack.c.h.b16 %v2594
        %v2907 = vunpack.c.l.b16 %v2595
        %v2908 = vunpack.c.h.b16 %v2595
        %v2909 = vunpack.c.l.b16 %v2596
        %v2910 = vunpack.c.h.b16 %v2596
        %v2911 = vunpack.c.l.b16 %v2597
        %v2912 = vunpack.c.h.b16 %v2597
        %v2913 = vunpack.c.l.b16 %v2598
        %v2914 = vunpack.c.h.b16 %v2598
        %v2915 = vunpack.c.l.b16 %v2599
        %v2916 = vunpack.c.h.b16 %v2599
        %v2917 = vunpack.c.l.b16 %v2600
        %v2918 = vunpack.c.h.b16 %v2600
        %v2919 = vunpack.c.l.b16 %v2601
        %v2920 = vunpack.c.h.b16 %v2601
        %v2921 = vunpack.c.l.b16 %v2602
        %v2922 = vunpack.c.h.b16 %v2602
        %v2923 = vunpack.c.l.b16 %v2603
        %v2924 = vunpack.c.h.b16 %v2603
        %v2925 = vunpack.c.l.b16 %v2604
        %v2926 = vunpack.c.h.b16 %v2604
        %v2927 = vunpack.c.l.b16 %v2605
        %v2928 = vunpack.c.h.b16 %v2605
        %v2929 = vunpack.c.l.b16 %v2606
        %v2930 = vunpack.c.h.b16 %v2606
        %v2931 = vunpack.c.l.b16 %v2607
        %v2932 = vunpack.c.h.b16 %v2607
        %v2933 = vunpack.c.l.b16 %v2608
        %v2934 = vunpack.c.h.b16 %v2608
        %v2935 = vunpack.c.l.b16 %v2609
        %v2936 = vunpack.c.h.b16 %v2609
        %v2937 = vunpack.c.l.b16 %v2610
        %v2938 = vunpack.c.h.b16 %v2610
        %v2939 = vunpack.c.l.b16 %v2611
        %v2940 = vunpack.c.h.b16 %v2611
        %v2941 = vunpack.c.l.b16 %v2612
        %v2942 = vunpack.c.h.b16 %v2612
        %v2943 = vunpack.c.l.b16 %v2613
        %v2944 = vunpack.c.h.b16 %v2613
        %v2945 = vunpack.c.l.b16 %v2614
        %v2946 = vunpack.c.h.b16 %v2614
        %v2947 = vunpack.c.l.b16 %v2615
        %v2948 = vunpack.c.h.b16 %v2615
        %v2949 = vunpack.c.l.b16 %v2616
        %v2950 = vunpack.c.h.b16 %v2616
        %v2951 = vunpack.c.l.b16 %v2617
        %v2952 = vunpack.c.h.b16 %v2617
        %v2953 = vunpack.c.l.b16 %v2618
        %v2954 = vunpack.c.h.b16 %v2618
        %v2955 = vunpack.c.l.b16 %v2619
        %v2956 = vunpack.c.h.b16 %v2619
        %v2957 = vunpack.c.l.b16 %v2620
        %v2958 = vunpack.c.h.b16 %v2620
        %v2959 = vunpack.c.l.b16 %v2621
        %v2960 = vunpack.c.h.b16 %v2621
        %v2961 = vunpack.c.l.b16 %v2622
        %v2962 = vunpack.c.h.b16 %v2622
        %v2963 = vunpack.c.l.b16 %v2623
        %v2964 = vunpack.c.h.b16 %v2623
        %v2965 = vunpack.c.l.b16 %v2624
        %v2966 = vunpack.c.h.b16 %v2624
        %v2967 = vunpack.c.l.b16 %v2625
        %v2968 = vunpack.c.h.b16 %v2625
        %v2969 = vunpack.c.l.b16 %v2626
        %v2970 = vunpack.c.h.b16 %v2626
        %v2971 = vunpack.c.l.b16 %v2627
        %v2972 = vunpack.c.h.b16 %v2627
        %v2973 = vunpack.c.l.b16 %v2628
        %v2974 = vunpack.c.h.b16 %v2628
        %v2975 = vunpack.c.l.b16 %v2629
        %v2976 = vunpack.c.h.b16 %v2629
        %v2977 = vunpack.c.l.b16 %v2630
        %v2978 = vunpack.c.h.b16 %v2630
        %v2979 = vunpack.c.l.b16 %v2631
        %v2980 = vunpack.c.h.b16 %v2631
        %v2981 = vunpack.c.l.b16 %v2632
        %v2982 = vunpack.c.h.b16 %v2632
        %v2983 = vunpack.c.l.b16 %v2633
        %v2984 = vunpack.c.h.b16 %v2633
        %v2985 = vunpack.c.l.b16 %v2634
        %v2986 = vunpack.c.h.b16 %v2634
        %v2987 = vunpack.c.l.b16 %v2635
        %v2988 = vunpack.c.h.b16 %v2635
        %v2989 = vunpack.c.l.b16 %v2636
        %v2990 = vunpack.c.h.b16 %v2636
        %v2991 = vunpack.c.l.b16 %v2637
        %v2992 = vunpack.c.h.b16 %v2637
        %v2993 = vunpack.c.l.b16 %v2638
        %v2994 = vunpack.c.h.b16 %v2638
        %v2995 = vunpack.c.l.b16 %v2639
        %v2996 = vunpack.c.h.b16 %v2639
        %v2997 = vunpack.c.l.b16 %v2640
        %v2998 = vunpack.c.h.b16 %v2640
        %v2999 = vunpack.c.l.b16 %v2641
        %v3000 = vunpack.c.h.b16 %v2641
        %v3001 = vunpack.c.l.b16 %v2642
        %v3002 = vunpack.c.h.b16 %v2642
        %v3003 = vunpack.c.l.b16 %v2643
        %v3004 = vunpack.c.h.b16 %v2643
        %v3005 = vunpack.c.l.b16 %v2644
        %v3006 = vunpack.c.h.b16 %v2644
        %v3007 = vunpack.c.l.b16 %v2645
        %v3008 = vunpack.c.h.b16 %v2645
        %v3009 = vunpack.c.l.b16 %v2646
        %v3010 = vunpack.c.h.b16 %v2646
        %v3011 = vunpack.c.l.b16 %v2647
        %v3012 = vunpack.c.h.b16 %v2647
        %v3013 = vunpack.c.l.b16 %v2648
        %v3014 = vunpack.c.h.b16 %v2648
        %v3015 = vunpack.c.l.b16 %v2649
        %v3016 = vunpack.c.h.b16 %v2649
        %v3017 = vunpack.c.l.b16 %v2650
        %v3018 = vunpack.c.h.b16 %v2650
        %v3019 = vunpack.c.l.b16 %v2651
        %v3020 = vunpack.c.h.b16 %v2651
        %v3021 = vunpack.c.l.b16 %v2652
        %v3022 = vunpack.c.h.b16 %v2652
        %v3023 = vunpack.c.l.b16 %v2653
        %v3024 = vunpack.c.h.b16 %v2653
        %v3025 = vunpack.c.l.b16 %v2654
        %v3026 = vunpack.c.h.b16 %v2654
        %v3027 = vunpack.c.l.b16 %v2655
        %v3028 = vunpack.c.h.b16 %v2655
        %v3029 = vunpack.c.l.b16 %v2656
        %v3030 = vunpack.c.h.b16 %v2656
        %v3031 = vunpack.c.l.b16 %v2657
        %v3032 = vunpack.c.h.b16 %v2657
        %v3033 = vunpack.c.l.b16 %v2658
        %v3034 = vunpack.c.h.b16 %v2658
        %v3035 = vunpack.c.l.b16 %v2659
        %v3036 = vunpack.c.h.b16 %v2659
        %v3037 = vunpack.c.l.b16 %v2660
        %v3038 = vunpack.c.h.b16 %v2660
        %v3039 = vpack.c.b16 %v2787, %v2787
        %v3040 = vpack.c.b16 %v2788, %v2788
        %v3041 = vpack.c.b16 %v2789, %v2789
        %v3042 = vpack.c.b16 %v2790, %v2790
        %v3043 = vpack.c.b16 %v2791, %v2791
        %v3044 = vpack.c.b16 %v2792, %v2792
        %v3045 = vpack.c.b16 %v2793, %v2793
        %v3046 = vpack.c.b16 %v2794, %v2794
        %v3047 = vpack.c.b16 %v2795, %v2795
        %v3048 = vpack.c.b16 %v2796, %v2796
        %v3049 = vpack.c.b16 %v2797, %v2797
        %v3050 = vpack.c.b16 %v2798, %v2798
        %v3051 = vpack.c.b16 %v2799, %v2799
        %v3052 = vpack.c.b16 %v2800, %v2800
        %v3053 = vpack.c.b16 %v2801, %v2801
        %v3054 = vpack.c.b16 %v2802, %v2802
        %v3055 = vpack.c.b16 %v2803, %v2803
        %v3056 = vpack.c.b16 %v2804, %v2804
        %v3057 = vpack.c.b16 %v2805, %v2805
        %v3058 = vpack.c.b16 %v2806, %v2806
        %v3059 = vpack.c.b16 %v2807, %v2807
        %v3060 = vpack.c.b16 %v2808, %v2808
        %v3061 = vpack.c.b16 %v2809, %v2809
        %v3062 = vpack.c.b16 %v2810, %v2810
        %v3063 = vpack.c.b16 %v2811, %v2811
        %v3064 = vpack.c.b16 %v2812, %v2812
        %v3065 = vpack.c.b16 %v2813, %v2813
        %v3066 = vpack.c.b16 %v2814, %v2814
        %v3067 = vpack.c.b16 %v2815, %v2815
        %v3068 = vpack.c.b16 %v2816, %v2816
        %v3069 = vpack.c.b16 %v2817, %v2817
        %v3070 = vpack.c.b16 %v2818, %v2818
        %v3071 = vpack.c.b16 %v2819, %v2819
        %v3072 = vpack.c.b16 %v2820, %v2820
        %v3073 = vpack.c.b16 %v2821, %v2821
        %v3074 = vpack.c.b16 %v2822, %v2822
        %v3075 = vpack.c.b16 %v2823, %v2823
        %v3076 = vpack.c.b16 %v2824, %v2824
        %v3077 = vpack.c.b16 %v2825, %v2825
        %v3078 = vpack.c.b16 %v2826, %v2826
        %v3079 = vpack.c.b16 %v2827, %v2827
        %v3080 = vpack.c.b16 %v2828, %v2828
        %v3081 = vpack.c.b16 %v2829, %v2829
        %v3082 = vpack.c.b16 %v2830, %v2830
        %v3083 = vpack.c.b16 %v2831, %v2831
        %v3084 = vpack.c.b16 %v2832, %v2832
        %v3085 = vpack.c.b16 %v2833, %v2833
        %v3086 = vpack.c.b16 %v2834, %v2834
        %v3087 = vpack.c.b16 %v2835, %v2835
        %v3088 = vpack.c.b16 %v2836, %v2836
        %v3089 = vpack.c.b16 %v2837, %v2837
        %v3090 = vpack.c.b16 %v2838, %v2838
        %v3091 = vpack.c.b16 %v2839, %v2839
        %v3092 = vpack.c.b16 %v2840, %v2840
        %v3093 = vpack.c.b16 %v2841, %v2841
        %v3094 = vpack.c.b16 %v2842, %v2842
        %v3095 = vpack.c.b16 %v2843, %v2843
        %v3096 = vpack.c.b16 %v2844, %v2844
        %v3097 = vpack.c.b16 %v2845, %v2845
        %v3098 = vpack.c.b16 %v2846, %v2846
        %v3099 = vpack.c.b16 %v2847, %v2847
        %v3100 = vpack.c.b16 %v2848, %v2848
        %v3101 = vpack.c.b16 %v2849, %v2849
        %v3102 = vpack.c.b16 %v2850, %v2850
        %v3103 = vpack.c.b16 %v2851, %v2851
        %v3104 = vpack.c.b16 %v2852, %v2852
        %v3105 = vpack.c.b16 %v2853, %v2853
        %v3106 = vpack.c.b16 %v2854, %v2854
        %v3107 = vpack.c.b16 %v2855, %v2855
        %v3108 = vpack.c.b16 %v2856, %v2856
        %v3109 = vpack.c.b16 %v2857, %v2857
        %v3110 = vpack.c.b16 %v2858, %v2858
        %v3111 = vpack.c.b16 %v2859, %v2859
        %v3112 = vpack.c.b16 %v2860, %v2860
        %v3113 = vpack.c.b16 %v2861, %v2861
        %v3114 = vpack.c.b16 %v2862, %v2862
        %v3115 = vpack.c.b16 %v2863, %v2863
        %v3116 = vpack.c.b16 %v2864, %v2864
        %v3117 = vpack.c.b16 %v2865, %v2865
        %v3118 = vpack.c.b16 %v2866, %v2866
        %v3119 = vpack.c.b16 %v2867, %v2867
        %v3120 = vpack.c.b16 %v2868, %v2868
        %v3121 = vpack.c.b16 %v2869, %v2869
        %v3122 = vpack.c.b16 %v2870, %v2870
        %v3123 = vpack.c.b16 %v2871, %v2871
        %v3124 = vpack.c.b16 %v2872, %v2872
        %v3125 = vpack.c.b16 %v2873, %v2873
        %v3126 = vpack.c.b16 %v2874, %v2874
        %v3127 = vpack.c.b16 %v2875, %v2875
        %v3128 = vpack.c.b16 %v2876, %v2876
        %v3129 = vpack.c.b16 %v2877, %v2877
        %v3130 = vpack.c.b16 %v2878, %v2878
        %v3131 = vpack.c.b16 %v2879, %v2879
        %v3132 = vpack.c.b16 %v2880, %v2880
        %v3133 = vpack.c.b16 %v2881, %v2881
        %v3134 = vpack.c.b16 %v2882, %v2882
        %v3135 = vpack.c.b16 %v2883, %v2883
        %v3136 = vpack.c.b16 %v2884, %v2884
        %v3137 = vpack.c.b16 %v2885, %v2885
        %v3138 = vpack.c.b16 %v2886, %v2886
        %v3139 = vpack.c.b16 %v2887, %v2887
        %v3140 = vpack.c.b16 %v2888, %v2888
        %v3141 = vpack.c.b16 %v2889, %v2889
        %v3142 = vpack.c.b16 %v2890, %v2890
        %v3143 = vpack.c.b16 %v2891, %v2891
        %v3144 = vpack.c.b16 %v2892, %v2892
        %v3145 = vpack.c.b16 %v2893, %v2893
        %v3146 = vpack.c.b16 %v2894, %v2894
        %v3147 = vpack.c.b16 %v2895, %v2895
        %v3148 = vpack.c.b16 %v2896, %v2896
        %v3149 = vpack.c.b16 %v2897, %v2897
        %v3150 = vpack.c.b16 %v2898, %v2898
        %v3151 = vpack.c.b16 %v2899, %v2899
        %v3152 = vpack.c.b16 %v2900, %v2900
        %v3153 = vpack.c.b16 %v2901, %v2901
        %v3154 = vpack.c.b16 %v2902, %v2902
        %v3155 = vpack.c.b16 %v2903, %v2903
        %v3156 = vpack.c.b16 %v2904, %v2904
        %v3157 = vpack.c.b16 %v2905, %v2905
        %v3158 = vpack.c.b16 %v2906, %v2906
        %v3159 = vpack.c.b16 %v2907, %v2907
        %v3160 = vpack.c.b16 %v2908, %v2908
        %v3161 = vpack.c.b16 %v2909, %v2909
        %v3162 = vpack.c.b16 %v2910, %v2910
        %v3163 = vpack.c.b16 %v2911, %v2911
        %v3164 = vpack.c.b16 %v2912, %v2912
        %v3165 = vpack.c.b16 %v2913, %v2913
        %v3166 = vpack.c.b16 %v2914, %v2914
        %v3167 = vpack.c.b16 %v2915, %v2915
        %v3168 = vpack.c.b16 %v2916, %v2916
        %v3169 = vpack.c.b16 %v2917, %v2917
        %v3170 = vpack.c.b16 %v2918, %v2918
        %v3171 = vpack.c.b16 %v2919, %v2919
        %v3172 = vpack.c.b16 %v2920, %v2920
        %v3173 = vpack.c.b16 %v2921, %v2921
        %v3174 = vpack.c.b16 %v2922, %v2922
        %v3175 = vpack.c.b16 %v2923, %v2923
        %v3176 = vpack.c.b16 %v2924, %v2924
        %v3177 = vpack.c.b16 %v2925, %v2925
        %v3178 = vpack.c.b16 %v2926, %v2926
        %v3179 = vpack.c.b16 %v2927, %v2927
        %v3180 = vpack.c.b16 %v2928, %v2928
        %v3181 = vpack.c.b16 %v2929, %v2929
        %v3182 = vpack.c.b16 %v2930, %v2930
        %v3183 = vpack.c.b16 %v2931, %v2931
        %v3184 = vpack.c.b16 %v2932, %v2932
        %v3185 = vpack.c.b16 %v2933, %v2933
        %v3186 = vpack.c.b16 %v2934, %v2934
        %v3187 = vpack.c.b16 %v2935, %v2935
        %v3188 = vpack.c.b16 %v2936, %v2936
        %v3189 = vpack.c.b16 %v2937, %v2937
        %v3190 = vpack.c.b16 %v2938, %v2938
        %v3191 = vpack.c.b16 %v2939, %v2939
        %v3192 = vpack.c.b16 %v2940, %v2940
        %v3193 = vpack.c.b16 %v2941, %v2941
        %v3194 = vpack.c.b16 %v2942, %v2942
        %v3195 = vpack.c.b16 %v2943, %v2943
        %v3196 = vpack.c.b16 %v2944, %v2944
        %v3197 = vpack.c.b16 %v2945, %v2945
        %v3198 = vpack.c.b16 %v2946, %v2946
        %v3199 = vpack.c.b16 %v2947, %v2947
        %v3200 = vpack.c.b16 %v2948, %v2948
        %v3201 = vpack.c.b16 %v2949, %v2949
        %v3202 = vpack.c.b16 %v2950, %v2950
        %v3203 = vpack.c.b16 %v2951, %v2951
        %v3204 = vpack.c.b16 %v2952, %v2952
        %v3205 = vpack.c.b16 %v2953, %v2953
        %v3206 = vpack.c.b16 %v2954, %v2954
        %v3207 = vpack.c.b16 %v2955, %v2955
        %v3208 = vpack.c.b16 %v2956, %v2956
        %v3209 = vpack.c.b16 %v2957, %v2957
        %v3210 = vpack.c.b16 %v2958, %v2958
        %v3211 = vpack.c.b16 %v2959, %v2959
        %v3212 = vpack.c.b16 %v2960, %v2960
        %v3213 = vpack.c.b16 %v2961, %v2961
        %v3214 = vpack.c.b16 %v2962, %v2962
        %v3215 = vpack.c.b16 %v2963, %v2963
        %v3216 = vpack.c.b16 %v2964, %v2964
        %v3217 = vpack.c.b16 %v2965, %v2965
        %v3218 = vpack.c.b16 %v2966, %v2966
        %v3219 = vpack.c.b16 %v2967, %v2967
        %v3220 = vpack.c.b16 %v2968, %v2968
        %v3221 = vpack.c.b16 %v2969, %v2969
        %v3222 = vpack.c.b16 %v2970, %v2970
        %v3223 = vpack.c.b16 %v2971, %v2971
        %v3224 = vpack.c.b16 %v2972, %v2972
        %v3225 = vpack.c.b16 %v2973, %v2973
        %v3226 = vpack.c.b16 %v2974, %v2974
        %v3227 = vpack.c.b16 %v2975, %v2975
        %v3228 = vpack.c.b16 %v2976, %v2976
        %v3229 = vpack.c.b16 %v2977, %v2977
        %v3230 = vpack.c.b16 %v2978, %v2978
        %v3231 = vpack.c.b16 %v2979, %v2979
        %v3232 = vpack.c.b16 %v2980, %v2980
        %v3233 = vpack.c.b16 %v2981, %v2981
        %v3234 = vpack.c.b16 %v2982, %v2982
        %v3235 = vpack.c.b16 %v2983, %v2983
        %v3236 = vpack.c.b16 %v2984, %v2984
        %v3237 = vpack.c.b16 %v2985, %v2985
        %v3238 = vpack.c.b16 %v2986, %v2986
        %v3239 = vpack.c.b16 %v2987, %v2987
        %v3240 = vpack.c.b16 %v2988, %v2988
        %v3241 = vpack.c.b16 %v2989, %v2989
        %v3242 = vpack.c.b16 %v2990, %v2990
        %v3243 = vpack.c.b16 %v2991, %v2991
        %v3244 = vpack.c.b16 %v2992, %v2992
        %v3245 = vpack.c.b16 %v2993, %v2993
        %v3246 = vpack.c.b16 %v2994, %v2994
        %v3247 = vpack.c.b16 %v2995, %v2995
        %v3248 = vpack.c.b16 %v2996, %v2996
        %v3249 = vpack.c.b16 %v2997, %v2997
        %v3250 = vpack.c.b16 %v2998, %v2998
        %v3251 = vpack.c.b16 %v2999, %v2999
        %v3252 = vpack.c.b16 %v3000, %v3000
        %v3253 = vpack.c.b16 %v3001, %v3001
        %v3254 = vpack.c.b16 %v3002, %v3002
        %v3255 = vpack.c.b16 %v3003, %v3003
        %v3256 = vpack.c.b16 %v3004, %v3004
        %v3257 = vpack.c.b16 %v3005, %v3005
        %v3258 = vpack.c.b16 %v3006, %v3006
        %v3259 = vpack.c.b16 %v3007, %v3007
        %v3260 = vpack.c.b16 %v3008, %v3008
        %v3261 = vpack.c.b16 %v3009, %v3009
        %v3262 = vpack.c.b16 %v3010, %v3010
        %v3263 = vpack.c.b16 %v3011, %v3011
        %v3264 = vpack.c.b16 %v3012, %v3012
        %v3265 = vpack.c.b16 %v3013, %v3013
        %v3266 = vpack.c.b16 %v3014, %v3014
        %v3267 = vpack.c.b16 %v3015, %v3015
        %v3268 = vpack.c.b16 %v3016, %v3016
        %v3269 = vpack.c.b16 %v3017, %v3017
        %v3270 = vpack.c.b16 %v3018, %v3018
        %v3271 = vpack.c.b16 %v3019, %v3019
        %v3272 = vpack.c.b16 %v3020, %v3020
        %v3273 = vpack.c.b16 %v3021, %v3021
        %v3274 = vpack.c.b16 %v3022, %v3022
        %v3275 = vpack.c.b16 %v3023, %v3023
        %v3276 = vpack.c.b16 %v3024, %v3024
        %v3277 = vpack.c.b16 %v3025, %v3025
        %v3278 = vpack.c.b16 %v3026, %v3026
        %v3279 = vpack.c.b16 %v3027, %v3027
        %v3280 = vpack.c.b16 %v3028, %v3028
        %v3281 = vpack.c.b16 %v3029, %v3029
        %v3282 = vpack.c.b16 %v3030, %v3030
        %v3283 = vpack.c.b16 %v3031, %v3031
        %v3284 = vpack.c.b16 %v3032, %v3032
        %v3285 = vpack.c.b16 %v3033, %v3033
        %v3286 = vpack.c.b16 %v3034, %v3034
        %v3287 = vpack.c.b16 %v3035, %v3035
        %v3288 = vpack.c.b16 %v3036, %v3036
        %v3289 = vpack.c.b16 %v3037, %v3037
        %v3290 = vpack.c.b16 %v3038, %v3038
        %vm3543 = vcmask 125952
        %3544 = vst.msk [vmem:[%s188] sm:$0xf] %vm3543, %v3039
        %3545 = vst.msk [vmem:[%s188 + $0x4] sm:$0xf] %vm3543, %v3040
        %3546 = vst.msk [vmem:[%s188 + $0x8] sm:$0xf] %vm3543, %v3041
        %3547 = vst.msk [vmem:[%s188 + $0xc] sm:$0xf] %vm3543, %v3042
        %3548 = vst.msk [vmem:[%s188 + $0x10] sm:$0xf] %vm3543, %v3043
        %3549 = vst.msk [vmem:[%s188 + $0x14] sm:$0xf] %vm3543, %v3044
        %3550 = vst.msk [vmem:[%s188 + $0x18] sm:$0xf] %vm3543, %v3045
        %3551 = vst.msk [vmem:[%s188 + $0x1c] sm:$0xf] %vm3543, %v3046
        %3552 = vst.msk [vmem:[%s188 + $0x20] sm:$0xf] %vm3543, %v3047
        %3553 = vst.msk [vmem:[%s188 + $0x24] sm:$0xf] %vm3543, %v3048
        %3554 = vst.msk [vmem:[%s188 + $0x28] sm:$0xf] %vm3543, %v3049
        %3555 = vst.msk [vmem:[%s188 + $0x2c] sm:$0xf] %vm3543, %v3050
        %3556 = vst.msk [vmem:[%s188 + $0x30] sm:$0xf] %vm3543, %v3051
        %3557 = vst.msk [vmem:[%s188 + $0x34] sm:$0xf] %vm3543, %v3052
        %3558 = vst.msk [vmem:[%s188 + $0x38] sm:$0xf] %vm3543, %v3053
        %3559 = vst.msk [vmem:[%s188 + $0x3c] sm:$0xf] %vm3543, %v3054
        %3560 = vst.msk [vmem:[%s188 + $0x40] sm:$0xf] %vm3543, %v3055
        %3561 = vst.msk [vmem:[%s188 + $0x44] sm:$0xf] %vm3543, %v3056
        %3562 = vst.msk [vmem:[%s188 + $0x48] sm:$0xf] %vm3543, %v3057
        %3563 = vst.msk [vmem:[%s188 + $0x4c] sm:$0xf] %vm3543, %v3058
        %3564 = vst.msk [vmem:[%s188 + $0x50] sm:$0xf] %vm3543, %v3059
        %3565 = vst.msk [vmem:[%s188 + $0x54] sm:$0xf] %vm3543, %v3060
        %3566 = vst.msk [vmem:[%s188 + $0x58] sm:$0xf] %vm3543, %v3061
        %3567 = vst.msk [vmem:[%s188 + $0x5c] sm:$0xf] %vm3543, %v3062
        %3568 = vst.msk [vmem:[%s188 + $0x60] sm:$0xf] %vm3543, %v3063
        %3569 = vst.msk [vmem:[%s188 + $0x64] sm:$0xf] %vm3543, %v3064
        %3570 = vst.msk [vmem:[%s188 + $0x68] sm:$0xf] %vm3543, %v3065
        %3571 = vst.msk [vmem:[%s188 + $0x6c] sm:$0xf] %vm3543, %v3066
        %3572 = vst.msk [vmem:[%s188 + $0x70] sm:$0xf] %vm3543, %v3067
        %3573 = vst.msk [vmem:[%s188 + $0x74] sm:$0xf] %vm3543, %v3068
        %3574 = vst.msk [vmem:[%s188 + $0x78] sm:$0xf] %vm3543, %v3069
        %3575 = vst.msk [vmem:[%s188 + $0x7c] sm:$0xf] %vm3543, %v3070
        %3576 = vst.msk [vmem:[%s188 + $0x80] sm:$0xf] %vm3543, %v3071
        %3577 = vst.msk [vmem:[%s188 + $0x84] sm:$0xf] %vm3543, %v3072
        %3578 = vst.msk [vmem:[%s188 + $0x88] sm:$0xf] %vm3543, %v3073
        %3579 = vst.msk [vmem:[%s188 + $0x8c] sm:$0xf] %vm3543, %v3074
        %3580 = vst.msk [vmem:[%s188 + $0x90] sm:$0xf] %vm3543, %v3075
        %3581 = vst.msk [vmem:[%s188 + $0x94] sm:$0xf] %vm3543, %v3076
        %3582 = vst.msk [vmem:[%s188 + $0x98] sm:$0xf] %vm3543, %v3077
        %3583 = vst.msk [vmem:[%s188 + $0x9c] sm:$0xf] %vm3543, %v3078
        %3584 = vst.msk [vmem:[%s188 + $0xa0] sm:$0xf] %vm3543, %v3079
        %3585 = vst.msk [vmem:[%s188 + $0xa4] sm:$0xf] %vm3543, %v3080
        %3586 = vst.msk [vmem:[%s188 + $0xa8] sm:$0xf] %vm3543, %v3081
        %3587 = vst.msk [vmem:[%s188 + $0xac] sm:$0xf] %vm3543, %v3082
        %3588 = vst.msk [vmem:[%s188 + $0xb0] sm:$0xf] %vm3543, %v3083
        %3589 = vst.msk [vmem:[%s188 + $0xb4] sm:$0xf] %vm3543, %v3084
        %3590 = vst.msk [vmem:[%s188 + $0xb8] sm:$0xf] %vm3543, %v3085
        %3591 = vst.msk [vmem:[%s188 + $0xbc] sm:$0xf] %vm3543, %v3086
        %3592 = vst.msk [vmem:[%s188 + $0xc0] sm:$0xf] %vm3543, %v3087
        %3593 = vst.msk [vmem:[%s188 + $0xc4] sm:$0xf] %vm3543, %v3088
        %3594 = vst.msk [vmem:[%s188 + $0xc8] sm:$0xf] %vm3543, %v3089
        %3595 = vst.msk [vmem:[%s188 + $0xcc] sm:$0xf] %vm3543, %v3090
        %3596 = vst.msk [vmem:[%s188 + $0xd0] sm:$0xf] %vm3543, %v3091
        %3597 = vst.msk [vmem:[%s188 + $0xd4] sm:$0xf] %vm3543, %v3092
        %3598 = vst.msk [vmem:[%s188 + $0xd8] sm:$0xf] %vm3543, %v3093
        %3599 = vst.msk [vmem:[%s188 + $0xdc] sm:$0xf] %vm3543, %v3094
        %3600 = vst.msk [vmem:[%s188 + $0xe0] sm:$0xf] %vm3543, %v3095
        %3601 = vst.msk [vmem:[%s188 + $0xe4] sm:$0xf] %vm3543, %v3096
        %3602 = vst.msk [vmem:[%s188 + $0xe8] sm:$0xf] %vm3543, %v3097
        %3603 = vst.msk [vmem:[%s188 + $0xec] sm:$0xf] %vm3543, %v3098
        %3604 = vst.msk [vmem:[%s188 + $0xf0] sm:$0xf] %vm3543, %v3099
        %3605 = vst.msk [vmem:[%s188 + $0xf4] sm:$0xf] %vm3543, %v3100
        %3606 = vst.msk [vmem:[%s188 + $0xf8] sm:$0xf] %vm3543, %v3101
        %3607 = vst.msk [vmem:[%s188 + $0xfc] sm:$0xf] %vm3543, %v3102
        %3608 = vst.msk [vmem:[%s188 + $0x100] sm:$0xf] %vm3543, %v3103
        %3609 = vst.msk [vmem:[%s188 + $0x104] sm:$0xf] %vm3543, %v3104
        %3610 = vst.msk [vmem:[%s188 + $0x108] sm:$0xf] %vm3543, %v3105
        %3611 = vst.msk [vmem:[%s188 + $0x10c] sm:$0xf] %vm3543, %v3106
        %3612 = vst.msk [vmem:[%s188 + $0x110] sm:$0xf] %vm3543, %v3107
        %3613 = vst.msk [vmem:[%s188 + $0x114] sm:$0xf] %vm3543, %v3108
        %3614 = vst.msk [vmem:[%s188 + $0x118] sm:$0xf] %vm3543, %v3109
        %3615 = vst.msk [vmem:[%s188 + $0x11c] sm:$0xf] %vm3543, %v3110
        %3616 = vst.msk [vmem:[%s188 + $0x120] sm:$0xf] %vm3543, %v3111
        %3617 = vst.msk [vmem:[%s188 + $0x124] sm:$0xf] %vm3543, %v3112
        %3618 = vst.msk [vmem:[%s188 + $0x128] sm:$0xf] %vm3543, %v3113
        %3619 = vst.msk [vmem:[%s188 + $0x12c] sm:$0xf] %vm3543, %v3114
        %3620 = vst.msk [vmem:[%s188 + $0x130] sm:$0xf] %vm3543, %v3115
        %3621 = vst.msk [vmem:[%s188 + $0x134] sm:$0xf] %vm3543, %v3116
        %3622 = vst.msk [vmem:[%s188 + $0x138] sm:$0xf] %vm3543, %v3117
        %3623 = vst.msk [vmem:[%s188 + $0x13c] sm:$0xf] %vm3543, %v3118
        %3624 = vst.msk [vmem:[%s188 + $0x140] sm:$0xf] %vm3543, %v3119
        %3625 = vst.msk [vmem:[%s188 + $0x144] sm:$0xf] %vm3543, %v3120
        %3626 = vst.msk [vmem:[%s188 + $0x148] sm:$0xf] %vm3543, %v3121
        %3627 = vst.msk [vmem:[%s188 + $0x14c] sm:$0xf] %vm3543, %v3122
        %3628 = vst.msk [vmem:[%s188 + $0x150] sm:$0xf] %vm3543, %v3123
        %3629 = vst.msk [vmem:[%s188 + $0x154] sm:$0xf] %vm3543, %v3124
        %3630 = vst.msk [vmem:[%s188 + $0x158] sm:$0xf] %vm3543, %v3125
        %3631 = vst.msk [vmem:[%s188 + $0x15c] sm:$0xf] %vm3543, %v3126
        %3632 = vst.msk [vmem:[%s188 + $0x160] sm:$0xf] %vm3543, %v3127
        %3633 = vst.msk [vmem:[%s188 + $0x164] sm:$0xf] %vm3543, %v3128
        %3634 = vst.msk [vmem:[%s188 + $0x168] sm:$0xf] %vm3543, %v3129
        %3635 = vst.msk [vmem:[%s188 + $0x16c] sm:$0xf] %vm3543, %v3130
        %3636 = vst.msk [vmem:[%s188 + $0x170] sm:$0xf] %vm3543, %v3131
        %3637 = vst.msk [vmem:[%s188 + $0x174] sm:$0xf] %vm3543, %v3132
        %3638 = vst.msk [vmem:[%s188 + $0x178] sm:$0xf] %vm3543, %v3133
        %3639 = vst.msk [vmem:[%s188 + $0x17c] sm:$0xf] %vm3543, %v3134
        %3640 = vst.msk [vmem:[%s188 + $0x180] sm:$0xf] %vm3543, %v3135
        %3641 = vst.msk [vmem:[%s188 + $0x184] sm:$0xf] %vm3543, %v3136
        %3642 = vst.msk [vmem:[%s188 + $0x188] sm:$0xf] %vm3543, %v3137
        %3643 = vst.msk [vmem:[%s188 + $0x18c] sm:$0xf] %vm3543, %v3138
        %3644 = vst.msk [vmem:[%s188 + $0x190] sm:$0xf] %vm3543, %v3139
        %3645 = vst.msk [vmem:[%s188 + $0x194] sm:$0xf] %vm3543, %v3140
        %3646 = vst.msk [vmem:[%s188 + $0x198] sm:$0xf] %vm3543, %v3141
        %3647 = vst.msk [vmem:[%s188 + $0x19c] sm:$0xf] %vm3543, %v3142
        %3648 = vst.msk [vmem:[%s188 + $0x1a0] sm:$0xf] %vm3543, %v3143
        %3649 = vst.msk [vmem:[%s188 + $0x1a4] sm:$0xf] %vm3543, %v3144
        %3650 = vst.msk [vmem:[%s188 + $0x1a8] sm:$0xf] %vm3543, %v3145
        %3651 = vst.msk [vmem:[%s188 + $0x1ac] sm:$0xf] %vm3543, %v3146
        %3652 = vst.msk [vmem:[%s188 + $0x1b0] sm:$0xf] %vm3543, %v3147
        %3653 = vst.msk [vmem:[%s188 + $0x1b4] sm:$0xf] %vm3543, %v3148
        %3654 = vst.msk [vmem:[%s188 + $0x1b8] sm:$0xf] %vm3543, %v3149
        %3655 = vst.msk [vmem:[%s188 + $0x1bc] sm:$0xf] %vm3543, %v3150
        %3656 = vst.msk [vmem:[%s188 + $0x1c0] sm:$0xf] %vm3543, %v3151
        %3657 = vst.msk [vmem:[%s188 + $0x1c4] sm:$0xf] %vm3543, %v3152
        %3658 = vst.msk [vmem:[%s188 + $0x1c8] sm:$0xf] %vm3543, %v3153
        %3659 = vst.msk [vmem:[%s188 + $0x1cc] sm:$0xf] %vm3543, %v3154
        %3660 = vst.msk [vmem:[%s188 + $0x1d0] sm:$0xf] %vm3543, %v3155
        %3661 = vst.msk [vmem:[%s188 + $0x1d4] sm:$0xf] %vm3543, %v3156
        %3662 = vst.msk [vmem:[%s188 + $0x1d8] sm:$0xf] %vm3543, %v3157
        %3663 = vst.msk [vmem:[%s188 + $0x1dc] sm:$0xf] %vm3543, %v3158
        %3664 = vst.msk [vmem:[%s188 + $0x1e0] sm:$0xf] %vm3543, %v3159
        %3665 = vst.msk [vmem:[%s188 + $0x1e4] sm:$0xf] %vm3543, %v3160
        %3666 = vst.msk [vmem:[%s188 + $0x1e8] sm:$0xf] %vm3543, %v3161
        %3667 = vst.msk [vmem:[%s188 + $0x1ec] sm:$0xf] %vm3543, %v3162
        %3668 = vst.msk [vmem:[%s188 + $0x1f0] sm:$0xf] %vm3543, %v3163
        %3669 = vst.msk [vmem:[%s188 + $0x1f4] sm:$0xf] %vm3543, %v3164
        %3670 = vst.msk [vmem:[%s188 + $0x1f8] sm:$0xf] %vm3543, %v3165
        %3671 = vst.msk [vmem:[%s188 + $0x1fc] sm:$0xf] %vm3543, %v3166
        %3672 = vst.msk [vmem:[%s188 + $0x200] sm:$0xf] %vm3543, %v3167
        %3673 = vst.msk [vmem:[%s188 + $0x204] sm:$0xf] %vm3543, %v3168
        %3674 = vst.msk [vmem:[%s188 + $0x208] sm:$0xf] %vm3543, %v3169
        %3675 = vst.msk [vmem:[%s188 + $0x20c] sm:$0xf] %vm3543, %v3170
        %3676 = vst.msk [vmem:[%s188 + $0x210] sm:$0xf] %vm3543, %v3171
        %3677 = vst.msk [vmem:[%s188 + $0x214] sm:$0xf] %vm3543, %v3172
        %3678 = vst.msk [vmem:[%s188 + $0x218] sm:$0xf] %vm3543, %v3173
        %3679 = vst.msk [vmem:[%s188 + $0x21c] sm:$0xf] %vm3543, %v3174
        %3680 = vst.msk [vmem:[%s188 + $0x220] sm:$0xf] %vm3543, %v3175
        %3681 = vst.msk [vmem:[%s188 + $0x224] sm:$0xf] %vm3543, %v3176
        %3682 = vst.msk [vmem:[%s188 + $0x228] sm:$0xf] %vm3543, %v3177
        %3683 = vst.msk [vmem:[%s188 + $0x22c] sm:$0xf] %vm3543, %v3178
        %3684 = vst.msk [vmem:[%s188 + $0x230] sm:$0xf] %vm3543, %v3179
        %3685 = vst.msk [vmem:[%s188 + $0x234] sm:$0xf] %vm3543, %v3180
        %3686 = vst.msk [vmem:[%s188 + $0x238] sm:$0xf] %vm3543, %v3181
        %3687 = vst.msk [vmem:[%s188 + $0x23c] sm:$0xf] %vm3543, %v3182
        %3688 = vst.msk [vmem:[%s188 + $0x240] sm:$0xf] %vm3543, %v3183
        %3689 = vst.msk [vmem:[%s188 + $0x244] sm:$0xf] %vm3543, %v3184
        %3690 = vst.msk [vmem:[%s188 + $0x248] sm:$0xf] %vm3543, %v3185
        %3691 = vst.msk [vmem:[%s188 + $0x24c] sm:$0xf] %vm3543, %v3186
        %3692 = vst.msk [vmem:[%s188 + $0x250] sm:$0xf] %vm3543, %v3187
        %3693 = vst.msk [vmem:[%s188 + $0x254] sm:$0xf] %vm3543, %v3188
        %3694 = vst.msk [vmem:[%s188 + $0x258] sm:$0xf] %vm3543, %v3189
        %3695 = vst.msk [vmem:[%s188 + $0x25c] sm:$0xf] %vm3543, %v3190
        %3696 = vst.msk [vmem:[%s188 + $0x260] sm:$0xf] %vm3543, %v3191
        %3697 = vst.msk [vmem:[%s188 + $0x264] sm:$0xf] %vm3543, %v3192
        %3698 = vst.msk [vmem:[%s188 + $0x268] sm:$0xf] %vm3543, %v3193
        %3699 = vst.msk [vmem:[%s188 + $0x26c] sm:$0xf] %vm3543, %v3194
        %3700 = vst.msk [vmem:[%s188 + $0x270] sm:$0xf] %vm3543, %v3195
        %3701 = vst.msk [vmem:[%s188 + $0x274] sm:$0xf] %vm3543, %v3196
        %3702 = vst.msk [vmem:[%s188 + $0x278] sm:$0xf] %vm3543, %v3197
        %3703 = vst.msk [vmem:[%s188 + $0x27c] sm:$0xf] %vm3543, %v3198
        %3704 = vst.msk [vmem:[%s188 + $0x280] sm:$0xf] %vm3543, %v3199
        %3705 = vst.msk [vmem:[%s188 + $0x284] sm:$0xf] %vm3543, %v3200
        %3706 = vst.msk [vmem:[%s188 + $0x288] sm:$0xf] %vm3543, %v3201
        %3707 = vst.msk [vmem:[%s188 + $0x28c] sm:$0xf] %vm3543, %v3202
        %3708 = vst.msk [vmem:[%s188 + $0x290] sm:$0xf] %vm3543, %v3203
        %3709 = vst.msk [vmem:[%s188 + $0x294] sm:$0xf] %vm3543, %v3204
        %3710 = vst.msk [vmem:[%s188 + $0x298] sm:$0xf] %vm3543, %v3205
        %3711 = vst.msk [vmem:[%s188 + $0x29c] sm:$0xf] %vm3543, %v3206
        %3712 = vst.msk [vmem:[%s188 + $0x2a0] sm:$0xf] %vm3543, %v3207
        %3713 = vst.msk [vmem:[%s188 + $0x2a4] sm:$0xf] %vm3543, %v3208
        %3714 = vst.msk [vmem:[%s188 + $0x2a8] sm:$0xf] %vm3543, %v3209
        %3715 = vst.msk [vmem:[%s188 + $0x2ac] sm:$0xf] %vm3543, %v3210
        %3716 = vst.msk [vmem:[%s188 + $0x2b0] sm:$0xf] %vm3543, %v3211
        %3717 = vst.msk [vmem:[%s188 + $0x2b4] sm:$0xf] %vm3543, %v3212
        %3718 = vst.msk [vmem:[%s188 + $0x2b8] sm:$0xf] %vm3543, %v3213
        %3719 = vst.msk [vmem:[%s188 + $0x2bc] sm:$0xf] %vm3543, %v3214
        %3720 = vst.msk [vmem:[%s188 + $0x2c0] sm:$0xf] %vm3543, %v3215
        %3721 = vst.msk [vmem:[%s188 + $0x2c4] sm:$0xf] %vm3543, %v3216
        %3722 = vst.msk [vmem:[%s188 + $0x2c8] sm:$0xf] %vm3543, %v3217
        %3723 = vst.msk [vmem:[%s188 + $0x2cc] sm:$0xf] %vm3543, %v3218
        %3724 = vst.msk [vmem:[%s188 + $0x2d0] sm:$0xf] %vm3543, %v3219
        %3725 = vst.msk [vmem:[%s188 + $0x2d4] sm:$0xf] %vm3543, %v3220
        %3726 = vst.msk [vmem:[%s188 + $0x2d8] sm:$0xf] %vm3543, %v3221
        %3727 = vst.msk [vmem:[%s188 + $0x2dc] sm:$0xf] %vm3543, %v3222
        %3728 = vst.msk [vmem:[%s188 + $0x2e0] sm:$0xf] %vm3543, %v3223
        %3729 = vst.msk [vmem:[%s188 + $0x2e4] sm:$0xf] %vm3543, %v3224
        %3730 = vst.msk [vmem:[%s188 + $0x2e8] sm:$0xf] %vm3543, %v3225
        %3731 = vst.msk [vmem:[%s188 + $0x2ec] sm:$0xf] %vm3543, %v3226
        %3732 = vst.msk [vmem:[%s188 + $0x2f0] sm:$0xf] %vm3543, %v3227
        %3733 = vst.msk [vmem:[%s188 + $0x2f4] sm:$0xf] %vm3543, %v3228
        %3734 = vst.msk [vmem:[%s188 + $0x2f8] sm:$0xf] %vm3543, %v3229
        %3735 = vst.msk [vmem:[%s188 + $0x2fc] sm:$0xf] %vm3543, %v3230
        %3736 = vst.msk [vmem:[%s188 + $0x300] sm:$0xf] %vm3543, %v3231
        %3737 = vst.msk [vmem:[%s188 + $0x304] sm:$0xf] %vm3543, %v3232
        %3738 = vst.msk [vmem:[%s188 + $0x308] sm:$0xf] %vm3543, %v3233
        %3739 = vst.msk [vmem:[%s188 + $0x30c] sm:$0xf] %vm3543, %v3234
        %3740 = vst.msk [vmem:[%s188 + $0x310] sm:$0xf] %vm3543, %v3235
        %3741 = vst.msk [vmem:[%s188 + $0x314] sm:$0xf] %vm3543, %v3236
        %3742 = vst.msk [vmem:[%s188 + $0x318] sm:$0xf] %vm3543, %v3237
        %3743 = vst.msk [vmem:[%s188 + $0x31c] sm:$0xf] %vm3543, %v3238
        %3744 = vst.msk [vmem:[%s188 + $0x320] sm:$0xf] %vm3543, %v3239
        %3745 = vst.msk [vmem:[%s188 + $0x324] sm:$0xf] %vm3543, %v3240
        %3746 = vst.msk [vmem:[%s188 + $0x328] sm:$0xf] %vm3543, %v3241
        %3747 = vst.msk [vmem:[%s188 + $0x32c] sm:$0xf] %vm3543, %v3242
        %3748 = vst.msk [vmem:[%s188 + $0x330] sm:$0xf] %vm3543, %v3243
        %3749 = vst.msk [vmem:[%s188 + $0x334] sm:$0xf] %vm3543, %v3244
        %3750 = vst.msk [vmem:[%s188 + $0x338] sm:$0xf] %vm3543, %v3245
        %3751 = vst.msk [vmem:[%s188 + $0x33c] sm:$0xf] %vm3543, %v3246
        %3752 = vst.msk [vmem:[%s188 + $0x340] sm:$0xf] %vm3543, %v3247
        %3753 = vst.msk [vmem:[%s188 + $0x344] sm:$0xf] %vm3543, %v3248
        %3754 = vst.msk [vmem:[%s188 + $0x348] sm:$0xf] %vm3543, %v3249
        %3755 = vst.msk [vmem:[%s188 + $0x34c] sm:$0xf] %vm3543, %v3250
        %3756 = vst.msk [vmem:[%s188 + $0x350] sm:$0xf] %vm3543, %v3251
        %3757 = vst.msk [vmem:[%s188 + $0x354] sm:$0xf] %vm3543, %v3252
        %3758 = vst.msk [vmem:[%s188 + $0x358] sm:$0xf] %vm3543, %v3253
        %3759 = vst.msk [vmem:[%s188 + $0x35c] sm:$0xf] %vm3543, %v3254
        %3760 = vst.msk [vmem:[%s188 + $0x360] sm:$0xf] %vm3543, %v3255
        %3761 = vst.msk [vmem:[%s188 + $0x364] sm:$0xf] %vm3543, %v3256
        %3762 = vst.msk [vmem:[%s188 + $0x368] sm:$0xf] %vm3543, %v3257
        %3763 = vst.msk [vmem:[%s188 + $0x36c] sm:$0xf] %vm3543, %v3258
        %3764 = vst.msk [vmem:[%s188 + $0x370] sm:$0xf] %vm3543, %v3259
        %3765 = vst.msk [vmem:[%s188 + $0x374] sm:$0xf] %vm3543, %v3260
        %3766 = vst.msk [vmem:[%s188 + $0x378] sm:$0xf] %vm3543, %v3261
        %3767 = vst.msk [vmem:[%s188 + $0x37c] sm:$0xf] %vm3543, %v3262
        %3768 = vst.msk [vmem:[%s188 + $0x380] sm:$0xf] %vm3543, %v3263
        %3769 = vst.msk [vmem:[%s188 + $0x384] sm:$0xf] %vm3543, %v3264
        %3770 = vst.msk [vmem:[%s188 + $0x388] sm:$0xf] %vm3543, %v3265
        %3771 = vst.msk [vmem:[%s188 + $0x38c] sm:$0xf] %vm3543, %v3266
        %3772 = vst.msk [vmem:[%s188 + $0x390] sm:$0xf] %vm3543, %v3267
        %3773 = vst.msk [vmem:[%s188 + $0x394] sm:$0xf] %vm3543, %v3268
        %3774 = vst.msk [vmem:[%s188 + $0x398] sm:$0xf] %vm3543, %v3269
        %3775 = vst.msk [vmem:[%s188 + $0x39c] sm:$0xf] %vm3543, %v3270
        %3776 = vst.msk [vmem:[%s188 + $0x3a0] sm:$0xf] %vm3543, %v3271
        %3777 = vst.msk [vmem:[%s188 + $0x3a4] sm:$0xf] %vm3543, %v3272
        %3778 = vst.msk [vmem:[%s188 + $0x3a8] sm:$0xf] %vm3543, %v3273
        %3779 = vst.msk [vmem:[%s188 + $0x3ac] sm:$0xf] %vm3543, %v3274
        %3780 = vst.msk [vmem:[%s188 + $0x3b0] sm:$0xf] %vm3543, %v3275
        %3781 = vst.msk [vmem:[%s188 + $0x3b4] sm:$0xf] %vm3543, %v3276
        %3782 = vst.msk [vmem:[%s188 + $0x3b8] sm:$0xf] %vm3543, %v3277
        %3783 = vst.msk [vmem:[%s188 + $0x3bc] sm:$0xf] %vm3543, %v3278
        %3784 = vst.msk [vmem:[%s188 + $0x3c0] sm:$0xf] %vm3543, %v3279
        %3785 = vst.msk [vmem:[%s188 + $0x3c4] sm:$0xf] %vm3543, %v3280
        %3786 = vst.msk [vmem:[%s188 + $0x3c8] sm:$0xf] %vm3543, %v3281
        %3787 = vst.msk [vmem:[%s188 + $0x3cc] sm:$0xf] %vm3543, %v3282
        %3788 = vst.msk [vmem:[%s188 + $0x3d0] sm:$0xf] %vm3543, %v3283
        %3789 = vst.msk [vmem:[%s188 + $0x3d4] sm:$0xf] %vm3543, %v3284
        %3790 = vst.msk [vmem:[%s188 + $0x3d8] sm:$0xf] %vm3543, %v3285
        %3791 = vst.msk [vmem:[%s188 + $0x3dc] sm:$0xf] %vm3543, %v3286
        %3792 = vst.msk [vmem:[%s188 + $0x3e0] sm:$0xf] %vm3543, %v3287
        %3793 = vst.msk [vmem:[%s188 + $0x3e4] sm:$0xf] %vm3543, %v3288
        %3794 = vst.msk [vmem:[%s188 + $0x3e8] sm:$0xf] %vm3543, %v3289
        %3795 = vst.msk [vmem:[%s188 + $0x3ec] sm:$0xf] %vm3543, %v3290
        %s3796 = sand.u32 %s96, 1
        %s3797 = scalar_lea.sflag [#allocation4], %s3796
        %s3798 = sand.u32 %s96, 1
        %s3799 = smul.addr %s3798, 1008
        %s3800 = scalar_lea.vmem [#allocation5], %s3799
        // Predicated region
        $region37: #{conv2d_im2col.1} parent=31 // pred_check
          %p3801 = pneg %p106
        $region38: #{conv2d_im2col.1} parent=31 // pred_check_branch
          %3803 = sbr.rel (%p3801) target = $region40
        $region39: #{conv2d_im2col.1} parent=31 // pred_region
          %s3804 = smul.u32 252, %s20
          %s3806 = ssub.s32 16128, 16128
          %3807 = vsyncadd %s3797, %s3806
          %s3808 = smul.addr %s3804, 64
          %s3809 = scalar_lea.hbm %s3, %s3808
          %s3810 = sshll.u32 %s3800, 4
          %s3811 = int_to_ptr.vmem [resolvable:$true] %s3810
          %3816 = dma.vmem_to_hbm [thread:$0]  %s3811, 16128, %s3809, %s3797, 64, 64, 4
        $region40: #{conv2d_im2col.1} parent=31 // pred_fallthru
          _
      $region32: #{conv2d_im2col.1} parent=5 // pred_fallthru
        _
      %p3817 = scmp.le.s32.totalorder 2, %s15
      // Predicated region
      $region41: #{conv2d_im2col.1} parent=5 // pred_check
        %p3818 = pneg %p3817
      $region42: #{conv2d_im2col.1} parent=5 // pred_check_branch
        %3820 = sbr.rel (%p3818) target = $region44
      $region43: #{conv2d_im2col.1} parent=5 // pred_region
        %s3821 = ssub.s32 %s15, 2
        // Predicated region
        $region45: #{conv2d_im2col.1} parent=43 // pred_check
          %p3822 = pneg %p112
        $region46: #{conv2d_im2col.1} parent=43 // pred_check_branch
          %3824 = sbr.rel (%p3822) target = $region48
        $region47: #{conv2d_im2col.1} parent=43 // pred_region
          %s3825 = sand.u32 %s97, 1
          %s3826 = scalar_lea.sflag [#allocation4], %s3825
          %s3827 = sand.u32 %s97, 1
          %s3828 = smul.addr %s3827, 1008
          %s3829 = scalar_lea.vmem [#allocation5], %s3828
          %3830 = dma.done %s3826, 16128
        $region48: #{conv2d_im2col.1} parent=43 // pred_fallthru
          _
      $region44: #{conv2d_im2col.1} parent=5 // pred_fallthru
        _
    $region6: #{conv2d_im2col.1} parent=1 // loop_footer
      %s19 = sadd.s32 1, %s15
    $region7: #{conv2d_im2col.1} parent=1 // loop_footer_branch
      %14 = sbr.rel target = $region3
    $region8: #{conv2d_im2col.1} parent=1 // loop_exit
      _
    %3831 = vsyncpa [#allocation3], 1
    %s3832 = scalar_lea.sflag [#allocation3], 1
    %3833 = vsyncpa %s3832, 1
    %3834 = vsyncpa [#allocation4], 1
    %s3835 = scalar_lea.sflag [#allocation4], 1
    %3836 = vsyncpa %s3835, 1

</llo_original>
